<compile_context>
chip_gen: v6e
topology: v6e:2x2x1
jax: 0.10.0
libtpu: 0.0.40
codegen_flags: <defaults>
</compile_context>

<pallas_src>
import jax
import jax.numpy as jnp
from jax.experimental import pallas as pl
from jax.experimental.pallas import tpu as pltpu

LATENT_DIM = 2
IMG_CHANNELS = 1
IMG_SIZE = 28
OUT_DIM = IMG_CHANNELS * IMG_SIZE * IMG_SIZE  # 784
OUT_DIM_PAD = 896                             # 7 * 128, lane-dense output width

BN_EPS = 0.8
NEG_SLOPE = 0.2

# (in_features, out_features, normalize) for the hidden blocks
HIDDEN = [
    (LATENT_DIM, 32, False),
    (32, 64, True),
    (64, 128, True),
    (128, 256, True),
    (256, 512, True),
    (512, 1024, True),
]
FINAL = (1024, OUT_DIM)          # real fan-out (padded to OUT_DIM_PAD on device)
N_LAYERS = len(HIDDEN) + 1       # 7 weight matrices


def _round_up(n, m):
    return ((n + m - 1) // m) * m


# Per-layer output widths as seen inside the kernel (final layer is padded).
KERNEL_FOUT = [fout for (_fin, fout, _n) in HIDDEN] + [OUT_DIM_PAD]

# Packed bias/gamma/beta buffer: one 128-aligned column segment per layer.
VEC_OFFS = []
_off = 0
for _f in KERNEL_FOUT:
    VEC_OFFS.append(_off)
    _off += _round_up(_f, 128)
VEC_TOTAL = _off  # 3072


def recommended_block_b():
    """Reviewer-suggested batch-tile rows for the throughput path:
    128 on v5 (128-wide MXU), 256 on v6e/v7x (256-wide MXU)."""
    try:
        kind = jax.devices()[0].device_kind.lower()
    except Exception:
        return 256
    return 128 if "v5" in kind else 256


def _make_kernel(batch, tile_m, need_mask, overlap_w6):
    """Build the kernel body (all branches are static Python at trace time)."""

    def kernel(*refs):
        z_ref = refs[0]
        w_refs = refs[1:1 + N_LAYERS]
        vec_ref = refs[1 + N_LAYERS]
        out_ref = refs[2 + N_LAYERS]

        # ---- Start the final-layer weight transfer immediately so it overlaps
        #      with layers 0..5 (latency path: single batch tile).
        if overlap_w6:
            w6_buf = refs[3 + N_LAYERS]
            w6_sem = refs[4 + N_LAYERS]
            w6_copy = pltpu.make_async_copy(w_refs[N_LAYERS - 1], w6_buf, w6_sem)
            w6_copy.start()

        # ---- Validity mask for zero-padded batch rows (excluded from BN stats).
        if need_mask:
            row = jax.lax.broadcasted_iota(jnp.int32, (tile_m, 1), 0)
            valid = (pl.program_id(0) * tile_m + row) < batch
            mask = valid.astype(jnp.float32)                       # (tile_m, 1)
            cnt = jnp.maximum(jnp.sum(mask, axis=0, keepdims=True), 1.0)
            inv_cnt = 1.0 / cnt                                    # (1, 1)

        x = z_ref[...].astype(jnp.float32)

        # ---- Layer 0: Linear(2, 32). K=2 would waste an MXU push; do it as
        #      two broadcast multiply-adds on the VPU instead.
        w0 = w_refs[0][...]                                          # (2, 32) f32
        b0 = vec_ref[0:1, VEC_OFFS[0]:VEC_OFFS[0] + KERNEL_FOUT[0]]  # (1, 32)
        h = x[:, 0:1] * w0[0:1, :] + x[:, 1:2] * w0[1:2, :] + b0
        x = jnp.where(h > 0, h, NEG_SLOPE * h)                       # LeakyReLU

        # ---- Hidden MXU layers: bf16 operands, f32 accumulation, folded BN.
        for li in range(1, len(HIDDEN)):
            _fin, fout, norm = HIDDEN[li]
            off = VEC_OFFS[li]
            w = w_refs[li][...]                                      # bf16
            b = vec_ref[0:1, off:off + fout]
            h = jnp.dot(x.astype(jnp.bfloat16), w,
                        preferred_element_type=jnp.float32) + b
            if norm:
                gamma = vec_ref[1:2, off:off + fout]
                beta = vec_ref[2:3, off:off + fout]
                # training-mode BatchNorm1d (biased variance), folded into one
                # per-element FMA: h * scale + shift
                if need_mask:
                    hm = h * mask
                    mean = jnp.sum(hm, axis=0, keepdims=True) * inv_cnt
                    m2 = jnp.sum(hm * h, axis=0, keepdims=True) * inv_cnt
                else:
                    mean = jnp.mean(h, axis=0, keepdims=True)
                    m2 = jnp.mean(h * h, axis=0, keepdims=True)
                var = m2 - mean * mean
                scale = gamma * jax.lax.rsqrt(var + BN_EPS)
                shift = beta - mean * scale
                h = h * scale + shift
            x = jnp.where(h > 0, h, NEG_SLOPE * h)

        # ---- Final Linear(1024, 896-padded) + Tanh; lane-dense 896-wide store.
        off = VEC_OFFS[-1]
        if overlap_w6:
            w6_copy.wait()
            w = w6_buf[...]
        else:
            w = w_refs[N_LAYERS - 1][...]
        b = vec_ref[0:1, off:off + OUT_DIM_PAD]
        h = jnp.dot(x.astype(jnp.bfloat16), w,
                    preferred_element_type=jnp.float32) + b
        out_ref[...] = jnp.tanh(h).astype(out_ref.dtype)

    return kernel


def init_params(key):
    """Deterministic PyTorch-style uniform(-1/sqrt(fan_in), 1/sqrt(fan_in)) init.

    Returns (weights, vec):
      weights: [w0 f32 (2,32), w1..w5 bf16, w6 bf16 (1024, 896) column-padded]
      vec:     (3, VEC_TOTAL) f32 packed bias / gamma / beta
    """
    weights = []
    vec = jnp.zeros((3, VEC_TOTAL), jnp.float32)
    vec = vec.at[1, :].set(1.0)  # gamma defaults to 1 (unused rows are harmless)

    layer_defs = HIDDEN + [(FINAL[0], FINAL[1], False)]
    for li, (fin, fout, _norm) in enumerate(layer_defs):
        key, kw, kb = jax.random.split(key, 3)
        bound = 1.0 / (fin ** 0.5)
        w = jax.random.uniform(kw, (fin, fout), jnp.float32, -bound, bound)
        b = jax.random.uniform(kb, (fout,), jnp.float32, -bound, bound)
        off = VEC_OFFS[li]
        vec = vec.at[0, off:off + fout].set(b)  # padded bias columns stay 0
        if li == 0:
            weights.append(w)                   # tiny, kept f32 for VPU path
        else:
            pad_out = KERNEL_FOUT[li]
            if pad_out != fout:                 # final layer: 784 -> 896 columns
                w = jnp.pad(w, ((0, 0), (0, pad_out - fout)))
            weights.append(w.astype(jnp.bfloat16))
    return weights, vec


def generator_forward(z, weights, vec, *, block_b=None, out_dtype=jnp.float32):
    """Generator forward pass.

    block_b=None (default): whole batch in one tile -> exact PyTorch
      training-mode BatchNorm (padded rows masked out of the statistics), and
      the final-layer weight DMA is overlapped with layers 0..5 (latency path).
    block_b=int: batch tiled over a "parallel" grid axis with all weights held
      VMEM-resident (throughput path; scales across v7x's 2 TensorCores).
      BatchNorm statistics then become per-tile ("ghost BN") -- see module TODO.
      Use recommended_block_b() (128 on v5e, 256 on v6e/v7x) for the tile size.
    out_dtype=jnp.bfloat16 halves output HBM traffic in the output-bound
      large-B regime (default f32 matches the PyTorch module).
    """
    B = z.shape[0]
    if block_b is None:
        tile_m = _round_up(max(B, 1), 8)
    else:
        tile_m = _round_up(block_b, 8)
    B_pad = _round_up(B, tile_m)
    n_tiles = B_pad // tile_m
    need_mask = (B_pad != B)
    overlap_w6 = (n_tiles == 1)  # manual w6 DMA overlap only pays on one tile

    if B_pad != B:
        z = jnp.pad(z, ((0, B_pad - B), (0, 0)))

    w_specs = []
    for li, w in enumerate(weights):
        if overlap_w6 and li == N_LAYERS - 1:
            # raw HBM ref; copied manually so the transfer overlaps layers 0..5
            w_specs.append(pl.BlockSpec(memory_space=pl.ANY))
        else:
            # full-array block, constant index -> DMA'd once, stays VMEM-resident
            w_specs.append(pl.BlockSpec(w.shape, lambda i: (0, 0)))

    in_specs = ([pl.BlockSpec((tile_m, LATENT_DIM), lambda i: (i, 0))]
                + w_specs
                + [pl.BlockSpec(vec.shape, lambda i: (0, 0))])
    out_spec = pl.BlockSpec((tile_m, OUT_DIM_PAD), lambda i: (i, 0))

    scratch_shapes = []
    if overlap_w6:
        scratch_shapes = [pltpu.VMEM((FINAL[0], OUT_DIM_PAD), jnp.bfloat16),
                          pltpu.SemaphoreType.DMA]

    kernel = _make_kernel(B, tile_m, need_mask, overlap_w6)

    flat = pl.pallas_call(
        kernel,
        out_shape=jax.ShapeDtypeStruct((B_pad, OUT_DIM_PAD), out_dtype),
        grid=(n_tiles,),
        in_specs=in_specs,
        out_specs=out_spec,
        scratch_shapes=scratch_shapes,
        compiler_params=pltpu.CompilerParams(
            # batch tiles are independent -> shard across v7x's two TCs
            dimension_semantics=("parallel",),
            # weights ~3.2 MiB + double-buffered batch tiles; 32 MiB leaves
            # ample headroom and stays under v7x's 64 MiB physical VMEM.
            vmem_limit_bytes=32 * 1024 * 1024),
    )(z, *weights, vec)

    # Drop lane padding + padded batch rows, match PyTorch img.view(B, C, H, W).
    # (Throughput-critical consumers can take the padded (B_pad, 896) `flat`
    #  layout directly and skip this extra pass over the output.)
    return flat[:B, :OUT_DIM].reshape(B, IMG_CHANNELS, IMG_SIZE, IMG_SIZE)


def generator_reference(z, weights, vec):
    """Pure-JAX reference mirroring the kernel math (bf16 matmuls, f32 accum)."""
    x = z.astype(jnp.float32)
    h = x @ weights[0] + vec[0, VEC_OFFS[0]:VEC_OFFS[0] + KERNEL_FOUT[0]]
    x = jnp.where(h > 0, h, NEG_SLOPE * h)
    for li in range(1, len(HIDDEN)):
        fout = HIDDEN[li][1]
        off = VEC_OFFS[li]
        h = jnp.dot(x.astype(jnp.bfloat16), weights[li],
                    preferred_element_type=jnp.float32) + vec[0, off:off + fout]
        mean = jnp.mean(h, axis=0, keepdims=True)
        var = jnp.mean((h - mean) ** 2, axis=0, keepdims=True)
        gamma = vec[1, off:off + fout]
        beta = vec[2, off:off + fout]
        h = (h - mean) * jax.lax.rsqrt(var + BN_EPS) * gamma + beta
        x = jnp.where(h > 0, h, NEG_SLOPE * h)
    off = VEC_OFFS[-1]
    h = jnp.dot(x.astype(jnp.bfloat16), weights[-1],
                preferred_element_type=jnp.float32) + vec[0, off:off + OUT_DIM_PAD]
    out = jnp.tanh(h)[:, :OUT_DIM]
    return out.reshape(z.shape[0], IMG_CHANNELS, IMG_SIZE, IMG_SIZE)


if __name__ == "__main__":
    key = jax.random.PRNGKey(0)
    k_param, k_z = jax.random.split(key)
    weights, vec = init_params(k_param)

    # --- Latency path: single batch tile, exact BatchNorm, w6 DMA overlap.
    B = 8
    z = jax.random.normal(k_z, (B, LATENT_DIM), jnp.float32)
    img = generator_forward(z, weights, vec)
    jax.block_until_ready(img)
    assert img.shape == (B, IMG_CHANNELS, IMG_SIZE, IMG_SIZE)
    assert img.dtype == jnp.float32
    assert bool(jnp.all(jnp.isfinite(img)))
    assert bool(jnp.all(jnp.abs(img) <= 1.0))

    ref = generator_reference(z, weights, vec)
    assert bool(jnp.max(jnp.abs(img - ref)) < 5e-2)

    # --- Throughput path: batch tiled over the "parallel" grid axis with
    #     VMEM-resident weights (small tile here just to exercise multi-tile +
    #     masked last tile; production would use recommended_block_b()).
    B2 = 50
    z2 = jax.random.normal(jax.random.PRNGKey(1), (B2, LATENT_DIM), jnp.float32)
    img2 = generator_forward(z2, weights, vec, block_b=32)
    jax.block_until_ready(img2)
    assert img2.shape == (B2, IMG_CHANNELS, IMG_SIZE, IMG_SIZE)
    assert bool(jnp.all(jnp.isfinite(img2)))
    assert bool(jnp.all(jnp.abs(img2) <= 1.0))

    print("KERNEL_OK")
</pallas_src>

<mosaic_0001>
module attributes {stable_mosaic.version = 11 : i64} {
  func.func @kernel(%arg0: i32, %arg1: memref<8x2xf32, #tpu.memory_space<vmem>>, %arg2: memref<2x32xf32, #tpu.memory_space<vmem>>, %arg3: memref<32x64xbf16, #tpu.memory_space<vmem>>, %arg4: memref<64x128xbf16, #tpu.memory_space<vmem>>, %arg5: memref<128x256xbf16, #tpu.memory_space<vmem>>, %arg6: memref<256x512xbf16, #tpu.memory_space<vmem>>, %arg7: memref<512x1024xbf16, #tpu.memory_space<vmem>>, %arg8: memref<1024x896xbf16, #tpu.memory_space<any>>, %arg9: memref<3x3072xf32, #tpu.memory_space<vmem>>, %arg10: memref<8x896xf32, #tpu.memory_space<vmem>>, %arg11: memref<1024x896xbf16, #tpu.memory_space<vmem>>, %arg12: memref<!tpu.dma_semaphore, #tpu.memory_space<semaphore_mem>>) attributes {dimension_semantics = [#tpu.dimension_semantics<parallel>], iteration_bounds = array<i64: 1>, scalar_prefetch = 0 : i64, scratch_operands = 2 : i64, tpu.core_type = #tpu.core_type<tc>, window_params = [{transform_indices = @transform_0, window_bounds = array<i64: 8, 2>}, {pipeline_mode = #tpu.pipeline_mode<synchronous>, transform_indices = @transform_1, window_bounds = array<i64: 2, 32>}, {pipeline_mode = #tpu.pipeline_mode<synchronous>, transform_indices = @transform_2, window_bounds = array<i64: 32, 64>}, {pipeline_mode = #tpu.pipeline_mode<synchronous>, transform_indices = @transform_3, window_bounds = array<i64: 64, 128>}, {pipeline_mode = #tpu.pipeline_mode<synchronous>, transform_indices = @transform_4, window_bounds = array<i64: 128, 256>}, {pipeline_mode = #tpu.pipeline_mode<synchronous>, transform_indices = @transform_5, window_bounds = array<i64: 256, 512>}, {pipeline_mode = #tpu.pipeline_mode<synchronous>, transform_indices = @transform_6, window_bounds = array<i64: 512, 1024>}, {}, {pipeline_mode = #tpu.pipeline_mode<synchronous>, transform_indices = @transform_8, window_bounds = array<i64: 3, 3072>}, {transform_indices = @transform_9, window_bounds = array<i64: 8, 896>}]} {
    tpu.enqueue_dma source(%arg8 : memref<1024x896xbf16, #tpu.memory_space<any>>) target(%arg11 : memref<1024x896xbf16, #tpu.memory_space<vmem>>) target_semaphore(%arg12 : memref<!tpu.dma_semaphore, #tpu.memory_space<semaphore_mem>>)
    %c0 = arith.constant 0 : index
    %c0_0 = arith.constant 0 : index
    %0 = vector.load %arg1[%c0, %c0_0] : memref<8x2xf32, #tpu.memory_space<vmem>>, vector<8x2xf32>
    %c0_1 = arith.constant 0 : index
    %c0_2 = arith.constant 0 : index
    %1 = vector.load %arg2[%c0_1, %c0_2] : memref<2x32xf32, #tpu.memory_space<vmem>>, vector<2x32xf32>
    %c0_3 = arith.constant 0 : index
    %c0_4 = arith.constant 0 : index
    %2 = vector.load %arg9[%c0_3, %c0_4] : memref<3x3072xf32, #tpu.memory_space<vmem>>, vector<1x32xf32>
    %3 = vector.extract_strided_slice %0 {offsets = [0, 0], sizes = [8, 1], strides = [1, 1]} : vector<8x2xf32> to vector<8x1xf32>
    %4 = vector.extract_strided_slice %1 {offsets = [0, 0], sizes = [1, 32], strides = [1, 1]} : vector<2x32xf32> to vector<1x32xf32>
    %5 = vector.broadcast %3 : vector<8x1xf32> to vector<8x32xf32>
    %6 = vector.broadcast %4 : vector<1x32xf32> to vector<8x32xf32>
    %7 = arith.mulf %5, %6 : vector<8x32xf32>
    %8 = vector.extract_strided_slice %0 {offsets = [0, 1], sizes = [8, 1], strides = [1, 1]} : vector<8x2xf32> to vector<8x1xf32>
    %9 = vector.extract_strided_slice %1 {offsets = [1, 0], sizes = [1, 32], strides = [1, 1]} : vector<2x32xf32> to vector<1x32xf32>
    %10 = vector.broadcast %8 : vector<8x1xf32> to vector<8x32xf32>
    %11 = vector.broadcast %9 : vector<1x32xf32> to vector<8x32xf32>
    %12 = arith.mulf %10, %11 : vector<8x32xf32>
    %13 = arith.addf %7, %12 : vector<8x32xf32>
    %14 = vector.broadcast %2 : vector<1x32xf32> to vector<8x32xf32>
    %15 = arith.addf %13, %14 : vector<8x32xf32>
    %cst = arith.constant 0.000000e+00 : f32
    %16 = vector.broadcast %cst : f32 to vector<8x32xf32>
    %17 = arith.cmpf ogt, %15, %16 : vector<8x32xf32>
    %cst_5 = arith.constant 2.000000e-01 : f32
    %18 = vector.broadcast %cst_5 : f32 to vector<8x32xf32>
    %19 = arith.mulf %18, %15 : vector<8x32xf32>
    %20 = arith.select %17, %15, %19 : vector<8x32xi1>, vector<8x32xf32>
    %c0_6 = arith.constant 0 : index
    %c0_7 = arith.constant 0 : index
    %21 = vector.load %arg3[%c0_6, %c0_7] : memref<32x64xbf16, #tpu.memory_space<vmem>>, vector<32x64xbf16>
    %c0_8 = arith.constant 0 : index
    %c128 = arith.constant 128 : index
    %22 = vector.load %arg9[%c0_8, %c128] : memref<3x3072xf32, #tpu.memory_space<vmem>>, vector<1x64xf32>
    %23 = arith.truncf %20 : vector<8x32xf32> to vector<8x32xbf16>
    %cst_9 = arith.constant dense<0.000000e+00> : vector<8x64xf32>
    %24 = tpu.matmul %23, %21, %cst_9 {dimension_numbers = #tpu.dot_dimension_numbers<[1], [0], [0], [1], [0, 0, 1, 1], [], []>} : vector<8x32xbf16>, vector<32x64xbf16>, vector<8x64xf32> -> vector<8x64xf32>
    %25 = vector.broadcast %22 : vector<1x64xf32> to vector<8x64xf32>
    %26 = arith.addf %24, %25 : vector<8x64xf32>
    %c1 = arith.constant 1 : index
    %c128_10 = arith.constant 128 : index
    %27 = vector.load %arg9[%c1, %c128_10] : memref<3x3072xf32, #tpu.memory_space<vmem>>, vector<1x64xf32>
    %c2 = arith.constant 2 : index
    %c128_11 = arith.constant 128 : index
    %28 = vector.load %arg9[%c2, %c128_11] : memref<3x3072xf32, #tpu.memory_space<vmem>>, vector<1x64xf32>
    %cst_12 = arith.constant dense<0.000000e+00> : vector<64xf32>
    %29 = vector.multi_reduction <add>, %26, %cst_12 [0] : vector<8x64xf32> to vector<64xf32>
    %30 = vector.shape_cast %29 : vector<64xf32> to vector<1x64xf32>
    %cst_13 = arith.constant 8.000000e+00 : f32
    %31 = vector.broadcast %cst_13 : f32 to vector<1x64xf32>
    %32 = arith.divf %30, %31 : vector<1x64xf32>
    %33 = arith.mulf %26, %26 : vector<8x64xf32>
    %cst_14 = arith.constant dense<0.000000e+00> : vector<64xf32>
    %34 = vector.multi_reduction <add>, %33, %cst_14 [0] : vector<8x64xf32> to vector<64xf32>
    %35 = vector.shape_cast %34 : vector<64xf32> to vector<1x64xf32>
    %cst_15 = arith.constant 8.000000e+00 : f32
    %36 = vector.broadcast %cst_15 : f32 to vector<1x64xf32>
    %37 = arith.divf %35, %36 : vector<1x64xf32>
    %38 = arith.mulf %32, %32 : vector<1x64xf32>
    %39 = arith.subf %37, %38 : vector<1x64xf32>
    %cst_16 = arith.constant 8.000000e-01 : f32
    %40 = vector.broadcast %cst_16 : f32 to vector<1x64xf32>
    %41 = arith.addf %39, %40 : vector<1x64xf32>
    %42 = math.rsqrt %41 : vector<1x64xf32>
    %43 = arith.mulf %27, %42 : vector<1x64xf32>
    %44 = arith.mulf %32, %43 : vector<1x64xf32>
    %45 = arith.subf %28, %44 : vector<1x64xf32>
    %46 = vector.broadcast %43 : vector<1x64xf32> to vector<8x64xf32>
    %47 = arith.mulf %26, %46 : vector<8x64xf32>
    %48 = vector.broadcast %45 : vector<1x64xf32> to vector<8x64xf32>
    %49 = arith.addf %47, %48 : vector<8x64xf32>
    %cst_17 = arith.constant 0.000000e+00 : f32
    %50 = vector.broadcast %cst_17 : f32 to vector<8x64xf32>
    %51 = arith.cmpf ogt, %49, %50 : vector<8x64xf32>
    %cst_18 = arith.constant 2.000000e-01 : f32
    %52 = vector.broadcast %cst_18 : f32 to vector<8x64xf32>
    %53 = arith.mulf %52, %49 : vector<8x64xf32>
    %54 = arith.select %51, %49, %53 : vector<8x64xi1>, vector<8x64xf32>
    %c0_19 = arith.constant 0 : index
    %c0_20 = arith.constant 0 : index
    %55 = vector.load %arg4[%c0_19, %c0_20] : memref<64x128xbf16, #tpu.memory_space<vmem>>, vector<64x128xbf16>
    %c0_21 = arith.constant 0 : index
    %c256 = arith.constant 256 : index
    %56 = vector.load %arg9[%c0_21, %c256] : memref<3x3072xf32, #tpu.memory_space<vmem>>, vector<1x128xf32>
    %57 = arith.truncf %54 : vector<8x64xf32> to vector<8x64xbf16>
    %cst_22 = arith.constant dense<0.000000e+00> : vector<8x128xf32>
    %58 = tpu.matmul %57, %55, %cst_22 {dimension_numbers = #tpu.dot_dimension_numbers<[1], [0], [0], [1], [0, 0, 1, 1], [], []>} : vector<8x64xbf16>, vector<64x128xbf16>, vector<8x128xf32> -> vector<8x128xf32>
    %59 = vector.broadcast %56 : vector<1x128xf32> to vector<8x128xf32>
    %60 = arith.addf %58, %59 : vector<8x128xf32>
    %c1_23 = arith.constant 1 : index
    %c256_24 = arith.constant 256 : index
    %61 = vector.load %arg9[%c1_23, %c256_24] : memref<3x3072xf32, #tpu.memory_space<vmem>>, vector<1x128xf32>
    %c2_25 = arith.constant 2 : index
    %c256_26 = arith.constant 256 : index
    %62 = vector.load %arg9[%c2_25, %c256_26] : memref<3x3072xf32, #tpu.memory_space<vmem>>, vector<1x128xf32>
    %cst_27 = arith.constant dense<0.000000e+00> : vector<128xf32>
    %63 = vector.multi_reduction <add>, %60, %cst_27 [0] : vector<8x128xf32> to vector<128xf32>
    %64 = vector.shape_cast %63 : vector<128xf32> to vector<1x128xf32>
    %cst_28 = arith.constant 8.000000e+00 : f32
    %65 = vector.broadcast %cst_28 : f32 to vector<1x128xf32>
    %66 = arith.divf %64, %65 : vector<1x128xf32>
    %67 = arith.mulf %60, %60 : vector<8x128xf32>
    %cst_29 = arith.constant dense<0.000000e+00> : vector<128xf32>
    %68 = vector.multi_reduction <add>, %67, %cst_29 [0] : vector<8x128xf32> to vector<128xf32>
    %69 = vector.shape_cast %68 : vector<128xf32> to vector<1x128xf32>
    %cst_30 = arith.constant 8.000000e+00 : f32
    %70 = vector.broadcast %cst_30 : f32 to vector<1x128xf32>
    %71 = arith.divf %69, %70 : vector<1x128xf32>
    %72 = arith.mulf %66, %66 : vector<1x128xf32>
    %73 = arith.subf %71, %72 : vector<1x128xf32>
    %cst_31 = arith.constant 8.000000e-01 : f32
    %74 = vector.broadcast %cst_31 : f32 to vector<1x128xf32>
    %75 = arith.addf %73, %74 : vector<1x128xf32>
    %76 = math.rsqrt %75 : vector<1x128xf32>
    %77 = arith.mulf %61, %76 : vector<1x128xf32>
    %78 = arith.mulf %66, %77 : vector<1x128xf32>
    %79 = arith.subf %62, %78 : vector<1x128xf32>
    %80 = vector.broadcast %77 : vector<1x128xf32> to vector<8x128xf32>
    %81 = arith.mulf %60, %80 : vector<8x128xf32>
    %82 = vector.broadcast %79 : vector<1x128xf32> to vector<8x128xf32>
    %83 = arith.addf %81, %82 : vector<8x128xf32>
    %cst_32 = arith.constant 0.000000e+00 : f32
    %84 = vector.broadcast %cst_32 : f32 to vector<8x128xf32>
    %85 = arith.cmpf ogt, %83, %84 : vector<8x128xf32>
    %cst_33 = arith.constant 2.000000e-01 : f32
    %86 = vector.broadcast %cst_33 : f32 to vector<8x128xf32>
    %87 = arith.mulf %86, %83 : vector<8x128xf32>
    %88 = arith.select %85, %83, %87 : vector<8x128xi1>, vector<8x128xf32>
    %c0_34 = arith.constant 0 : index
    %c0_35 = arith.constant 0 : index
    %89 = vector.load %arg5[%c0_34, %c0_35] : memref<128x256xbf16, #tpu.memory_space<vmem>>, vector<128x256xbf16>
    %c0_36 = arith.constant 0 : index
    %c384 = arith.constant 384 : index
    %90 = vector.load %arg9[%c0_36, %c384] : memref<3x3072xf32, #tpu.memory_space<vmem>>, vector<1x256xf32>
    %91 = arith.truncf %88 : vector<8x128xf32> to vector<8x128xbf16>
    %cst_37 = arith.constant dense<0.000000e+00> : vector<8x256xf32>
    %92 = tpu.matmul %91, %89, %cst_37 {dimension_numbers = #tpu.dot_dimension_numbers<[1], [0], [0], [1], [0, 0, 1, 1], [], []>} : vector<8x128xbf16>, vector<128x256xbf16>, vector<8x256xf32> -> vector<8x256xf32>
    %93 = vector.broadcast %90 : vector<1x256xf32> to vector<8x256xf32>
    %94 = arith.addf %92, %93 : vector<8x256xf32>
    %c1_38 = arith.constant 1 : index
    %c384_39 = arith.constant 384 : index
    %95 = vector.load %arg9[%c1_38, %c384_39] : memref<3x3072xf32, #tpu.memory_space<vmem>>, vector<1x256xf32>
    %c2_40 = arith.constant 2 : index
    %c384_41 = arith.constant 384 : index
    %96 = vector.load %arg9[%c2_40, %c384_41] : memref<3x3072xf32, #tpu.memory_space<vmem>>, vector<1x256xf32>
    %cst_42 = arith.constant dense<0.000000e+00> : vector<256xf32>
    %97 = vector.multi_reduction <add>, %94, %cst_42 [0] : vector<8x256xf32> to vector<256xf32>
    %98 = vector.shape_cast %97 : vector<256xf32> to vector<1x256xf32>
    %cst_43 = arith.constant 8.000000e+00 : f32
    %99 = vector.broadcast %cst_43 : f32 to vector<1x256xf32>
    %100 = arith.divf %98, %99 : vector<1x256xf32>
    %101 = arith.mulf %94, %94 : vector<8x256xf32>
    %cst_44 = arith.constant dense<0.000000e+00> : vector<256xf32>
    %102 = vector.multi_reduction <add>, %101, %cst_44 [0] : vector<8x256xf32> to vector<256xf32>
    %103 = vector.shape_cast %102 : vector<256xf32> to vector<1x256xf32>
    %cst_45 = arith.constant 8.000000e+00 : f32
    %104 = vector.broadcast %cst_45 : f32 to vector<1x256xf32>
    %105 = arith.divf %103, %104 : vector<1x256xf32>
    %106 = arith.mulf %100, %100 : vector<1x256xf32>
    %107 = arith.subf %105, %106 : vector<1x256xf32>
    %cst_46 = arith.constant 8.000000e-01 : f32
    %108 = vector.broadcast %cst_46 : f32 to vector<1x256xf32>
    %109 = arith.addf %107, %108 : vector<1x256xf32>
    %110 = math.rsqrt %109 : vector<1x256xf32>
    %111 = arith.mulf %95, %110 : vector<1x256xf32>
    %112 = arith.mulf %100, %111 : vector<1x256xf32>
    %113 = arith.subf %96, %112 : vector<1x256xf32>
    %114 = vector.broadcast %111 : vector<1x256xf32> to vector<8x256xf32>
    %115 = arith.mulf %94, %114 : vector<8x256xf32>
    %116 = vector.broadcast %113 : vector<1x256xf32> to vector<8x256xf32>
    %117 = arith.addf %115, %116 : vector<8x256xf32>
    %cst_47 = arith.constant 0.000000e+00 : f32
    %118 = vector.broadcast %cst_47 : f32 to vector<8x256xf32>
    %119 = arith.cmpf ogt, %117, %118 : vector<8x256xf32>
    %cst_48 = arith.constant 2.000000e-01 : f32
    %120 = vector.broadcast %cst_48 : f32 to vector<8x256xf32>
    %121 = arith.mulf %120, %117 : vector<8x256xf32>
    %122 = arith.select %119, %117, %121 : vector<8x256xi1>, vector<8x256xf32>
    %c0_49 = arith.constant 0 : index
    %c0_50 = arith.constant 0 : index
    %123 = vector.load %arg6[%c0_49, %c0_50] : memref<256x512xbf16, #tpu.memory_space<vmem>>, vector<256x512xbf16>
    %c0_51 = arith.constant 0 : index
    %c640 = arith.constant 640 : index
    %124 = vector.load %arg9[%c0_51, %c640] : memref<3x3072xf32, #tpu.memory_space<vmem>>, vector<1x512xf32>
    %125 = arith.truncf %122 : vector<8x256xf32> to vector<8x256xbf16>
    %cst_52 = arith.constant dense<0.000000e+00> : vector<8x512xf32>
    %126 = tpu.matmul %125, %123, %cst_52 {dimension_numbers = #tpu.dot_dimension_numbers<[1], [0], [0], [1], [0, 0, 1, 1], [], []>} : vector<8x256xbf16>, vector<256x512xbf16>, vector<8x512xf32> -> vector<8x512xf32>
    %127 = vector.broadcast %124 : vector<1x512xf32> to vector<8x512xf32>
    %128 = arith.addf %126, %127 : vector<8x512xf32>
    %c1_53 = arith.constant 1 : index
    %c640_54 = arith.constant 640 : index
    %129 = vector.load %arg9[%c1_53, %c640_54] : memref<3x3072xf32, #tpu.memory_space<vmem>>, vector<1x512xf32>
    %c2_55 = arith.constant 2 : index
    %c640_56 = arith.constant 640 : index
    %130 = vector.load %arg9[%c2_55, %c640_56] : memref<3x3072xf32, #tpu.memory_space<vmem>>, vector<1x512xf32>
    %cst_57 = arith.constant dense<0.000000e+00> : vector<512xf32>
    %131 = vector.multi_reduction <add>, %128, %cst_57 [0] : vector<8x512xf32> to vector<512xf32>
    %132 = vector.shape_cast %131 : vector<512xf32> to vector<1x512xf32>
    %cst_58 = arith.constant 8.000000e+00 : f32
    %133 = vector.broadcast %cst_58 : f32 to vector<1x512xf32>
    %134 = arith.divf %132, %133 : vector<1x512xf32>
    %135 = arith.mulf %128, %128 : vector<8x512xf32>
    %cst_59 = arith.constant dense<0.000000e+00> : vector<512xf32>
    %136 = vector.multi_reduction <add>, %135, %cst_59 [0] : vector<8x512xf32> to vector<512xf32>
    %137 = vector.shape_cast %136 : vector<512xf32> to vector<1x512xf32>
    %cst_60 = arith.constant 8.000000e+00 : f32
    %138 = vector.broadcast %cst_60 : f32 to vector<1x512xf32>
    %139 = arith.divf %137, %138 : vector<1x512xf32>
    %140 = arith.mulf %134, %134 : vector<1x512xf32>
    %141 = arith.subf %139, %140 : vector<1x512xf32>
    %cst_61 = arith.constant 8.000000e-01 : f32
    %142 = vector.broadcast %cst_61 : f32 to vector<1x512xf32>
    %143 = arith.addf %141, %142 : vector<1x512xf32>
    %144 = math.rsqrt %143 : vector<1x512xf32>
    %145 = arith.mulf %129, %144 : vector<1x512xf32>
    %146 = arith.mulf %134, %145 : vector<1x512xf32>
    %147 = arith.subf %130, %146 : vector<1x512xf32>
    %148 = vector.broadcast %145 : vector<1x512xf32> to vector<8x512xf32>
    %149 = arith.mulf %128, %148 : vector<8x512xf32>
    %150 = vector.broadcast %147 : vector<1x512xf32> to vector<8x512xf32>
    %151 = arith.addf %149, %150 : vector<8x512xf32>
    %cst_62 = arith.constant 0.000000e+00 : f32
    %152 = vector.broadcast %cst_62 : f32 to vector<8x512xf32>
    %153 = arith.cmpf ogt, %151, %152 : vector<8x512xf32>
    %cst_63 = arith.constant 2.000000e-01 : f32
    %154 = vector.broadcast %cst_63 : f32 to vector<8x512xf32>
    %155 = arith.mulf %154, %151 : vector<8x512xf32>
    %156 = arith.select %153, %151, %155 : vector<8x512xi1>, vector<8x512xf32>
    %c0_64 = arith.constant 0 : index
    %c0_65 = arith.constant 0 : index
    %157 = vector.load %arg7[%c0_64, %c0_65] : memref<512x1024xbf16, #tpu.memory_space<vmem>>, vector<512x1024xbf16>
    %c0_66 = arith.constant 0 : index
    %c1152 = arith.constant 1152 : index
    %158 = vector.load %arg9[%c0_66, %c1152] : memref<3x3072xf32, #tpu.memory_space<vmem>>, vector<1x1024xf32>
    %159 = arith.truncf %156 : vector<8x512xf32> to vector<8x512xbf16>
    %cst_67 = arith.constant dense<0.000000e+00> : vector<8x1024xf32>
    %160 = tpu.matmul %159, %157, %cst_67 {dimension_numbers = #tpu.dot_dimension_numbers<[1], [0], [0], [1], [0, 0, 1, 1], [], []>} : vector<8x512xbf16>, vector<512x1024xbf16>, vector<8x1024xf32> -> vector<8x1024xf32>
    %161 = vector.broadcast %158 : vector<1x1024xf32> to vector<8x1024xf32>
    %162 = arith.addf %160, %161 : vector<8x1024xf32>
    %c1_68 = arith.constant 1 : index
    %c1152_69 = arith.constant 1152 : index
    %163 = vector.load %arg9[%c1_68, %c1152_69] : memref<3x3072xf32, #tpu.memory_space<vmem>>, vector<1x1024xf32>
    %c2_70 = arith.constant 2 : index
    %c1152_71 = arith.constant 1152 : index
    %164 = vector.load %arg9[%c2_70, %c1152_71] : memref<3x3072xf32, #tpu.memory_space<vmem>>, vector<1x1024xf32>
    %cst_72 = arith.constant dense<0.000000e+00> : vector<1024xf32>
    %165 = vector.multi_reduction <add>, %162, %cst_72 [0] : vector<8x1024xf32> to vector<1024xf32>
    %166 = vector.shape_cast %165 : vector<1024xf32> to vector<1x1024xf32>
    %cst_73 = arith.constant 8.000000e+00 : f32
    %167 = vector.broadcast %cst_73 : f32 to vector<1x1024xf32>
    %168 = arith.divf %166, %167 : vector<1x1024xf32>
    %169 = arith.mulf %162, %162 : vector<8x1024xf32>
    %cst_74 = arith.constant dense<0.000000e+00> : vector<1024xf32>
    %170 = vector.multi_reduction <add>, %169, %cst_74 [0] : vector<8x1024xf32> to vector<1024xf32>
    %171 = vector.shape_cast %170 : vector<1024xf32> to vector<1x1024xf32>
    %cst_75 = arith.constant 8.000000e+00 : f32
    %172 = vector.broadcast %cst_75 : f32 to vector<1x1024xf32>
    %173 = arith.divf %171, %172 : vector<1x1024xf32>
    %174 = arith.mulf %168, %168 : vector<1x1024xf32>
    %175 = arith.subf %173, %174 : vector<1x1024xf32>
    %cst_76 = arith.constant 8.000000e-01 : f32
    %176 = vector.broadcast %cst_76 : f32 to vector<1x1024xf32>
    %177 = arith.addf %175, %176 : vector<1x1024xf32>
    %178 = math.rsqrt %177 : vector<1x1024xf32>
    %179 = arith.mulf %163, %178 : vector<1x1024xf32>
    %180 = arith.mulf %168, %179 : vector<1x1024xf32>
    %181 = arith.subf %164, %180 : vector<1x1024xf32>
    %182 = vector.broadcast %179 : vector<1x1024xf32> to vector<8x1024xf32>
    %183 = arith.mulf %162, %182 : vector<8x1024xf32>
    %184 = vector.broadcast %181 : vector<1x1024xf32> to vector<8x1024xf32>
    %185 = arith.addf %183, %184 : vector<8x1024xf32>
    %cst_77 = arith.constant 0.000000e+00 : f32
    %186 = vector.broadcast %cst_77 : f32 to vector<8x1024xf32>
    %187 = arith.cmpf ogt, %185, %186 : vector<8x1024xf32>
    %cst_78 = arith.constant 2.000000e-01 : f32
    %188 = vector.broadcast %cst_78 : f32 to vector<8x1024xf32>
    %189 = arith.mulf %188, %185 : vector<8x1024xf32>
    %190 = arith.select %187, %185, %189 : vector<8x1024xi1>, vector<8x1024xf32>
    tpu.wait_dma2 semaphore(%arg12 : memref<!tpu.dma_semaphore, #tpu.memory_space<semaphore_mem>>) src(%arg8 : memref<1024x896xbf16, #tpu.memory_space<any>>) dst(%arg11 : memref<1024x896xbf16, #tpu.memory_space<vmem>>)
    %c0_79 = arith.constant 0 : index
    %c0_80 = arith.constant 0 : index
    %191 = vector.load %arg11[%c0_79, %c0_80] : memref<1024x896xbf16, #tpu.memory_space<vmem>>, vector<1024x896xbf16>
    %c0_81 = arith.constant 0 : index
    %c2176 = arith.constant 2176 : index
    %192 = vector.load %arg9[%c0_81, %c2176] : memref<3x3072xf32, #tpu.memory_space<vmem>>, vector<1x896xf32>
    %193 = arith.truncf %190 : vector<8x1024xf32> to vector<8x1024xbf16>
    %cst_82 = arith.constant dense<0.000000e+00> : vector<8x896xf32>
    %194 = tpu.matmul %193, %191, %cst_82 {dimension_numbers = #tpu.dot_dimension_numbers<[1], [0], [0], [1], [0, 0, 1, 1], [], []>} : vector<8x1024xbf16>, vector<1024x896xbf16>, vector<8x896xf32> -> vector<8x896xf32>
    %195 = vector.broadcast %192 : vector<1x896xf32> to vector<8x896xf32>
    %196 = arith.addf %194, %195 : vector<8x896xf32>
    %197 = math.tanh %196 : vector<8x896xf32>
    %c0_83 = arith.constant 0 : index
    %c0_84 = arith.constant 0 : index
    %198 = vector.load %arg10[%c0_83, %c0_84] : memref<8x896xf32, #tpu.memory_space<vmem>>, vector<8x896xf32>
    tpu.vector_store %arg10[%c0_83, %c0_84], %197 {strides = array<i32>} : memref<8x896xf32, #tpu.memory_space<vmem>>, vector<8x896xf32>,
    return
  }
  func.func @transform_0(%arg0: i32) -> (i32, i32) {
    %c0_i32 = arith.constant 0 : i32
    %c0_i32_0 = arith.constant 0 : i32
    return %arg0, %c0_i32 : i32, i32
  }
  func.func @transform_1(%arg0: i32) -> (i32, i32) {
    %c0_i32 = arith.constant 0 : i32
    %c0_i32_0 = arith.constant 0 : i32
    %c0_i32_1 = arith.constant 0 : i32
    return %c0_i32, %c0_i32_0 : i32, i32
  }
  func.func @transform_2(%arg0: i32) -> (i32, i32) {
    %c0_i32 = arith.constant 0 : i32
    %c0_i32_0 = arith.constant 0 : i32
    %c0_i32_1 = arith.constant 0 : i32
    return %c0_i32, %c0_i32_0 : i32, i32
  }
  func.func @transform_3(%arg0: i32) -> (i32, i32) {
    %c0_i32 = arith.constant 0 : i32
    %c0_i32_0 = arith.constant 0 : i32
    %c0_i32_1 = arith.constant 0 : i32
    return %c0_i32, %c0_i32_0 : i32, i32
  }
  func.func @transform_4(%arg0: i32) -> (i32, i32) {
    %c0_i32 = arith.constant 0 : i32
    %c0_i32_0 = arith.constant 0 : i32
    %c0_i32_1 = arith.constant 0 : i32
    return %c0_i32, %c0_i32_0 : i32, i32
  }
  func.func @transform_5(%arg0: i32) -> (i32, i32) {
    %c0_i32 = arith.constant 0 : i32
    %c0_i32_0 = arith.constant 0 : i32
    %c0_i32_1 = arith.constant 0 : i32
    return %c0_i32, %c0_i32_0 : i32, i32
  }
  func.func @transform_6(%arg0: i32) -> (i32, i32) {
    %c0_i32 = arith.constant 0 : i32
    %c0_i32_0 = arith.constant 0 : i32
    %c0_i32_1 = arith.constant 0 : i32
    return %c0_i32, %c0_i32_0 : i32, i32
  }
  func.func @transform_8(%arg0: i32) -> (i32, i32) {
    %c0_i32 = arith.constant 0 : i32
    %c0_i32_0 = arith.constant 0 : i32
    %c0_i32_1 = arith.constant 0 : i32
    return %c0_i32, %c0_i32_0 : i32, i32
  }
  func.func @transform_9(%arg0: i32) -> (i32, i32) {
    %c0_i32 = arith.constant 0 : i32
    %c0_i32_0 = arith.constant 0 : i32
    return %arg0, %c0_i32 : i32, i32
  }
}

</mosaic_0001>

<llo_original>
// kernel: tpu_custom_call.1
$region0: #{tpu_custom_call.1}
  #allocation0 [shape = 'u32[]', space=smem, size = 0x4, offset = 0x4, fixed_abs, tag = 'smem constant byte address 0x4 - core index']
  #allocation1 [shape = 'u32[144,128]{1,0:T(1,128)}', space=vmem, size = 0x12000, scoped, tag = 'internal scratch']
  #allocation2 [shape = 'bf16[1024,896]{1,0:T(8,128)(2,1)}', space=vmem, size = 0x1c0000, scoped, tag = 'scratch operand']
  #allocation3 [shape = 's32[1]{0}', space=sflag, size = 0x4, scoped, tag = 'scratch operand']
  #allocation17 [shape = 's32[]', space=sflag, size = 0x4, offset = 0, fixed_abs, tag = 'sflag constant byte address 0x0 - dummy sync flag']
  #allocation18 [shape = 's32[]', space=sflag, size = 0x4, offset = 0, fixed_abs, tag = 'sflag constant byte address 0x0 - dummy sync flag']
  #allocation19 [shape = 'u32[]', space=smem, size = 0x4, offset = 0x44, fixed_abs, tag = 'smem constant byte address 0x44 - assertion arg 0']
  #allocation20 [shape = 'u32[]', space=smem, size = 0x4, offset = 0x48, fixed_abs, tag = 'smem constant byte address 0x48 - assertion arg 1']
  %s0 = inlined_call_operand.vmem [shape: f32[8,2], index: 0, kind: input, shape index: {}]
  %s1 = inlined_call_operand.hbm [shape: f32[2,32], index: 1, kind: input, shape index: {}]
  %s2 = inlined_call_operand.hbm [shape: bf16[32,64], index: 2, kind: input, shape index: {}]
  %s3 = inlined_call_operand.hbm [shape: bf16[64,128], index: 3, kind: input, shape index: {}]
  %s4 = inlined_call_operand.hbm [shape: bf16[128,256], index: 4, kind: input, shape index: {}]
  %s5 = inlined_call_operand.hbm [shape: bf16[256,512], index: 5, kind: input, shape index: {}]
  %s6 = inlined_call_operand.hbm [shape: bf16[512,1024], index: 6, kind: input, shape index: {}]
  %s7 = inlined_call_operand.hbm [shape: bf16[1024,896], index: 7, kind: input, shape index: {}]
  %s8 = inlined_call_operand.hbm [shape: f32[3,3072], index: 8, kind: input, shape index: {}]
  %s9 = inlined_call_operand.hbm [shape: f32[8,896], index: 9, kind: output, shape index: {}]
  %s10 = sld [smem:[#allocation0]]
  $region74: #{tpu_custom_call.1} parent=0
    _
  %s12 = ssub.s32 1, %s10
  %s13 = scalar_select 0, %s12, %s10
  $region1: #{tpu_custom_call.1} parent=0
    #allocation4 [shape = 'u8[1024]{0}', space=vmem, size = 0x400, scoped, tag = 'input window, operand 1, single buffered']
    #allocation5 [shape = 's32[1]{0}', space=sflag, size = 0x4, scoped, tag = 'scoped memory for tpu_custom_call.1']
    #allocation6 [shape = 's32[1]{0}', space=sflag, size = 0x4, scoped, tag = 'scoped memory for tpu_custom_call.1']
    #allocation7 [shape = 'u8[8192]{0}', space=vmem, size = 0x2000, scoped, tag = 'input window, operand 2, single buffered']
    #allocation8 [shape = 's32[1]{0}', space=sflag, size = 0x4, scoped, tag = 'scoped memory for tpu_custom_call.1']
    #allocation9 [shape = 'u8[16384]{0}', space=vmem, size = 0x4000, scoped, tag = 'input window, operand 3, single buffered']
    #allocation10 [shape = 'u8[65536]{0}', space=vmem, size = 0x10000, scoped, tag = 'input window, operand 4, single buffered']
    #allocation11 [shape = 's32[1]{0}', space=sflag, size = 0x4, scoped, tag = 'scoped memory for tpu_custom_call.1']
    #allocation12 [shape = 'u8[262144]{0}', space=vmem, size = 0x40000, scoped, tag = 'input window, operand 5, single buffered']
    #allocation13 [shape = 'u8[1048576]{0}', space=vmem, size = 0x100000, scoped, tag = 'input window, operand 6, single buffered']
    #allocation14 [shape = 's32[1]{0}', space=sflag, size = 0x4, scoped, tag = 'scoped memory for tpu_custom_call.1']
    #allocation15 [shape = 'u8[49152]{0}', space=vmem, size = 0xc000, scoped, tag = 'input window, operand 8, single buffered']
    #allocation16 [shape = 'u8[28672]{0}', space=vmem, size = 0x7000, scoped, tag = 'output window, operand 0, single buffered']
    %14 = vsyncpa [#allocation5], 0
    %15 = vsyncpa [#allocation8], 0
    %16 = vsyncpa [#allocation11], 0
    %17 = vsyncpa [#allocation14], 0
    %18 = vsyncpa [#allocation6], 0
    // Predicated region
    $region2: #{tpu_custom_call.1} parent=1 // pred_check
      _
    $region3: #{tpu_custom_call.1} parent=1 // pred_check_branch
      %20 = sbr.rel (0) target = $region5
    $region4: #{tpu_custom_call.1} parent=1 // pred_region
      _
    $region5: #{tpu_custom_call.1} parent=1 // pred_fallthru
      _
    // Predicated region
    $region6: #{tpu_custom_call.1} parent=1 // pred_check
      _
    $region7: #{tpu_custom_call.1} parent=1 // pred_check_branch
      %22 = sbr.rel (0) target = $region9
    $region8: #{tpu_custom_call.1} parent=1 // pred_region
      %s24 = ssub.s32 32, 32
      %25 = vsyncadd [#allocation5], %s24
      %s27 = sshll.u32 [#allocation4], 4
      %s28 = int_to_ptr.vmem [resolvable:$true] %s27
      %30 = dma.hbm_to_vmem [thread:$0]  %s1, 32, %s28, [#allocation5]
    $region9: #{tpu_custom_call.1} parent=1 // pred_fallthru
      _
    // Predicated region
    $region10: #{tpu_custom_call.1} parent=1 // pred_check
      _
    $region11: #{tpu_custom_call.1} parent=1 // pred_check_branch
      %32 = sbr.rel (0) target = $region13
    $region12: #{tpu_custom_call.1} parent=1 // pred_region
      %s34 = ssub.s32 256, 256
      %35 = vsyncadd [#allocation8], %s34
      %s36 = sshll.u32 [#allocation7], 4
      %s37 = int_to_ptr.vmem [resolvable:$true] %s36
      %42 = dma.hbm_to_vmem [thread:$0]  %s2, 256, %s37, [#allocation8], 64, 64, 4
    $region13: #{tpu_custom_call.1} parent=1 // pred_fallthru
      _
    // Predicated region
    $region14: #{tpu_custom_call.1} parent=1 // pred_check
      _
    $region15: #{tpu_custom_call.1} parent=1 // pred_check_branch
      %44 = sbr.rel (0) target = $region17
    $region16: #{tpu_custom_call.1} parent=1 // pred_region
      %s46 = ssub.s32 512, 512
      %47 = vsyncadd [#allocation8], %s46
      %s48 = sshll.u32 [#allocation9], 4
      %s49 = int_to_ptr.vmem [resolvable:$true] %s48
      %54 = dma.hbm_to_vmem [thread:$0]  %s3, 512, %s49, [#allocation8], 64, 64, 4
    $region17: #{tpu_custom_call.1} parent=1 // pred_fallthru
      _
    // Predicated region
    $region18: #{tpu_custom_call.1} parent=1 // pred_check
      _
    $region19: #{tpu_custom_call.1} parent=1 // pred_check_branch
      %56 = sbr.rel (0) target = $region21
    $region20: #{tpu_custom_call.1} parent=1 // pred_region
      %s58 = ssub.s32 2048, 2048
      %59 = vsyncadd [#allocation11], %s58
      %s60 = sshll.u32 [#allocation10], 4
      %s61 = int_to_ptr.vmem [resolvable:$true] %s60
      %66 = dma.hbm_to_vmem [thread:$0]  %s4, 2048, %s61, [#allocation11], 128, 128, 8
    $region21: #{tpu_custom_call.1} parent=1 // pred_fallthru
      _
    // Predicated region
    $region22: #{tpu_custom_call.1} parent=1 // pred_check
      _
    $region23: #{tpu_custom_call.1} parent=1 // pred_check_branch
      %68 = sbr.rel (0) target = $region25
    $region24: #{tpu_custom_call.1} parent=1 // pred_region
      %s70 = ssub.s32 8192, 8192
      %71 = vsyncadd [#allocation11], %s70
      %s72 = sshll.u32 [#allocation12], 4
      %s73 = int_to_ptr.vmem [resolvable:$true] %s72
      %78 = dma.hbm_to_vmem [thread:$0]  %s5, 8192, %s73, [#allocation11], 256, 256, 16
    $region25: #{tpu_custom_call.1} parent=1 // pred_fallthru
      _
    // Predicated region
    $region26: #{tpu_custom_call.1} parent=1 // pred_check
      _
    $region27: #{tpu_custom_call.1} parent=1 // pred_check_branch
      %80 = sbr.rel (0) target = $region29
    $region28: #{tpu_custom_call.1} parent=1 // pred_region
      %s82 = ssub.s32 32768, 32768
      %83 = vsyncadd [#allocation14], %s82
      %s84 = sshll.u32 [#allocation13], 4
      %s85 = int_to_ptr.vmem [resolvable:$true] %s84
      %90 = dma.hbm_to_vmem [thread:$0]  %s6, 32768, %s85, [#allocation14], 512, 512, 32
    $region29: #{tpu_custom_call.1} parent=1 // pred_fallthru
      _
    // Predicated region
    $region30: #{tpu_custom_call.1} parent=1 // pred_check
      _
    $region31: #{tpu_custom_call.1} parent=1 // pred_check_branch
      %92 = sbr.rel (0) target = $region33
    $region32: #{tpu_custom_call.1} parent=1 // pred_region
      %s94 = ssub.s32 1536, 1536
      %95 = vsyncadd [#allocation14], %s94
      %s97 = sshll.u32 [#allocation15], 4
      %s98 = int_to_ptr.vmem [resolvable:$true] %s97
      %100 = dma.hbm_to_vmem [thread:$0]  %s8, 1536, %s98, [#allocation14]
    $region33: #{tpu_custom_call.1} parent=1 // pred_fallthru
      _
    // Predicated region
    $region34: #{tpu_custom_call.1} parent=1 // pred_check
      _
    $region35: #{tpu_custom_call.1} parent=1 // pred_check_branch
      %102 = sbr.rel (0) target = $region37
    $region36: #{tpu_custom_call.1} parent=1 // pred_region
      %103 = dma.done [#allocation5], 32
    $region37: #{tpu_custom_call.1} parent=1 // pred_fallthru
      _
    // Predicated region
    $region38: #{tpu_custom_call.1} parent=1 // pred_check
      _
    $region39: #{tpu_custom_call.1} parent=1 // pred_check_branch
      %105 = sbr.rel (0) target = $region41
    $region40: #{tpu_custom_call.1} parent=1 // pred_region
      %106 = dma.done [#allocation8], 256
    $region41: #{tpu_custom_call.1} parent=1 // pred_fallthru
      _
    // Predicated region
    $region42: #{tpu_custom_call.1} parent=1 // pred_check
      _
    $region43: #{tpu_custom_call.1} parent=1 // pred_check_branch
      %108 = sbr.rel (0) target = $region45
    $region44: #{tpu_custom_call.1} parent=1 // pred_region
      %109 = dma.done [#allocation8], 512
    $region45: #{tpu_custom_call.1} parent=1 // pred_fallthru
      _
    // Predicated region
    $region46: #{tpu_custom_call.1} parent=1 // pred_check
      _
    $region47: #{tpu_custom_call.1} parent=1 // pred_check_branch
      %111 = sbr.rel (0) target = $region49
    $region48: #{tpu_custom_call.1} parent=1 // pred_region
      %112 = dma.done [#allocation11], 2048
    $region49: #{tpu_custom_call.1} parent=1 // pred_fallthru
      _
    // Predicated region
    $region50: #{tpu_custom_call.1} parent=1 // pred_check
      _
    $region51: #{tpu_custom_call.1} parent=1 // pred_check_branch
      %114 = sbr.rel (0) target = $region53
    $region52: #{tpu_custom_call.1} parent=1 // pred_region
      %115 = dma.done [#allocation11], 8192
    $region53: #{tpu_custom_call.1} parent=1 // pred_fallthru
      _
    // Predicated region
    $region54: #{tpu_custom_call.1} parent=1 // pred_check
      _
    $region55: #{tpu_custom_call.1} parent=1 // pred_check_branch
      %117 = sbr.rel (0) target = $region57
    $region56: #{tpu_custom_call.1} parent=1 // pred_region
      %118 = dma.done [#allocation14], 32768
    $region57: #{tpu_custom_call.1} parent=1 // pred_fallthru
      _
    // Predicated region
    $region58: #{tpu_custom_call.1} parent=1 // pred_check
      _
    $region59: #{tpu_custom_call.1} parent=1 // pred_check_branch
      %120 = sbr.rel (0) target = $region61
    $region60: #{tpu_custom_call.1} parent=1 // pred_region
      %121 = dma.done [#allocation14], 1536
    $region61: #{tpu_custom_call.1} parent=1 // pred_fallthru
      _
    // Predicated region
    $region62: #{tpu_custom_call.1} parent=1 // pred_check
      _
    $region63: #{tpu_custom_call.1} parent=1 // pred_check_branch
      %124 = sbr.rel target = $region65
    $region64: #{tpu_custom_call.1} parent=1 // pred_region
      %125 = sst [smem:[#allocation19]] [#allocation18]
      %126 = sst [smem:[#allocation20]] [#allocation17]
    $region65: #{tpu_custom_call.1} parent=1 // pred_fallthru
      _
    %128 = shalt.err (0)
    %s130 = sshll.u32 [#allocation2], 4
    %s131 = int_to_ptr.vmem [resolvable:$true] %s130
    %133 = dma.hbm_to_vmem [thread:$0]  %s7, 57344, %s131, [#allocation3]
    %v134 = vld [vmem:[%s0] sm:$0xff]
    %v135 = vld [vmem:[#allocation4] sm:$0x3]
    %v136 = vld [vmem:[#allocation15] sm:$0x1]
    %138 = vset.pattern.permute.xlu0 0
    %139 = vperm.xlu0 %138, %v134
    %v140 = vpop.permute.xlu0 %139
    %v142 = vlaneseq
    %v143 = vshrl.u32 %v142, 7
    %v144 = vsub.s32 0, %v143
    %v145 = vrot.slane %v135, %v144
    %v146 = vmul.f32 %v140, %v145
    %147 = vset.pattern.permute.xlu0 1
    %148 = vperm.xlu0 %147, %v134
    %v149 = vpop.permute.xlu0 %148
    %v151 = vlaneseq
    %v152 = vshrl.u32 %v151, 7
    %v153 = vsub.s32 1, %v152
    %v154 = vrot.slane %v135, %v153
    %v155 = vmul.f32 %v149, %v154
    %v156 = vadd.f32 %v146, %v155
    %v157 = vlaneseq
    %v158 = vshrl.u32 %v157, 7
    %v159 = vsub.s32 0, %v158
    %v160 = vrot.slane %v136, %v159
    %v161 = vadd.f32 %v156, %v160
    %vm162 = vcmp.gt.f32.partialorder %v161, 0.0
    %v163 = vmul.f32 %v161, 0.2
    %v164 = vsel %vm162, %v161, %v163
    %v165 = vld [vmem:[#allocation7] sm:$0xf]
    %v166 = vld [vmem:[#allocation7 + $0x4] sm:$0xf]
    %v167 = vld [vmem:[#allocation7 + $0x8] sm:$0xf]
    %v168 = vld [vmem:[#allocation7 + $0xc] sm:$0xf]
    %v169 = vld [vmem:[#allocation15 + $0x4] sm:$0x1]
    %v170 = vpack.c.bf16 %v164, %v164
    %v171 = vlaneseq
    %v172 = vshrl.u32 %v171, 7
    %v173 = vsub.s32 0, %v172
    %v174 = vrot.slane %v169, %v173
    %v179 = vunpack.c.l.b16 %v165
    %v180 = vunpack.c.l.b16 %v166
    %v181 = vunpack.c.l.b16 %v167
    %v182 = vunpack.c.l.b16 %v168
    %v183 = vpack.c.b16 %v180, %v179
    %v184 = vpack.c.b16 %v182, %v181
    %vm187 = vcmask 261120
    %v189 = vsel %vm187, %v170, 0
    %191 = vmatprep.subr.bf16.mxu0 0
    %192 = vmatpush1.bf16.msra.mxu0 0
    %193 = vmatprep.subr.bf16.mxu0 0
    %194 = vmatpush1.bf16.msra.mxu0 0
    %195 = vmatprep.subr.bf16.mxu0 0
    %196 = vmatpush1.bf16.msra.mxu0 0
    %197 = vmatprep.subr.bf16.mxu0 0
    %198 = vmatpush1.bf16.msra.mxu0 0
    %199 = vmatprep.subr.bf16.mxu0 0
    %200 = vmatpush1.bf16.msra.mxu0 0
    %201 = vmatprep.subr.bf16.mxu0 0
    %202 = vmatpush1.bf16.msra.mxu0 0
    %203 = vmatprep.subr.bf16.mxu0 0
    %204 = vmatpush1.bf16.msra.mxu0 %v184
    %205 = vmatprep.subr.bf16.mxu0 0
    %206 = vmatpush1.bf16.msra.mxu0 %v183
    %207 = vmatprep.subr.bf16.mxu0 0
    %208 = vmatpush2.bf16.msra.mxu0 0
    %209 = vmatprep.subr.bf16.mxu0 0
    %210 = vmatpush2.bf16.msra.mxu0 0
    %211 = vmatprep.subr.bf16.mxu0 0
    %212 = vmatpush2.bf16.msra.mxu0 0
    %213 = vmatprep.subr.bf16.mxu0 0
    %214 = vmatpush2.bf16.msra.mxu0 0
    %215 = vmatprep.subr.bf16.mxu0 0
    %216 = vmatpush2.bf16.msra.mxu0 0
    %217 = vmatprep.subr.bf16.mxu0 0
    %218 = vmatpush2.bf16.msra.mxu0 0
    %219 = vmatprep.subr.bf16.mxu0 0
    %220 = vmatpush2.bf16.msra.mxu0 0
    %221 = vmatprep.subr.bf16.mxu0 0
    %222 = vmatpush2.bf16.msra.mxu0 0
    %223 = vmatprep.mubr.bf16.mxu0 0
    %224 = vmatmul.mubr.bf16.gmra.mxu0 %v189
    %v225 = vpop.f32.mrf.mxu0
    %v226 = vadd.f32 %v174, %v225
    %v227 = vpop.f32.mrf.mxu0
    %v228 = vpop.f32.mrf.mxu0
    %v229 = vpop.f32.mrf.mxu0
    %230 = vdwg.mxu0
    %v231 = vld [vmem:[#allocation15 + $0x5] sm:$0x1]
    %v232 = vld [vmem:[#allocation15 + $0x6] sm:$0x1]
    %vm233 = vcmask 523264
    %v234 = vsel %vm233, %v226, 0.0
    %v235 = vrot.slane %v234, 4
    %v236 = vadd.f32 %v234, %v235
    %v237 = vrot.slane %v236, 2
    %v238 = vadd.f32 %v236, %v237
    %v239 = vrot.slane %v238, 1
    %v240 = vadd.f32 %v238, %v239
    %v241 = vrcp.pop 8.0
    %v242 = vmul.f32 %v240, %v241
    %v243 = vmul.f32 %v226, %v226
    %v244 = vsel %vm233, %v243, 0.0
    %v245 = vrot.slane %v244, 4
    %v246 = vadd.f32 %v244, %v245
    %v247 = vrot.slane %v246, 2
    %v248 = vadd.f32 %v246, %v247
    %v249 = vrot.slane %v248, 1
    %v250 = vadd.f32 %v248, %v249
    %v251 = vmul.f32 %v250, %v241
    %v252 = vmul.f32 %v242, %v242
    %v253 = vsub.f32 %v251, %v252
    %v254 = vadd.f32 %v253, 0.8
    %v255 = vrsqrt.pop %v254
    %v256 = vmul.f32 %v231, %v255
    %v257 = vmul.f32 %v242, %v256
    %v258 = vsub.f32 %v232, %v257
    %v259 = vlaneseq
    %v260 = vshrl.u32 %v259, 7
    %v261 = vsub.s32 0, %v260
    %v262 = vrot.slane %v256, %v261
    %v263 = vmul.f32 %v226, %v262
    %v264 = vlaneseq
    %v265 = vshrl.u32 %v264, 7
    %v266 = vsub.s32 0, %v265
    %v267 = vrot.slane %v258, %v266
    %v268 = vadd.f32 %v263, %v267
    %vm269 = vcmp.gt.f32.partialorder %v268, 0.0
    %v270 = vmul.f32 %v268, 0.2
    %v271 = vsel %vm269, %v268, %v270
    %v272 = vld [vmem:[#allocation9] sm:$0xf]
    %v273 = vld [vmem:[#allocation9 + $0x4] sm:$0xf]
    %v274 = vld [vmem:[#allocation9 + $0x8] sm:$0xf]
    %v275 = vld [vmem:[#allocation9 + $0xc] sm:$0xf]
    %v276 = vld [vmem:[#allocation9 + $0x10] sm:$0xf]
    %v277 = vld [vmem:[#allocation9 + $0x14] sm:$0xf]
    %v278 = vld [vmem:[#allocation9 + $0x18] sm:$0xf]
    %v279 = vld [vmem:[#allocation9 + $0x1c] sm:$0xf]
    %v280 = vld [vmem:[#allocation15 + $0x8] sm:$0x1]
    %v281 = vpack.c.bf16 %v271, %v271
    %v282 = vlaneseq
    %v283 = vshrl.u32 %v282, 7
    %v284 = vsub.s32 0, %v283
    %v285 = vrot.slane %v280, %v284
    %v294 = vunpack.c.l.b16 %v272
    %v295 = vunpack.c.l.b16 %v273
    %v296 = vunpack.c.l.b16 %v274
    %v297 = vunpack.c.l.b16 %v275
    %v298 = vunpack.c.l.b16 %v276
    %v299 = vunpack.c.l.b16 %v277
    %v300 = vunpack.c.l.b16 %v278
    %v301 = vunpack.c.l.b16 %v279
    %v302 = vpack.c.b16 %v295, %v294
    %v303 = vpack.c.b16 %v297, %v296
    %v304 = vpack.c.b16 %v299, %v298
    %v305 = vpack.c.b16 %v301, %v300
    %v311 = vsel %vm233, %v281, 0
    %313 = vmatprep.subr.bf16.mxu0 0
    %314 = vmatpush1.bf16.msra.mxu0 0
    %315 = vmatprep.subr.bf16.mxu0 0
    %316 = vmatpush1.bf16.msra.mxu0 0
    %317 = vmatprep.subr.bf16.mxu0 0
    %318 = vmatpush1.bf16.msra.mxu0 0
    %319 = vmatprep.subr.bf16.mxu0 0
    %320 = vmatpush1.bf16.msra.mxu0 0
    %321 = vmatprep.subr.bf16.mxu0 0
    %322 = vmatpush1.bf16.msra.mxu0 %v305
    %323 = vmatprep.subr.bf16.mxu0 0
    %324 = vmatpush1.bf16.msra.mxu0 %v304
    %325 = vmatprep.subr.bf16.mxu0 0
    %326 = vmatpush1.bf16.msra.mxu0 %v303
    %327 = vmatprep.subr.bf16.mxu0 0
    %328 = vmatpush1.bf16.msra.mxu0 %v302
    %329 = vmatprep.subr.bf16.mxu0 0
    %330 = vmatpush2.bf16.msra.mxu0 0
    %331 = vmatprep.subr.bf16.mxu0 0
    %332 = vmatpush2.bf16.msra.mxu0 0
    %333 = vmatprep.subr.bf16.mxu0 0
    %334 = vmatpush2.bf16.msra.mxu0 0
    %335 = vmatprep.subr.bf16.mxu0 0
    %336 = vmatpush2.bf16.msra.mxu0 0
    %337 = vmatprep.subr.bf16.mxu0 0
    %338 = vmatpush2.bf16.msra.mxu0 0
    %339 = vmatprep.subr.bf16.mxu0 0
    %340 = vmatpush2.bf16.msra.mxu0 0
    %341 = vmatprep.subr.bf16.mxu0 0
    %342 = vmatpush2.bf16.msra.mxu0 0
    %343 = vmatprep.subr.bf16.mxu0 0
    %344 = vmatpush2.bf16.msra.mxu0 0
    %345 = vmatprep.mubr.bf16.mxu0 0
    %346 = vmatmul.mubr.bf16.gmra.mxu0 %v311
    %v347 = vpop.f32.mrf.mxu0
    %v348 = vadd.f32 %v285, %v347
    %v349 = vpop.f32.mrf.mxu0
    %v350 = vpop.f32.mrf.mxu0
    %v351 = vpop.f32.mrf.mxu0
    %352 = vdwg.mxu0
    %v353 = vld [vmem:[#allocation15 + $0x9] sm:$0x1]
    %v354 = vld [vmem:[#allocation15 + $0xa] sm:$0x1]
    %v355 = vrot.slane %v348, 4
    %v356 = vadd.f32 %v348, %v355
    %v357 = vrot.slane %v356, 2
    %v358 = vadd.f32 %v356, %v357
    %v359 = vrot.slane %v358, 1
    %v360 = vadd.f32 %v358, %v359
    %v361 = vmul.f32 %v360, %v241
    %v362 = vmul.f32 %v348, %v348
    %v363 = vrot.slane %v362, 4
    %v364 = vadd.f32 %v362, %v363
    %v365 = vrot.slane %v364, 2
    %v366 = vadd.f32 %v364, %v365
    %v367 = vrot.slane %v366, 1
    %v368 = vadd.f32 %v366, %v367
    %v369 = vmul.f32 %v368, %v241
    %v370 = vmul.f32 %v361, %v361
    %v371 = vsub.f32 %v369, %v370
    %v372 = vadd.f32 %v371, 0.8
    %v373 = vrsqrt.pop %v372
    %v374 = vmul.f32 %v353, %v373
    %v375 = vmul.f32 %v361, %v374
    %v376 = vsub.f32 %v354, %v375
    %v377 = vlaneseq
    %v378 = vshrl.u32 %v377, 7
    %v379 = vsub.s32 0, %v378
    %v380 = vrot.slane %v374, %v379
    %v381 = vmul.f32 %v348, %v380
    %v382 = vlaneseq
    %v383 = vshrl.u32 %v382, 7
    %v384 = vsub.s32 0, %v383
    %v385 = vrot.slane %v376, %v384
    %v386 = vadd.f32 %v381, %v385
    %vm387 = vcmp.gt.f32.partialorder %v386, 0.0
    %v388 = vmul.f32 %v386, 0.2
    %v389 = vsel %vm387, %v386, %v388
    %v390 = vld [vmem:[#allocation10] sm:$0xff]
    %v391 = vld [vmem:[#allocation10 + $0x8] sm:$0xff]
    %v392 = vld [vmem:[#allocation10 + $0x10] sm:$0xff]
    %v393 = vld [vmem:[#allocation10 + $0x18] sm:$0xff]
    %v394 = vld [vmem:[#allocation10 + $0x20] sm:$0xff]
    %v395 = vld [vmem:[#allocation10 + $0x28] sm:$0xff]
    %v396 = vld [vmem:[#allocation10 + $0x30] sm:$0xff]
    %v397 = vld [vmem:[#allocation10 + $0x38] sm:$0xff]
    %v398 = vld [vmem:[#allocation10 + $0x40] sm:$0xff]
    %v399 = vld [vmem:[#allocation10 + $0x48] sm:$0xff]
    %v400 = vld [vmem:[#allocation10 + $0x50] sm:$0xff]
    %v401 = vld [vmem:[#allocation10 + $0x58] sm:$0xff]
    %v402 = vld [vmem:[#allocation10 + $0x60] sm:$0xff]
    %v403 = vld [vmem:[#allocation10 + $0x68] sm:$0xff]
    %v404 = vld [vmem:[#allocation10 + $0x70] sm:$0xff]
    %v405 = vld [vmem:[#allocation10 + $0x78] sm:$0xff]
    %s406 = scalar_lea.vmem [#allocation15], 12
    %v407 = vld [vmem:[%s406] ss:$4 sm:$0x3]
    %v408 = vpack.c.bf16 %v389, %v389
    %v410 = vlaneseq
    %v411 = vshrl.u32 %v410, 7
    %v412 = vsub.s32 0, %v411
    %v413 = vrot.slane %v407, %v412
    %v414 = vlaneseq
    %v415 = vshrl.u32 %v414, 7
    %v416 = vsub.s32 1, %v415
    %v417 = vrot.slane %v407, %v416
    %v436 = vunpack.c.l.b16 %v390
    %v437 = vunpack.c.h.b16 %v390
    %v438 = vunpack.c.l.b16 %v391
    %v439 = vunpack.c.h.b16 %v391
    %v440 = vunpack.c.l.b16 %v392
    %v441 = vunpack.c.h.b16 %v392
    %v442 = vunpack.c.l.b16 %v393
    %v443 = vunpack.c.h.b16 %v393
    %v444 = vunpack.c.l.b16 %v394
    %v445 = vunpack.c.h.b16 %v394
    %v446 = vunpack.c.l.b16 %v395
    %v447 = vunpack.c.h.b16 %v395
    %v448 = vunpack.c.l.b16 %v396
    %v449 = vunpack.c.h.b16 %v396
    %v450 = vunpack.c.l.b16 %v397
    %v451 = vunpack.c.h.b16 %v397
    %v452 = vunpack.c.l.b16 %v398
    %v453 = vunpack.c.h.b16 %v398
    %v454 = vunpack.c.l.b16 %v399
    %v455 = vunpack.c.h.b16 %v399
    %v456 = vunpack.c.l.b16 %v400
    %v457 = vunpack.c.h.b16 %v400
    %v458 = vunpack.c.l.b16 %v401
    %v459 = vunpack.c.h.b16 %v401
    %v460 = vunpack.c.l.b16 %v402
    %v461 = vunpack.c.h.b16 %v402
    %v462 = vunpack.c.l.b16 %v403
    %v463 = vunpack.c.h.b16 %v403
    %v464 = vunpack.c.l.b16 %v404
    %v465 = vunpack.c.h.b16 %v404
    %v466 = vunpack.c.l.b16 %v405
    %v467 = vunpack.c.h.b16 %v405
    %v468 = vpack.c.b16 %v438, %v436
    %v469 = vpack.c.b16 %v439, %v437
    %v470 = vpack.c.b16 %v442, %v440
    %v471 = vpack.c.b16 %v443, %v441
    %v472 = vpack.c.b16 %v446, %v444
    %v473 = vpack.c.b16 %v447, %v445
    %v474 = vpack.c.b16 %v450, %v448
    %v475 = vpack.c.b16 %v451, %v449
    %v476 = vpack.c.b16 %v454, %v452
    %v477 = vpack.c.b16 %v455, %v453
    %v478 = vpack.c.b16 %v458, %v456
    %v479 = vpack.c.b16 %v459, %v457
    %v480 = vpack.c.b16 %v462, %v460
    %v481 = vpack.c.b16 %v463, %v461
    %v482 = vpack.c.b16 %v466, %v464
    %v483 = vpack.c.b16 %v467, %v465
    %500 = vmatprep.subr.bf16.mxu0 %v483
    %501 = vmatpush1.bf16.msra.mxu0 %v482
    %502 = vmatprep.subr.bf16.mxu0 %v481
    %503 = vmatpush1.bf16.msra.mxu0 %v480
    %504 = vmatprep.subr.bf16.mxu0 %v479
    %505 = vmatpush1.bf16.msra.mxu0 %v478
    %506 = vmatprep.subr.bf16.mxu0 %v477
    %507 = vmatpush1.bf16.msra.mxu0 %v476
    %508 = vmatprep.subr.bf16.mxu0 %v475
    %509 = vmatpush1.bf16.msra.mxu0 %v474
    %510 = vmatprep.subr.bf16.mxu0 %v473
    %511 = vmatpush1.bf16.msra.mxu0 %v472
    %512 = vmatprep.subr.bf16.mxu0 %v471
    %513 = vmatpush1.bf16.msra.mxu0 %v470
    %514 = vmatprep.subr.bf16.mxu0 %v469
    %515 = vmatpush1.bf16.msra.mxu0 %v468
    %516 = vmatprep.subr.bf16.mxu0 0
    %517 = vmatpush2.bf16.msra.mxu0 0
    %518 = vmatprep.subr.bf16.mxu0 0
    %519 = vmatpush2.bf16.msra.mxu0 0
    %520 = vmatprep.subr.bf16.mxu0 0
    %521 = vmatpush2.bf16.msra.mxu0 0
    %522 = vmatprep.subr.bf16.mxu0 0
    %523 = vmatpush2.bf16.msra.mxu0 0
    %524 = vmatprep.subr.bf16.mxu0 0
    %525 = vmatpush2.bf16.msra.mxu0 0
    %526 = vmatprep.subr.bf16.mxu0 0
    %527 = vmatpush2.bf16.msra.mxu0 0
    %528 = vmatprep.subr.bf16.mxu0 0
    %529 = vmatpush2.bf16.msra.mxu0 0
    %530 = vmatprep.subr.bf16.mxu0 0
    %531 = vmatpush2.bf16.msra.mxu0 0
    %532 = vmatprep.mubr.bf16.mxu0 0
    %533 = vmatmul.mubr.bf16.gmra.mxu0 %v408
    %v534 = vpop.f32.mrf.mxu0
    %v535 = vadd.f32 %v413, %v534
    %v536 = vpop.f32.mrf.mxu0
    %v537 = vadd.f32 %v417, %v536
    %v538 = vpop.f32.mrf.mxu0
    %v539 = vpop.f32.mrf.mxu0
    %540 = vdwg.mxu0
    %s541 = scalar_lea.vmem [#allocation15], 13
    %v542 = vld [vmem:[%s541] ss:$4 sm:$0x3]
    %s543 = scalar_lea.vmem [#allocation15], 14
    %v544 = vld [vmem:[%s543] ss:$4 sm:$0x3]
    %v545 = vrot.slane %v535, 4
    %v546 = vadd.f32 %v535, %v545
    %v547 = vrot.slane %v546, 2
    %v548 = vadd.f32 %v546, %v547
    %v549 = vrot.slane %v548, 1
    %v550 = vadd.f32 %v548, %v549
    %v551 = vrot.slane %v537, 4
    %v552 = vadd.f32 %v537, %v551
    %v553 = vrot.slane %v552, 2
    %v554 = vadd.f32 %v552, %v553
    %v555 = vrot.slane %v554, 1
    %v556 = vadd.f32 %v554, %v555
    %v557 = vmul.f32 %v550, %v241
    %v558 = vmul.f32 %v556, %v241
    %v559 = vmul.f32 %v535, %v535
    %v560 = vmul.f32 %v537, %v537
    %v561 = vrot.slane %v559, 4
    %v562 = vadd.f32 %v559, %v561
    %v563 = vrot.slane %v562, 2
    %v564 = vadd.f32 %v562, %v563
    %v565 = vrot.slane %v564, 1
    %v566 = vadd.f32 %v564, %v565
    %v567 = vrot.slane %v560, 4
    %v568 = vadd.f32 %v560, %v567
    %v569 = vrot.slane %v568, 2
    %v570 = vadd.f32 %v568, %v569
    %v571 = vrot.slane %v570, 1
    %v572 = vadd.f32 %v570, %v571
    %v573 = vmul.f32 %v566, %v241
    %v574 = vmul.f32 %v572, %v241
    %v575 = vmul.f32 %v557, %v557
    %v576 = vmul.f32 %v558, %v558
    %v577 = vsub.f32 %v573, %v575
    %v578 = vsub.f32 %v574, %v576
    %v579 = vadd.f32 %v577, 0.8
    %v580 = vadd.f32 %v578, 0.8
    %v581 = vrsqrt.pop %v579
    %v582 = vrsqrt.pop %v580
    %v585 = vcombine.low %v581, %v582
    %v587 = vunpack.c.l.s4 1966171168
    %v588 = vunpack.c.0.s8 %v587
    %v589 = vlaneseq
    %v590 = vshrl.u32 %v589, 7
    %v591 = vsub.s32 %v588, %v590
    %v592 = vrot.slane %v585, %v591
    %v594 = vunpack.c.l.s4 1966171168
    %v595 = vunpack.c.0.s8 %v594
    %v596 = vlaneseq
    %v597 = vshrl.u32 %v596, 7
    %v598 = vsub.s32 %v595, %v597
    %v599 = vrot.slane %v592, %v598
    %v601 = vmul.f32 %v542, %v599
    %v603 = vlaneseq
    %v604 = vshrl.u32 %v603, 7
    %v605 = vsub.s32 0, %v604
    %v606 = vrot.slane %v601, %v605
    %v607 = vlaneseq
    %v608 = vshrl.u32 %v607, 7
    %v609 = vsub.s32 1, %v608
    %v610 = vrot.slane %v601, %v609
    %v613 = vmul.f32 %v557, %v606
    %v614 = vmul.f32 %v558, %v610
    %v617 = vcombine.low %v613, %v614
    %v619 = vunpack.c.l.s4 1966171168
    %v620 = vunpack.c.0.s8 %v619
    %v621 = vlaneseq
    %v622 = vshrl.u32 %v621, 7
    %v623 = vsub.s32 %v620, %v622
    %v624 = vrot.slane %v617, %v623
    %v626 = vunpack.c.l.s4 1966171168
    %v627 = vunpack.c.0.s8 %v626
    %v628 = vlaneseq
    %v629 = vshrl.u32 %v628, 7
    %v630 = vsub.s32 %v627, %v629
    %v631 = vrot.slane %v624, %v630
    %v633 = vsub.f32 %v544, %v631
    %v634 = vmul.f32 %v535, %v606
    %v635 = vmul.f32 %v537, %v610
    %v637 = vlaneseq
    %v638 = vshrl.u32 %v637, 7
    %v639 = vsub.s32 0, %v638
    %v640 = vrot.slane %v633, %v639
    %v641 = vlaneseq
    %v642 = vshrl.u32 %v641, 7
    %v643 = vsub.s32 1, %v642
    %v644 = vrot.slane %v633, %v643
    %v647 = vadd.f32 %v634, %v640
    %v648 = vadd.f32 %v635, %v644
    %vm649 = vcmp.gt.f32.partialorder %v647, 0.0
    %vm650 = vcmp.gt.f32.partialorder %v648, 0.0
    %v651 = vmul.f32 %v647, 0.2
    %v652 = vmul.f32 %v648, 0.2
    %v653 = vsel %vm649, %v647, %v651
    %v654 = vsel %vm650, %v648, %v652
    %v655 = vld [vmem:[#allocation12] sm:$0xff]
    %v656 = vld [vmem:[#allocation12 + $0x8] sm:$0xff]
    %v657 = vld [vmem:[#allocation12 + $0x10] sm:$0xff]
    %v658 = vld [vmem:[#allocation12 + $0x18] sm:$0xff]
    %v659 = vld [vmem:[#allocation12 + $0x20] sm:$0xff]
    %v660 = vld [vmem:[#allocation12 + $0x28] sm:$0xff]
    %v661 = vld [vmem:[#allocation12 + $0x30] sm:$0xff]
    %v662 = vld [vmem:[#allocation12 + $0x38] sm:$0xff]
    %v663 = vld [vmem:[#allocation12 + $0x40] sm:$0xff]
    %v664 = vld [vmem:[#allocation12 + $0x48] sm:$0xff]
    %v665 = vld [vmem:[#allocation12 + $0x50] sm:$0xff]
    %v666 = vld [vmem:[#allocation12 + $0x58] sm:$0xff]
    %v667 = vld [vmem:[#allocation12 + $0x60] sm:$0xff]
    %v668 = vld [vmem:[#allocation12 + $0x68] sm:$0xff]
    %v669 = vld [vmem:[#allocation12 + $0x70] sm:$0xff]
    %v670 = vld [vmem:[#allocation12 + $0x78] sm:$0xff]
    %v671 = vld [vmem:[#allocation12 + $0x80] sm:$0xff]
    %v672 = vld [vmem:[#allocation12 + $0x88] sm:$0xff]
    %v673 = vld [vmem:[#allocation12 + $0x90] sm:$0xff]
    %v674 = vld [vmem:[#allocation12 + $0x98] sm:$0xff]
    %v675 = vld [vmem:[#allocation12 + $0xa0] sm:$0xff]
    %v676 = vld [vmem:[#allocation12 + $0xa8] sm:$0xff]
    %v677 = vld [vmem:[#allocation12 + $0xb0] sm:$0xff]
    %v678 = vld [vmem:[#allocation12 + $0xb8] sm:$0xff]
    %v679 = vld [vmem:[#allocation12 + $0xc0] sm:$0xff]
    %v680 = vld [vmem:[#allocation12 + $0xc8] sm:$0xff]
    %v681 = vld [vmem:[#allocation12 + $0xd0] sm:$0xff]
    %v682 = vld [vmem:[#allocation12 + $0xd8] sm:$0xff]
    %v683 = vld [vmem:[#allocation12 + $0xe0] sm:$0xff]
    %v684 = vld [vmem:[#allocation12 + $0xe8] sm:$0xff]
    %v685 = vld [vmem:[#allocation12 + $0xf0] sm:$0xff]
    %v686 = vld [vmem:[#allocation12 + $0xf8] sm:$0xff]
    %v687 = vld [vmem:[#allocation12 + $0x100] sm:$0xff]
    %v688 = vld [vmem:[#allocation12 + $0x108] sm:$0xff]
    %v689 = vld [vmem:[#allocation12 + $0x110] sm:$0xff]
    %v690 = vld [vmem:[#allocation12 + $0x118] sm:$0xff]
    %v691 = vld [vmem:[#allocation12 + $0x120] sm:$0xff]
    %v692 = vld [vmem:[#allocation12 + $0x128] sm:$0xff]
    %v693 = vld [vmem:[#allocation12 + $0x130] sm:$0xff]
    %v694 = vld [vmem:[#allocation12 + $0x138] sm:$0xff]
    %v695 = vld [vmem:[#allocation12 + $0x140] sm:$0xff]
    %v696 = vld [vmem:[#allocation12 + $0x148] sm:$0xff]
    %v697 = vld [vmem:[#allocation12 + $0x150] sm:$0xff]
    %v698 = vld [vmem:[#allocation12 + $0x158] sm:$0xff]
    %v699 = vld [vmem:[#allocation12 + $0x160] sm:$0xff]
    %v700 = vld [vmem:[#allocation12 + $0x168] sm:$0xff]
    %v701 = vld [vmem:[#allocation12 + $0x170] sm:$0xff]
    %v702 = vld [vmem:[#allocation12 + $0x178] sm:$0xff]
    %v703 = vld [vmem:[#allocation12 + $0x180] sm:$0xff]
    %v704 = vld [vmem:[#allocation12 + $0x188] sm:$0xff]
    %v705 = vld [vmem:[#allocation12 + $0x190] sm:$0xff]
    %v706 = vld [vmem:[#allocation12 + $0x198] sm:$0xff]
    %v707 = vld [vmem:[#allocation12 + $0x1a0] sm:$0xff]
    %v708 = vld [vmem:[#allocation12 + $0x1a8] sm:$0xff]
    %v709 = vld [vmem:[#allocation12 + $0x1b0] sm:$0xff]
    %v710 = vld [vmem:[#allocation12 + $0x1b8] sm:$0xff]
    %v711 = vld [vmem:[#allocation12 + $0x1c0] sm:$0xff]
    %v712 = vld [vmem:[#allocation12 + $0x1c8] sm:$0xff]
    %v713 = vld [vmem:[#allocation12 + $0x1d0] sm:$0xff]
    %v714 = vld [vmem:[#allocation12 + $0x1d8] sm:$0xff]
    %v715 = vld [vmem:[#allocation12 + $0x1e0] sm:$0xff]
    %v716 = vld [vmem:[#allocation12 + $0x1e8] sm:$0xff]
    %v717 = vld [vmem:[#allocation12 + $0x1f0] sm:$0xff]
    %v718 = vld [vmem:[#allocation12 + $0x1f8] sm:$0xff]
    %s719 = scalar_lea.vmem [#allocation15], 20
    %v720 = vld [vmem:[%s719] ss:$4 sm:$0xf]
    %v721 = vpack.c.bf16 %v653, %v653
    %v722 = vpack.c.bf16 %v654, %v654
    %v724 = vlaneseq
    %v725 = vshrl.u32 %v724, 7
    %v726 = vsub.s32 0, %v725
    %v727 = vrot.slane %v720, %v726
    %v728 = vlaneseq
    %v729 = vshrl.u32 %v728, 7
    %v730 = vsub.s32 1, %v729
    %v731 = vrot.slane %v720, %v730
    %v732 = vlaneseq
    %v733 = vshrl.u32 %v732, 7
    %v734 = vsub.s32 2, %v733
    %v735 = vrot.slane %v720, %v734
    %v736 = vlaneseq
    %v737 = vshrl.u32 %v736, 7
    %v738 = vsub.s32 3, %v737
    %v739 = vrot.slane %v720, %v738
    %v808 = vunpack.c.l.b16 %v655
    %v809 = vunpack.c.h.b16 %v655
    %v810 = vunpack.c.l.b16 %v656
    %v811 = vunpack.c.h.b16 %v656
    %v812 = vunpack.c.l.b16 %v657
    %v813 = vunpack.c.h.b16 %v657
    %v814 = vunpack.c.l.b16 %v658
    %v815 = vunpack.c.h.b16 %v658
    %v816 = vunpack.c.l.b16 %v659
    %v817 = vunpack.c.h.b16 %v659
    %v818 = vunpack.c.l.b16 %v660
    %v819 = vunpack.c.h.b16 %v660
    %v820 = vunpack.c.l.b16 %v661
    %v821 = vunpack.c.h.b16 %v661
    %v822 = vunpack.c.l.b16 %v662
    %v823 = vunpack.c.h.b16 %v662
    %v824 = vunpack.c.l.b16 %v663
    %v825 = vunpack.c.h.b16 %v663
    %v826 = vunpack.c.l.b16 %v664
    %v827 = vunpack.c.h.b16 %v664
    %v828 = vunpack.c.l.b16 %v665
    %v829 = vunpack.c.h.b16 %v665
    %v830 = vunpack.c.l.b16 %v666
    %v831 = vunpack.c.h.b16 %v666
    %v832 = vunpack.c.l.b16 %v667
    %v833 = vunpack.c.h.b16 %v667
    %v834 = vunpack.c.l.b16 %v668
    %v835 = vunpack.c.h.b16 %v668
    %v836 = vunpack.c.l.b16 %v669
    %v837 = vunpack.c.h.b16 %v669
    %v838 = vunpack.c.l.b16 %v670
    %v839 = vunpack.c.h.b16 %v670
    %v840 = vunpack.c.l.b16 %v671
    %v841 = vunpack.c.h.b16 %v671
    %v842 = vunpack.c.l.b16 %v672
    %v843 = vunpack.c.h.b16 %v672
    %v844 = vunpack.c.l.b16 %v673
    %v845 = vunpack.c.h.b16 %v673
    %v846 = vunpack.c.l.b16 %v674
    %v847 = vunpack.c.h.b16 %v674
    %v848 = vunpack.c.l.b16 %v675
    %v849 = vunpack.c.h.b16 %v675
    %v850 = vunpack.c.l.b16 %v676
    %v851 = vunpack.c.h.b16 %v676
    %v852 = vunpack.c.l.b16 %v677
    %v853 = vunpack.c.h.b16 %v677
    %v854 = vunpack.c.l.b16 %v678
    %v855 = vunpack.c.h.b16 %v678
    %v856 = vunpack.c.l.b16 %v679
    %v857 = vunpack.c.h.b16 %v679
    %v858 = vunpack.c.l.b16 %v680
    %v859 = vunpack.c.h.b16 %v680
    %v860 = vunpack.c.l.b16 %v681
    %v861 = vunpack.c.h.b16 %v681
    %v862 = vunpack.c.l.b16 %v682
    %v863 = vunpack.c.h.b16 %v682
    %v864 = vunpack.c.l.b16 %v683
    %v865 = vunpack.c.h.b16 %v683
    %v866 = vunpack.c.l.b16 %v684
    %v867 = vunpack.c.h.b16 %v684
    %v868 = vunpack.c.l.b16 %v685
    %v869 = vunpack.c.h.b16 %v685
    %v870 = vunpack.c.l.b16 %v686
    %v871 = vunpack.c.h.b16 %v686
    %v872 = vunpack.c.l.b16 %v687
    %v873 = vunpack.c.h.b16 %v687
    %v874 = vunpack.c.l.b16 %v688
    %v875 = vunpack.c.h.b16 %v688
    %v876 = vunpack.c.l.b16 %v689
    %v877 = vunpack.c.h.b16 %v689
    %v878 = vunpack.c.l.b16 %v690
    %v879 = vunpack.c.h.b16 %v690
    %v880 = vunpack.c.l.b16 %v691
    %v881 = vunpack.c.h.b16 %v691
    %v882 = vunpack.c.l.b16 %v692
    %v883 = vunpack.c.h.b16 %v692
    %v884 = vunpack.c.l.b16 %v693
    %v885 = vunpack.c.h.b16 %v693
    %v886 = vunpack.c.l.b16 %v694
    %v887 = vunpack.c.h.b16 %v694
    %v888 = vunpack.c.l.b16 %v695
    %v889 = vunpack.c.h.b16 %v695
    %v890 = vunpack.c.l.b16 %v696
    %v891 = vunpack.c.h.b16 %v696
    %v892 = vunpack.c.l.b16 %v697
    %v893 = vunpack.c.h.b16 %v697
    %v894 = vunpack.c.l.b16 %v698
    %v895 = vunpack.c.h.b16 %v698
    %v896 = vunpack.c.l.b16 %v699
    %v897 = vunpack.c.h.b16 %v699
    %v898 = vunpack.c.l.b16 %v700
    %v899 = vunpack.c.h.b16 %v700
    %v900 = vunpack.c.l.b16 %v701
    %v901 = vunpack.c.h.b16 %v701
    %v902 = vunpack.c.l.b16 %v702
    %v903 = vunpack.c.h.b16 %v702
    %v904 = vunpack.c.l.b16 %v703
    %v905 = vunpack.c.h.b16 %v703
    %v906 = vunpack.c.l.b16 %v704
    %v907 = vunpack.c.h.b16 %v704
    %v908 = vunpack.c.l.b16 %v705
    %v909 = vunpack.c.h.b16 %v705
    %v910 = vunpack.c.l.b16 %v706
    %v911 = vunpack.c.h.b16 %v706
    %v912 = vunpack.c.l.b16 %v707
    %v913 = vunpack.c.h.b16 %v707
    %v914 = vunpack.c.l.b16 %v708
    %v915 = vunpack.c.h.b16 %v708
    %v916 = vunpack.c.l.b16 %v709
    %v917 = vunpack.c.h.b16 %v709
    %v918 = vunpack.c.l.b16 %v710
    %v919 = vunpack.c.h.b16 %v710
    %v920 = vunpack.c.l.b16 %v711
    %v921 = vunpack.c.h.b16 %v711
    %v922 = vunpack.c.l.b16 %v712
    %v923 = vunpack.c.h.b16 %v712
    %v924 = vunpack.c.l.b16 %v713
    %v925 = vunpack.c.h.b16 %v713
    %v926 = vunpack.c.l.b16 %v714
    %v927 = vunpack.c.h.b16 %v714
    %v928 = vunpack.c.l.b16 %v715
    %v929 = vunpack.c.h.b16 %v715
    %v930 = vunpack.c.l.b16 %v716
    %v931 = vunpack.c.h.b16 %v716
    %v932 = vunpack.c.l.b16 %v717
    %v933 = vunpack.c.h.b16 %v717
    %v934 = vunpack.c.l.b16 %v718
    %v935 = vunpack.c.h.b16 %v718
    %v936 = vpack.c.b16 %v812, %v808
    %v937 = vpack.c.b16 %v813, %v809
    %v938 = vpack.c.b16 %v814, %v810
    %v939 = vpack.c.b16 %v815, %v811
    %v940 = vpack.c.b16 %v820, %v816
    %v941 = vpack.c.b16 %v821, %v817
    %v942 = vpack.c.b16 %v822, %v818
    %v943 = vpack.c.b16 %v823, %v819
    %v944 = vpack.c.b16 %v828, %v824
    %v945 = vpack.c.b16 %v829, %v825
    %v946 = vpack.c.b16 %v830, %v826
    %v947 = vpack.c.b16 %v831, %v827
    %v948 = vpack.c.b16 %v836, %v832
    %v949 = vpack.c.b16 %v837, %v833
    %v950 = vpack.c.b16 %v838, %v834
    %v951 = vpack.c.b16 %v839, %v835
    %v952 = vpack.c.b16 %v844, %v840
    %v953 = vpack.c.b16 %v845, %v841
    %v954 = vpack.c.b16 %v846, %v842
    %v955 = vpack.c.b16 %v847, %v843
    %v956 = vpack.c.b16 %v852, %v848
    %v957 = vpack.c.b16 %v853, %v849
    %v958 = vpack.c.b16 %v854, %v850
    %v959 = vpack.c.b16 %v855, %v851
    %v960 = vpack.c.b16 %v860, %v856
    %v961 = vpack.c.b16 %v861, %v857
    %v962 = vpack.c.b16 %v862, %v858
    %v963 = vpack.c.b16 %v863, %v859
    %v964 = vpack.c.b16 %v868, %v864
    %v965 = vpack.c.b16 %v869, %v865
    %v966 = vpack.c.b16 %v870, %v866
    %v967 = vpack.c.b16 %v871, %v867
    %v968 = vpack.c.b16 %v876, %v872
    %v969 = vpack.c.b16 %v877, %v873
    %v970 = vpack.c.b16 %v878, %v874
    %v971 = vpack.c.b16 %v879, %v875
    %v972 = vpack.c.b16 %v884, %v880
    %v973 = vpack.c.b16 %v885, %v881
    %v974 = vpack.c.b16 %v886, %v882
    %v975 = vpack.c.b16 %v887, %v883
    %v976 = vpack.c.b16 %v892, %v888
    %v977 = vpack.c.b16 %v893, %v889
    %v978 = vpack.c.b16 %v894, %v890
    %v979 = vpack.c.b16 %v895, %v891
    %v980 = vpack.c.b16 %v900, %v896
    %v981 = vpack.c.b16 %v901, %v897
    %v982 = vpack.c.b16 %v902, %v898
    %v983 = vpack.c.b16 %v903, %v899
    %v984 = vpack.c.b16 %v908, %v904
    %v985 = vpack.c.b16 %v909, %v905
    %v986 = vpack.c.b16 %v910, %v906
    %v987 = vpack.c.b16 %v911, %v907
    %v988 = vpack.c.b16 %v916, %v912
    %v989 = vpack.c.b16 %v917, %v913
    %v990 = vpack.c.b16 %v918, %v914
    %v991 = vpack.c.b16 %v919, %v915
    %v992 = vpack.c.b16 %v924, %v920
    %v993 = vpack.c.b16 %v925, %v921
    %v994 = vpack.c.b16 %v926, %v922
    %v995 = vpack.c.b16 %v927, %v923
    %v996 = vpack.c.b16 %v932, %v928
    %v997 = vpack.c.b16 %v933, %v929
    %v998 = vpack.c.b16 %v934, %v930
    %v999 = vpack.c.b16 %v935, %v931
    %1064 = vmatprep.subr.bf16.mxu0 %v965
    %1065 = vmatpush1.bf16.msra.mxu0 %v964
    %1066 = vmatprep.subr.bf16.mxu0 %v961
    %1067 = vmatpush1.bf16.msra.mxu0 %v960
    %1068 = vmatprep.subr.bf16.mxu0 %v957
    %1069 = vmatpush1.bf16.msra.mxu0 %v956
    %1070 = vmatprep.subr.bf16.mxu0 %v953
    %1071 = vmatpush1.bf16.msra.mxu0 %v952
    %1072 = vmatprep.subr.bf16.mxu0 %v949
    %1073 = vmatpush1.bf16.msra.mxu0 %v948
    %1074 = vmatprep.subr.bf16.mxu0 %v945
    %1075 = vmatpush1.bf16.msra.mxu0 %v944
    %1076 = vmatprep.subr.bf16.mxu0 %v941
    %1077 = vmatpush1.bf16.msra.mxu0 %v940
    %1078 = vmatprep.subr.bf16.mxu0 %v937
    %1079 = vmatpush1.bf16.msra.mxu0 %v936
    %1080 = vmatprep.subr.bf16.mxu0 %v997
    %1081 = vmatpush2.bf16.msra.mxu0 %v996
    %1082 = vmatprep.subr.bf16.mxu0 %v993
    %1083 = vmatpush2.bf16.msra.mxu0 %v992
    %1084 = vmatprep.subr.bf16.mxu0 %v989
    %1085 = vmatpush2.bf16.msra.mxu0 %v988
    %1086 = vmatprep.subr.bf16.mxu0 %v985
    %1087 = vmatpush2.bf16.msra.mxu0 %v984
    %1088 = vmatprep.subr.bf16.mxu0 %v981
    %1089 = vmatpush2.bf16.msra.mxu0 %v980
    %1090 = vmatprep.subr.bf16.mxu0 %v977
    %1091 = vmatpush2.bf16.msra.mxu0 %v976
    %1092 = vmatprep.subr.bf16.mxu0 %v973
    %1093 = vmatpush2.bf16.msra.mxu0 %v972
    %1094 = vmatprep.subr.bf16.mxu0 %v969
    %1095 = vmatpush2.bf16.msra.mxu0 %v968
    %1096 = vmatprep.mubr.bf16.mxu0 %v722
    %1097 = vmatmul.mubr.bf16.gmra.mxu0 %v721
    %v1098 = vpop.f32.mrf.mxu0
    %v1099 = vadd.f32 %v727, %v1098
    %v1100 = vpop.f32.mrf.mxu0
    %v1101 = vadd.f32 %v731, %v1100
    %v1102 = vpop.f32.mrf.mxu0
    %v1103 = vpop.f32.mrf.mxu0
    %1104 = vdwg.mxu0
    %1105 = vmatprep.subr.bf16.mxu0 %v967
    %1106 = vmatpush1.bf16.msra.mxu0 %v966
    %1107 = vmatprep.subr.bf16.mxu0 %v963
    %1108 = vmatpush1.bf16.msra.mxu0 %v962
    %1109 = vmatprep.subr.bf16.mxu0 %v959
    %1110 = vmatpush1.bf16.msra.mxu0 %v958
    %1111 = vmatprep.subr.bf16.mxu0 %v955
    %1112 = vmatpush1.bf16.msra.mxu0 %v954
    %1113 = vmatprep.subr.bf16.mxu0 %v951
    %1114 = vmatpush1.bf16.msra.mxu0 %v950
    %1115 = vmatprep.subr.bf16.mxu0 %v947
    %1116 = vmatpush1.bf16.msra.mxu0 %v946
    %1117 = vmatprep.subr.bf16.mxu0 %v943
    %1118 = vmatpush1.bf16.msra.mxu0 %v942
    %1119 = vmatprep.subr.bf16.mxu0 %v939
    %1120 = vmatpush1.bf16.msra.mxu0 %v938
    %1121 = vmatprep.subr.bf16.mxu0 %v999
    %1122 = vmatpush2.bf16.msra.mxu0 %v998
    %1123 = vmatprep.subr.bf16.mxu0 %v995
    %1124 = vmatpush2.bf16.msra.mxu0 %v994
    %1125 = vmatprep.subr.bf16.mxu0 %v991
    %1126 = vmatpush2.bf16.msra.mxu0 %v990
    %1127 = vmatprep.subr.bf16.mxu0 %v987
    %1128 = vmatpush2.bf16.msra.mxu0 %v986
    %1129 = vmatprep.subr.bf16.mxu0 %v983
    %1130 = vmatpush2.bf16.msra.mxu0 %v982
    %1131 = vmatprep.subr.bf16.mxu0 %v979
    %1132 = vmatpush2.bf16.msra.mxu0 %v978
    %1133 = vmatprep.subr.bf16.mxu0 %v975
    %1134 = vmatpush2.bf16.msra.mxu0 %v974
    %1135 = vmatprep.subr.bf16.mxu0 %v971
    %1136 = vmatpush2.bf16.msra.mxu0 %v970
    %1137 = vmatprep.mubr.bf16.mxu0 %v722
    %1138 = vmatmul.mubr.bf16.gmra.mxu0 %v721
    %v1139 = vpop.f32.mrf.mxu0
    %v1140 = vadd.f32 %v735, %v1139
    %v1141 = vpop.f32.mrf.mxu0
    %v1142 = vadd.f32 %v739, %v1141
    %v1143 = vpop.f32.mrf.mxu0
    %v1144 = vpop.f32.mrf.mxu0
    %1145 = vdwg.mxu0
    %s1146 = scalar_lea.vmem [#allocation15], 21
    %v1147 = vld [vmem:[%s1146] ss:$4 sm:$0xf]
    %s1148 = scalar_lea.vmem [#allocation15], 22
    %v1149 = vld [vmem:[%s1148] ss:$4 sm:$0xf]
    %v1150 = vrot.slane %v1099, 4
    %v1151 = vadd.f32 %v1099, %v1150
    %v1152 = vrot.slane %v1151, 2
    %v1153 = vadd.f32 %v1151, %v1152
    %v1154 = vrot.slane %v1153, 1
    %v1155 = vadd.f32 %v1153, %v1154
    %v1156 = vrot.slane %v1101, 4
    %v1157 = vadd.f32 %v1101, %v1156
    %v1158 = vrot.slane %v1157, 2
    %v1159 = vadd.f32 %v1157, %v1158
    %v1160 = vrot.slane %v1159, 1
    %v1161 = vadd.f32 %v1159, %v1160
    %v1162 = vrot.slane %v1140, 4
    %v1163 = vadd.f32 %v1140, %v1162
    %v1164 = vrot.slane %v1163, 2
    %v1165 = vadd.f32 %v1163, %v1164
    %v1166 = vrot.slane %v1165, 1
    %v1167 = vadd.f32 %v1165, %v1166
    %v1168 = vrot.slane %v1142, 4
    %v1169 = vadd.f32 %v1142, %v1168
    %v1170 = vrot.slane %v1169, 2
    %v1171 = vadd.f32 %v1169, %v1170
    %v1172 = vrot.slane %v1171, 1
    %v1173 = vadd.f32 %v1171, %v1172
    %v1174 = vmul.f32 %v1155, %v241
    %v1175 = vmul.f32 %v1161, %v241
    %v1176 = vmul.f32 %v1167, %v241
    %v1177 = vmul.f32 %v1173, %v241
    %v1178 = vmul.f32 %v1099, %v1099
    %v1179 = vmul.f32 %v1101, %v1101
    %v1180 = vmul.f32 %v1140, %v1140
    %v1181 = vmul.f32 %v1142, %v1142
    %v1182 = vrot.slane %v1178, 4
    %v1183 = vadd.f32 %v1178, %v1182
    %v1184 = vrot.slane %v1183, 2
    %v1185 = vadd.f32 %v1183, %v1184
    %v1186 = vrot.slane %v1185, 1
    %v1187 = vadd.f32 %v1185, %v1186
    %v1188 = vrot.slane %v1179, 4
    %v1189 = vadd.f32 %v1179, %v1188
    %v1190 = vrot.slane %v1189, 2
    %v1191 = vadd.f32 %v1189, %v1190
    %v1192 = vrot.slane %v1191, 1
    %v1193 = vadd.f32 %v1191, %v1192
    %v1194 = vrot.slane %v1180, 4
    %v1195 = vadd.f32 %v1180, %v1194
    %v1196 = vrot.slane %v1195, 2
    %v1197 = vadd.f32 %v1195, %v1196
    %v1198 = vrot.slane %v1197, 1
    %v1199 = vadd.f32 %v1197, %v1198
    %v1200 = vrot.slane %v1181, 4
    %v1201 = vadd.f32 %v1181, %v1200
    %v1202 = vrot.slane %v1201, 2
    %v1203 = vadd.f32 %v1201, %v1202
    %v1204 = vrot.slane %v1203, 1
    %v1205 = vadd.f32 %v1203, %v1204
    %v1206 = vmul.f32 %v1187, %v241
    %v1207 = vmul.f32 %v1193, %v241
    %v1208 = vmul.f32 %v1199, %v241
    %v1209 = vmul.f32 %v1205, %v241
    %v1210 = vmul.f32 %v1174, %v1174
    %v1211 = vmul.f32 %v1175, %v1175
    %v1212 = vmul.f32 %v1176, %v1176
    %v1213 = vmul.f32 %v1177, %v1177
    %v1214 = vsub.f32 %v1206, %v1210
    %v1215 = vsub.f32 %v1207, %v1211
    %v1216 = vsub.f32 %v1208, %v1212
    %v1217 = vsub.f32 %v1209, %v1213
    %v1218 = vadd.f32 %v1214, 0.8
    %v1219 = vadd.f32 %v1215, 0.8
    %v1220 = vadd.f32 %v1216, 0.8
    %v1221 = vadd.f32 %v1217, 0.8
    %v1222 = vrsqrt.pop %v1218
    %v1223 = vrsqrt.pop %v1219
    %v1224 = vrsqrt.pop %v1220
    %v1225 = vrsqrt.pop %v1221
    %v1230 = vcombine.low %v1222, %v1223
    %v1231 = vcombine.low %v1224, %v1225
    %v1233 = vunpack.c.l.s4 1966171168
    %v1234 = vunpack.c.0.s8 %v1233
    %v1235 = vlaneseq
    %v1236 = vshrl.u32 %v1235, 7
    %v1237 = vsub.s32 %v1234, %v1236
    %v1238 = vrot.slane %v1230, %v1237
    %v1240 = vunpack.c.l.s4 1966171168
    %v1241 = vunpack.c.0.s8 %v1240
    %v1242 = vlaneseq
    %v1243 = vshrl.u32 %v1242, 7
    %v1244 = vsub.s32 %v1241, %v1243
    %v1245 = vrot.slane %v1231, %v1244
    %v1246 = vcombine.low %v1238, %v1245
    %v1248 = vunpack.c.l.s4 1966171168
    %v1249 = vunpack.c.0.s8 %v1248
    %v1250 = vlaneseq
    %v1251 = vshrl.u32 %v1250, 7
    %v1252 = vsub.s32 %v1249, %v1251
    %v1253 = vrot.slane %v1246, %v1252
    %v1255 = vmul.f32 %v1147, %v1253
    %v1257 = vlaneseq
    %v1258 = vshrl.u32 %v1257, 7
    %v1259 = vsub.s32 0, %v1258
    %v1260 = vrot.slane %v1255, %v1259
    %v1261 = vlaneseq
    %v1262 = vshrl.u32 %v1261, 7
    %v1263 = vsub.s32 1, %v1262
    %v1264 = vrot.slane %v1255, %v1263
    %v1265 = vlaneseq
    %v1266 = vshrl.u32 %v1265, 7
    %v1267 = vsub.s32 2, %v1266
    %v1268 = vrot.slane %v1255, %v1267
    %v1269 = vlaneseq
    %v1270 = vshrl.u32 %v1269, 7
    %v1271 = vsub.s32 3, %v1270
    %v1272 = vrot.slane %v1255, %v1271
    %v1277 = vmul.f32 %v1174, %v1260
    %v1278 = vmul.f32 %v1175, %v1264
    %v1279 = vmul.f32 %v1176, %v1268
    %v1280 = vmul.f32 %v1177, %v1272
    %v1285 = vcombine.low %v1277, %v1278
    %v1286 = vcombine.low %v1279, %v1280
    %v1288 = vunpack.c.l.s4 1966171168
    %v1289 = vunpack.c.0.s8 %v1288
    %v1290 = vlaneseq
    %v1291 = vshrl.u32 %v1290, 7
    %v1292 = vsub.s32 %v1289, %v1291
    %v1293 = vrot.slane %v1285, %v1292
    %v1295 = vunpack.c.l.s4 1966171168
    %v1296 = vunpack.c.0.s8 %v1295
    %v1297 = vlaneseq
    %v1298 = vshrl.u32 %v1297, 7
    %v1299 = vsub.s32 %v1296, %v1298
    %v1300 = vrot.slane %v1286, %v1299
    %v1301 = vcombine.low %v1293, %v1300
    %v1303 = vunpack.c.l.s4 1966171168
    %v1304 = vunpack.c.0.s8 %v1303
    %v1305 = vlaneseq
    %v1306 = vshrl.u32 %v1305, 7
    %v1307 = vsub.s32 %v1304, %v1306
    %v1308 = vrot.slane %v1301, %v1307
    %v1310 = vsub.f32 %v1149, %v1308
    %v1311 = vmul.f32 %v1099, %v1260
    %v1312 = vmul.f32 %v1101, %v1264
    %v1313 = vmul.f32 %v1140, %v1268
    %v1314 = vmul.f32 %v1142, %v1272
    %v1316 = vlaneseq
    %v1317 = vshrl.u32 %v1316, 7
    %v1318 = vsub.s32 0, %v1317
    %v1319 = vrot.slane %v1310, %v1318
    %v1320 = vlaneseq
    %v1321 = vshrl.u32 %v1320, 7
    %v1322 = vsub.s32 1, %v1321
    %v1323 = vrot.slane %v1310, %v1322
    %v1324 = vlaneseq
    %v1325 = vshrl.u32 %v1324, 7
    %v1326 = vsub.s32 2, %v1325
    %v1327 = vrot.slane %v1310, %v1326
    %v1328 = vlaneseq
    %v1329 = vshrl.u32 %v1328, 7
    %v1330 = vsub.s32 3, %v1329
    %v1331 = vrot.slane %v1310, %v1330
    %v1336 = vadd.f32 %v1311, %v1319
    %v1337 = vadd.f32 %v1312, %v1323
    %v1338 = vadd.f32 %v1313, %v1327
    %v1339 = vadd.f32 %v1314, %v1331
    %vm1340 = vcmp.gt.f32.partialorder %v1336, 0.0
    %vm1341 = vcmp.gt.f32.partialorder %v1337, 0.0
    %vm1342 = vcmp.gt.f32.partialorder %v1338, 0.0
    %vm1343 = vcmp.gt.f32.partialorder %v1339, 0.0
    %v1344 = vmul.f32 %v1336, 0.2
    %v1345 = vmul.f32 %v1337, 0.2
    %v1346 = vmul.f32 %v1338, 0.2
    %v1347 = vmul.f32 %v1339, 0.2
    %v1348 = vsel %vm1340, %v1336, %v1344
    %v1349 = vsel %vm1341, %v1337, %v1345
    %v1350 = vsel %vm1342, %v1338, %v1346
    %v1351 = vsel %vm1343, %v1339, %v1347
    %v1352 = vld [vmem:[#allocation13] sm:$0xff]
    %v1353 = vld [vmem:[#allocation13 + $0x8] sm:$0xff]
    %v1354 = vld [vmem:[#allocation13 + $0x10] sm:$0xff]
    %v1355 = vld [vmem:[#allocation13 + $0x18] sm:$0xff]
    %v1356 = vld [vmem:[#allocation13 + $0x20] sm:$0xff]
    %v1357 = vld [vmem:[#allocation13 + $0x28] sm:$0xff]
    %v1358 = vld [vmem:[#allocation13 + $0x30] sm:$0xff]
    %v1359 = vld [vmem:[#allocation13 + $0x38] sm:$0xff]
    %v1360 = vld [vmem:[#allocation13 + $0x40] sm:$0xff]
    %v1361 = vld [vmem:[#allocation13 + $0x48] sm:$0xff]
    %v1362 = vld [vmem:[#allocation13 + $0x50] sm:$0xff]
    %v1363 = vld [vmem:[#allocation13 + $0x58] sm:$0xff]
    %v1364 = vld [vmem:[#allocation13 + $0x60] sm:$0xff]
    %v1365 = vld [vmem:[#allocation13 + $0x68] sm:$0xff]
    %v1366 = vld [vmem:[#allocation13 + $0x70] sm:$0xff]
    %v1367 = vld [vmem:[#allocation13 + $0x78] sm:$0xff]
    %v1368 = vld [vmem:[#allocation13 + $0x80] sm:$0xff]
    %v1369 = vld [vmem:[#allocation13 + $0x88] sm:$0xff]
    %v1370 = vld [vmem:[#allocation13 + $0x90] sm:$0xff]
    %v1371 = vld [vmem:[#allocation13 + $0x98] sm:$0xff]
    %v1372 = vld [vmem:[#allocation13 + $0xa0] sm:$0xff]
    %v1373 = vld [vmem:[#allocation13 + $0xa8] sm:$0xff]
    %v1374 = vld [vmem:[#allocation13 + $0xb0] sm:$0xff]
    %v1375 = vld [vmem:[#allocation13 + $0xb8] sm:$0xff]
    %v1376 = vld [vmem:[#allocation13 + $0xc0] sm:$0xff]
    %v1377 = vld [vmem:[#allocation13 + $0xc8] sm:$0xff]
    %v1378 = vld [vmem:[#allocation13 + $0xd0] sm:$0xff]
    %v1379 = vld [vmem:[#allocation13 + $0xd8] sm:$0xff]
    %v1380 = vld [vmem:[#allocation13 + $0xe0] sm:$0xff]
    %v1381 = vld [vmem:[#allocation13 + $0xe8] sm:$0xff]
    %v1382 = vld [vmem:[#allocation13 + $0xf0] sm:$0xff]
    %v1383 = vld [vmem:[#allocation13 + $0xf8] sm:$0xff]
    %v1384 = vld [vmem:[#allocation13 + $0x100] sm:$0xff]
    %v1385 = vld [vmem:[#allocation13 + $0x108] sm:$0xff]
    %v1386 = vld [vmem:[#allocation13 + $0x110] sm:$0xff]
    %v1387 = vld [vmem:[#allocation13 + $0x118] sm:$0xff]
    %v1388 = vld [vmem:[#allocation13 + $0x120] sm:$0xff]
    %v1389 = vld [vmem:[#allocation13 + $0x128] sm:$0xff]
    %v1390 = vld [vmem:[#allocation13 + $0x130] sm:$0xff]
    %v1391 = vld [vmem:[#allocation13 + $0x138] sm:$0xff]
    %v1392 = vld [vmem:[#allocation13 + $0x140] sm:$0xff]
    %v1393 = vld [vmem:[#allocation13 + $0x148] sm:$0xff]
    %v1394 = vld [vmem:[#allocation13 + $0x150] sm:$0xff]
    %v1395 = vld [vmem:[#allocation13 + $0x158] sm:$0xff]
    %v1396 = vld [vmem:[#allocation13 + $0x160] sm:$0xff]
    %v1397 = vld [vmem:[#allocation13 + $0x168] sm:$0xff]
    %v1398 = vld [vmem:[#allocation13 + $0x170] sm:$0xff]
    %v1399 = vld [vmem:[#allocation13 + $0x178] sm:$0xff]
    %v1400 = vld [vmem:[#allocation13 + $0x180] sm:$0xff]
    %v1401 = vld [vmem:[#allocation13 + $0x188] sm:$0xff]
    %v1402 = vld [vmem:[#allocation13 + $0x190] sm:$0xff]
    %v1403 = vld [vmem:[#allocation13 + $0x198] sm:$0xff]
    %v1404 = vld [vmem:[#allocation13 + $0x1a0] sm:$0xff]
    %v1405 = vld [vmem:[#allocation13 + $0x1a8] sm:$0xff]
    %v1406 = vld [vmem:[#allocation13 + $0x1b0] sm:$0xff]
    %v1407 = vld [vmem:[#allocation13 + $0x1b8] sm:$0xff]
    %v1408 = vld [vmem:[#allocation13 + $0x1c0] sm:$0xff]
    %v1409 = vld [vmem:[#allocation13 + $0x1c8] sm:$0xff]
    %v1410 = vld [vmem:[#allocation13 + $0x1d0] sm:$0xff]
    %v1411 = vld [vmem:[#allocation13 + $0x1d8] sm:$0xff]
    %v1412 = vld [vmem:[#allocation13 + $0x1e0] sm:$0xff]
    %v1413 = vld [vmem:[#allocation13 + $0x1e8] sm:$0xff]
    %v1414 = vld [vmem:[#allocation13 + $0x1f0] sm:$0xff]
    %v1415 = vld [vmem:[#allocation13 + $0x1f8] sm:$0xff]
    %v1416 = vld [vmem:[#allocation13 + $0x200] sm:$0xff]
    %v1417 = vld [vmem:[#allocation13 + $0x208] sm:$0xff]
    %v1418 = vld [vmem:[#allocation13 + $0x210] sm:$0xff]
    %v1419 = vld [vmem:[#allocation13 + $0x218] sm:$0xff]
    %v1420 = vld [vmem:[#allocation13 + $0x220] sm:$0xff]
    %v1421 = vld [vmem:[#allocation13 + $0x228] sm:$0xff]
    %v1422 = vld [vmem:[#allocation13 + $0x230] sm:$0xff]
    %v1423 = vld [vmem:[#allocation13 + $0x238] sm:$0xff]
    %v1424 = vld [vmem:[#allocation13 + $0x240] sm:$0xff]
    %v1425 = vld [vmem:[#allocation13 + $0x248] sm:$0xff]
    %v1426 = vld [vmem:[#allocation13 + $0x250] sm:$0xff]
    %v1427 = vld [vmem:[#allocation13 + $0x258] sm:$0xff]
    %v1428 = vld [vmem:[#allocation13 + $0x260] sm:$0xff]
    %v1429 = vld [vmem:[#allocation13 + $0x268] sm:$0xff]
    %v1430 = vld [vmem:[#allocation13 + $0x270] sm:$0xff]
    %v1431 = vld [vmem:[#allocation13 + $0x278] sm:$0xff]
    %v1432 = vld [vmem:[#allocation13 + $0x280] sm:$0xff]
    %v1433 = vld [vmem:[#allocation13 + $0x288] sm:$0xff]
    %v1434 = vld [vmem:[#allocation13 + $0x290] sm:$0xff]
    %v1435 = vld [vmem:[#allocation13 + $0x298] sm:$0xff]
    %v1436 = vld [vmem:[#allocation13 + $0x2a0] sm:$0xff]
    %v1437 = vld [vmem:[#allocation13 + $0x2a8] sm:$0xff]
    %v1438 = vld [vmem:[#allocation13 + $0x2b0] sm:$0xff]
    %v1439 = vld [vmem:[#allocation13 + $0x2b8] sm:$0xff]
    %v1440 = vld [vmem:[#allocation13 + $0x2c0] sm:$0xff]
    %v1441 = vld [vmem:[#allocation13 + $0x2c8] sm:$0xff]
    %v1442 = vld [vmem:[#allocation13 + $0x2d0] sm:$0xff]
    %v1443 = vld [vmem:[#allocation13 + $0x2d8] sm:$0xff]
    %v1444 = vld [vmem:[#allocation13 + $0x2e0] sm:$0xff]
    %v1445 = vld [vmem:[#allocation13 + $0x2e8] sm:$0xff]
    %v1446 = vld [vmem:[#allocation13 + $0x2f0] sm:$0xff]
    %v1447 = vld [vmem:[#allocation13 + $0x2f8] sm:$0xff]
    %v1448 = vld [vmem:[#allocation13 + $0x300] sm:$0xff]
    %v1449 = vld [vmem:[#allocation13 + $0x308] sm:$0xff]
    %v1450 = vld [vmem:[#allocation13 + $0x310] sm:$0xff]
    %v1451 = vld [vmem:[#allocation13 + $0x318] sm:$0xff]
    %v1452 = vld [vmem:[#allocation13 + $0x320] sm:$0xff]
    %v1453 = vld [vmem:[#allocation13 + $0x328] sm:$0xff]
    %v1454 = vld [vmem:[#allocation13 + $0x330] sm:$0xff]
    %v1455 = vld [vmem:[#allocation13 + $0x338] sm:$0xff]
    %v1456 = vld [vmem:[#allocation13 + $0x340] sm:$0xff]
    %v1457 = vld [vmem:[#allocation13 + $0x348] sm:$0xff]
    %v1458 = vld [vmem:[#allocation13 + $0x350] sm:$0xff]
    %v1459 = vld [vmem:[#allocation13 + $0x358] sm:$0xff]
    %v1460 = vld [vmem:[#allocation13 + $0x360] sm:$0xff]
    %v1461 = vld [vmem:[#allocation13 + $0x368] sm:$0xff]
    %v1462 = vld [vmem:[#allocation13 + $0x370] sm:$0xff]
    %v1463 = vld [vmem:[#allocation13 + $0x378] sm:$0xff]
    %v1464 = vld [vmem:[#allocation13 + $0x380] sm:$0xff]
    %v1465 = vld [vmem:[#allocation13 + $0x388] sm:$0xff]
    %v1466 = vld [vmem:[#allocation13 + $0x390] sm:$0xff]
    %v1467 = vld [vmem:[#allocation13 + $0x398] sm:$0xff]
    %v1468 = vld [vmem:[#allocation13 + $0x3a0] sm:$0xff]
    %v1469 = vld [vmem:[#allocation13 + $0x3a8] sm:$0xff]
    %v1470 = vld [vmem:[#allocation13 + $0x3b0] sm:$0xff]
    %v1471 = vld [vmem:[#allocation13 + $0x3b8] sm:$0xff]
    %v1472 = vld [vmem:[#allocation13 + $0x3c0] sm:$0xff]
    %v1473 = vld [vmem:[#allocation13 + $0x3c8] sm:$0xff]
    %v1474 = vld [vmem:[#allocation13 + $0x3d0] sm:$0xff]
    %v1475 = vld [vmem:[#allocation13 + $0x3d8] sm:$0xff]
    %v1476 = vld [vmem:[#allocation13 + $0x3e0] sm:$0xff]
    %v1477 = vld [vmem:[#allocation13 + $0x3e8] sm:$0xff]
    %v1478 = vld [vmem:[#allocation13 + $0x3f0] sm:$0xff]
    %v1479 = vld [vmem:[#allocation13 + $0x3f8] sm:$0xff]
    %v1480 = vld [vmem:[#allocation13 + $0x400] sm:$0xff]
    %v1481 = vld [vmem:[#allocation13 + $0x408] sm:$0xff]
    %v1482 = vld [vmem:[#allocation13 + $0x410] sm:$0xff]
    %v1483 = vld [vmem:[#allocation13 + $0x418] sm:$0xff]
    %v1484 = vld [vmem:[#allocation13 + $0x420] sm:$0xff]
    %v1485 = vld [vmem:[#allocation13 + $0x428] sm:$0xff]
    %v1486 = vld [vmem:[#allocation13 + $0x430] sm:$0xff]
    %v1487 = vld [vmem:[#allocation13 + $0x438] sm:$0xff]
    %v1488 = vld [vmem:[#allocation13 + $0x440] sm:$0xff]
    %v1489 = vld [vmem:[#allocation13 + $0x448] sm:$0xff]
    %v1490 = vld [vmem:[#allocation13 + $0x450] sm:$0xff]
    %v1491 = vld [vmem:[#allocation13 + $0x458] sm:$0xff]
    %v1492 = vld [vmem:[#allocation13 + $0x460] sm:$0xff]
    %v1493 = vld [vmem:[#allocation13 + $0x468] sm:$0xff]
    %v1494 = vld [vmem:[#allocation13 + $0x470] sm:$0xff]
    %v1495 = vld [vmem:[#allocation13 + $0x478] sm:$0xff]
    %v1496 = vld [vmem:[#allocation13 + $0x480] sm:$0xff]
    %v1497 = vld [vmem:[#allocation13 + $0x488] sm:$0xff]
    %v1498 = vld [vmem:[#allocation13 + $0x490] sm:$0xff]
    %v1499 = vld [vmem:[#allocation13 + $0x498] sm:$0xff]
    %v1500 = vld [vmem:[#allocation13 + $0x4a0] sm:$0xff]
    %v1501 = vld [vmem:[#allocation13 + $0x4a8] sm:$0xff]
    %v1502 = vld [vmem:[#allocation13 + $0x4b0] sm:$0xff]
    %v1503 = vld [vmem:[#allocation13 + $0x4b8] sm:$0xff]
    %v1504 = vld [vmem:[#allocation13 + $0x4c0] sm:$0xff]
    %v1505 = vld [vmem:[#allocation13 + $0x4c8] sm:$0xff]
    %v1506 = vld [vmem:[#allocation13 + $0x4d0] sm:$0xff]
    %v1507 = vld [vmem:[#allocation13 + $0x4d8] sm:$0xff]
    %v1508 = vld [vmem:[#allocation13 + $0x4e0] sm:$0xff]
    %v1509 = vld [vmem:[#allocation13 + $0x4e8] sm:$0xff]
    %v1510 = vld [vmem:[#allocation13 + $0x4f0] sm:$0xff]
    %v1511 = vld [vmem:[#allocation13 + $0x4f8] sm:$0xff]
    %v1512 = vld [vmem:[#allocation13 + $0x500] sm:$0xff]
    %v1513 = vld [vmem:[#allocation13 + $0x508] sm:$0xff]
    %v1514 = vld [vmem:[#allocation13 + $0x510] sm:$0xff]
    %v1515 = vld [vmem:[#allocation13 + $0x518] sm:$0xff]
    %v1516 = vld [vmem:[#allocation13 + $0x520] sm:$0xff]
    %v1517 = vld [vmem:[#allocation13 + $0x528] sm:$0xff]
    %v1518 = vld [vmem:[#allocation13 + $0x530] sm:$0xff]
    %v1519 = vld [vmem:[#allocation13 + $0x538] sm:$0xff]
    %v1520 = vld [vmem:[#allocation13 + $0x540] sm:$0xff]
    %v1521 = vld [vmem:[#allocation13 + $0x548] sm:$0xff]
    %v1522 = vld [vmem:[#allocation13 + $0x550] sm:$0xff]
    %v1523 = vld [vmem:[#allocation13 + $0x558] sm:$0xff]
    %v1524 = vld [vmem:[#allocation13 + $0x560] sm:$0xff]
    %v1525 = vld [vmem:[#allocation13 + $0x568] sm:$0xff]
    %v1526 = vld [vmem:[#allocation13 + $0x570] sm:$0xff]
    %v1527 = vld [vmem:[#allocation13 + $0x578] sm:$0xff]
    %v1528 = vld [vmem:[#allocation13 + $0x580] sm:$0xff]
    %v1529 = vld [vmem:[#allocation13 + $0x588] sm:$0xff]
    %v1530 = vld [vmem:[#allocation13 + $0x590] sm:$0xff]
    %v1531 = vld [vmem:[#allocation13 + $0x598] sm:$0xff]
    %v1532 = vld [vmem:[#allocation13 + $0x5a0] sm:$0xff]
    %v1533 = vld [vmem:[#allocation13 + $0x5a8] sm:$0xff]
    %v1534 = vld [vmem:[#allocation13 + $0x5b0] sm:$0xff]
    %v1535 = vld [vmem:[#allocation13 + $0x5b8] sm:$0xff]
    %v1536 = vld [vmem:[#allocation13 + $0x5c0] sm:$0xff]
    %v1537 = vld [vmem:[#allocation13 + $0x5c8] sm:$0xff]
    %v1538 = vld [vmem:[#allocation13 + $0x5d0] sm:$0xff]
    %v1539 = vld [vmem:[#allocation13 + $0x5d8] sm:$0xff]
    %v1540 = vld [vmem:[#allocation13 + $0x5e0] sm:$0xff]
    %v1541 = vld [vmem:[#allocation13 + $0x5e8] sm:$0xff]
    %v1542 = vld [vmem:[#allocation13 + $0x5f0] sm:$0xff]
    %v1543 = vld [vmem:[#allocation13 + $0x5f8] sm:$0xff]
    %v1544 = vld [vmem:[#allocation13 + $0x600] sm:$0xff]
    %v1545 = vld [vmem:[#allocation13 + $0x608] sm:$0xff]
    %v1546 = vld [vmem:[#allocation13 + $0x610] sm:$0xff]
    %v1547 = vld [vmem:[#allocation13 + $0x618] sm:$0xff]
    %v1548 = vld [vmem:[#allocation13 + $0x620] sm:$0xff]
    %v1549 = vld [vmem:[#allocation13 + $0x628] sm:$0xff]
    %v1550 = vld [vmem:[#allocation13 + $0x630] sm:$0xff]
    %v1551 = vld [vmem:[#allocation13 + $0x638] sm:$0xff]
    %v1552 = vld [vmem:[#allocation13 + $0x640] sm:$0xff]
    %v1553 = vld [vmem:[#allocation13 + $0x648] sm:$0xff]
    %v1554 = vld [vmem:[#allocation13 + $0x650] sm:$0xff]
    %v1555 = vld [vmem:[#allocation13 + $0x658] sm:$0xff]
    %v1556 = vld [vmem:[#allocation13 + $0x660] sm:$0xff]
    %v1557 = vld [vmem:[#allocation13 + $0x668] sm:$0xff]
    %v1558 = vld [vmem:[#allocation13 + $0x670] sm:$0xff]
    %v1559 = vld [vmem:[#allocation13 + $0x678] sm:$0xff]
    %v1560 = vld [vmem:[#allocation13 + $0x680] sm:$0xff]
    %v1561 = vld [vmem:[#allocation13 + $0x688] sm:$0xff]
    %v1562 = vld [vmem:[#allocation13 + $0x690] sm:$0xff]
    %v1563 = vld [vmem:[#allocation13 + $0x698] sm:$0xff]
    %v1564 = vld [vmem:[#allocation13 + $0x6a0] sm:$0xff]
    %v1565 = vld [vmem:[#allocation13 + $0x6a8] sm:$0xff]
    %v1566 = vld [vmem:[#allocation13 + $0x6b0] sm:$0xff]
    %v1567 = vld [vmem:[#allocation13 + $0x6b8] sm:$0xff]
    %v1568 = vld [vmem:[#allocation13 + $0x6c0] sm:$0xff]
    %v1569 = vld [vmem:[#allocation13 + $0x6c8] sm:$0xff]
    %v1570 = vld [vmem:[#allocation13 + $0x6d0] sm:$0xff]
    %v1571 = vld [vmem:[#allocation13 + $0x6d8] sm:$0xff]
    %v1572 = vld [vmem:[#allocation13 + $0x6e0] sm:$0xff]
    %v1573 = vld [vmem:[#allocation13 + $0x6e8] sm:$0xff]
    %v1574 = vld [vmem:[#allocation13 + $0x6f0] sm:$0xff]
    %v1575 = vld [vmem:[#allocation13 + $0x6f8] sm:$0xff]
    %v1576 = vld [vmem:[#allocation13 + $0x700] sm:$0xff]
    %v1577 = vld [vmem:[#allocation13 + $0x708] sm:$0xff]
    %v1578 = vld [vmem:[#allocation13 + $0x710] sm:$0xff]
    %v1579 = vld [vmem:[#allocation13 + $0x718] sm:$0xff]
    %v1580 = vld [vmem:[#allocation13 + $0x720] sm:$0xff]
    %v1581 = vld [vmem:[#allocation13 + $0x728] sm:$0xff]
    %v1582 = vld [vmem:[#allocation13 + $0x730] sm:$0xff]
    %v1583 = vld [vmem:[#allocation13 + $0x738] sm:$0xff]
    %v1584 = vld [vmem:[#allocation13 + $0x740] sm:$0xff]
    %v1585 = vld [vmem:[#allocation13 + $0x748] sm:$0xff]
    %v1586 = vld [vmem:[#allocation13 + $0x750] sm:$0xff]
    %v1587 = vld [vmem:[#allocation13 + $0x758] sm:$0xff]
    %v1588 = vld [vmem:[#allocation13 + $0x760] sm:$0xff]
    %v1589 = vld [vmem:[#allocation13 + $0x768] sm:$0xff]
    %v1590 = vld [vmem:[#allocation13 + $0x770] sm:$0xff]
    %v1591 = vld [vmem:[#allocation13 + $0x778] sm:$0xff]
    %v1592 = vld [vmem:[#allocation13 + $0x780] sm:$0xff]
    %v1593 = vld [vmem:[#allocation13 + $0x788] sm:$0xff]
    %v1594 = vld [vmem:[#allocation13 + $0x790] sm:$0xff]
    %v1595 = vld [vmem:[#allocation13 + $0x798] sm:$0xff]
    %v1596 = vld [vmem:[#allocation13 + $0x7a0] sm:$0xff]
    %v1597 = vld [vmem:[#allocation13 + $0x7a8] sm:$0xff]
    %v1598 = vld [vmem:[#allocation13 + $0x7b0] sm:$0xff]
    %v1599 = vld [vmem:[#allocation13 + $0x7b8] sm:$0xff]
    %v1600 = vld [vmem:[#allocation13 + $0x7c0] sm:$0xff]
    %v1601 = vld [vmem:[#allocation13 + $0x7c8] sm:$0xff]
    %v1602 = vld [vmem:[#allocation13 + $0x7d0] sm:$0xff]
    %v1603 = vld [vmem:[#allocation13 + $0x7d8] sm:$0xff]
    %v1604 = vld [vmem:[#allocation13 + $0x7e0] sm:$0xff]
    %v1605 = vld [vmem:[#allocation13 + $0x7e8] sm:$0xff]
    %v1606 = vld [vmem:[#allocation13 + $0x7f0] sm:$0xff]
    %v1607 = vld [vmem:[#allocation13 + $0x7f8] sm:$0xff]
    %s1608 = scalar_lea.vmem [#allocation15], 36
    %v1609 = vld [vmem:[%s1608] ss:$4 sm:$0xff]
    %v1610 = vpack.c.bf16 %v1348, %v1348
    %v1611 = vpack.c.bf16 %v1349, %v1349
    %v1612 = vpack.c.bf16 %v1350, %v1350
    %v1613 = vpack.c.bf16 %v1351, %v1351
    %v1615 = vlaneseq
    %v1616 = vshrl.u32 %v1615, 7
    %v1617 = vsub.s32 0, %v1616
    %v1618 = vrot.slane %v1609, %v1617
    %v1619 = vlaneseq
    %v1620 = vshrl.u32 %v1619, 7
    %v1621 = vsub.s32 1, %v1620
    %v1622 = vrot.slane %v1609, %v1621
    %v1623 = vlaneseq
    %v1624 = vshrl.u32 %v1623, 7
    %v1625 = vsub.s32 2, %v1624
    %v1626 = vrot.slane %v1609, %v1625
    %v1627 = vlaneseq
    %v1628 = vshrl.u32 %v1627, 7
    %v1629 = vsub.s32 3, %v1628
    %v1630 = vrot.slane %v1609, %v1629
    %v1631 = vlaneseq
    %v1632 = vshrl.u32 %v1631, 7
    %v1633 = vsub.s32 4, %v1632
    %v1634 = vrot.slane %v1609, %v1633
    %v1635 = vlaneseq
    %v1636 = vshrl.u32 %v1635, 7
    %v1637 = vsub.s32 5, %v1636
    %v1638 = vrot.slane %v1609, %v1637
    %v1639 = vlaneseq
    %v1640 = vshrl.u32 %v1639, 7
    %v1641 = vsub.s32 6, %v1640
    %v1642 = vrot.slane %v1609, %v1641
    %v1643 = vlaneseq
    %v1644 = vshrl.u32 %v1643, 7
    %v1645 = vsub.s32 7, %v1644
    %v1646 = vrot.slane %v1609, %v1645
    %v1911 = vunpack.c.l.b16 %v1352
    %v1912 = vunpack.c.h.b16 %v1352
    %v1913 = vunpack.c.l.b16 %v1353
    %v1914 = vunpack.c.h.b16 %v1353
    %v1915 = vunpack.c.l.b16 %v1354
    %v1916 = vunpack.c.h.b16 %v1354
    %v1917 = vunpack.c.l.b16 %v1355
    %v1918 = vunpack.c.h.b16 %v1355
    %v1919 = vunpack.c.l.b16 %v1356
    %v1920 = vunpack.c.h.b16 %v1356
    %v1921 = vunpack.c.l.b16 %v1357
    %v1922 = vunpack.c.h.b16 %v1357
    %v1923 = vunpack.c.l.b16 %v1358
    %v1924 = vunpack.c.h.b16 %v1358
    %v1925 = vunpack.c.l.b16 %v1359
    %v1926 = vunpack.c.h.b16 %v1359
    %v1927 = vunpack.c.l.b16 %v1360
    %v1928 = vunpack.c.h.b16 %v1360
    %v1929 = vunpack.c.l.b16 %v1361
    %v1930 = vunpack.c.h.b16 %v1361
    %v1931 = vunpack.c.l.b16 %v1362
    %v1932 = vunpack.c.h.b16 %v1362
    %v1933 = vunpack.c.l.b16 %v1363
    %v1934 = vunpack.c.h.b16 %v1363
    %v1935 = vunpack.c.l.b16 %v1364
    %v1936 = vunpack.c.h.b16 %v1364
    %v1937 = vunpack.c.l.b16 %v1365
    %v1938 = vunpack.c.h.b16 %v1365
    %v1939 = vunpack.c.l.b16 %v1366
    %v1940 = vunpack.c.h.b16 %v1366
    %v1941 = vunpack.c.l.b16 %v1367
    %v1942 = vunpack.c.h.b16 %v1367
    %v1943 = vunpack.c.l.b16 %v1368
    %v1944 = vunpack.c.h.b16 %v1368
    %v1945 = vunpack.c.l.b16 %v1369
    %v1946 = vunpack.c.h.b16 %v1369
    %v1947 = vunpack.c.l.b16 %v1370
    %v1948 = vunpack.c.h.b16 %v1370
    %v1949 = vunpack.c.l.b16 %v1371
    %v1950 = vunpack.c.h.b16 %v1371
    %v1951 = vunpack.c.l.b16 %v1372
    %v1952 = vunpack.c.h.b16 %v1372
    %v1953 = vunpack.c.l.b16 %v1373
    %v1954 = vunpack.c.h.b16 %v1373
    %v1955 = vunpack.c.l.b16 %v1374
    %v1956 = vunpack.c.h.b16 %v1374
    %v1957 = vunpack.c.l.b16 %v1375
    %v1958 = vunpack.c.h.b16 %v1375
    %v1959 = vunpack.c.l.b16 %v1376
    %v1960 = vunpack.c.h.b16 %v1376
    %v1961 = vunpack.c.l.b16 %v1377
    %v1962 = vunpack.c.h.b16 %v1377
    %v1963 = vunpack.c.l.b16 %v1378
    %v1964 = vunpack.c.h.b16 %v1378
    %v1965 = vunpack.c.l.b16 %v1379
    %v1966 = vunpack.c.h.b16 %v1379
    %v1967 = vunpack.c.l.b16 %v1380
    %v1968 = vunpack.c.h.b16 %v1380
    %v1969 = vunpack.c.l.b16 %v1381
    %v1970 = vunpack.c.h.b16 %v1381
    %v1971 = vunpack.c.l.b16 %v1382
    %v1972 = vunpack.c.h.b16 %v1382
    %v1973 = vunpack.c.l.b16 %v1383
    %v1974 = vunpack.c.h.b16 %v1383
    %v1975 = vunpack.c.l.b16 %v1384
    %v1976 = vunpack.c.h.b16 %v1384
    %v1977 = vunpack.c.l.b16 %v1385
    %v1978 = vunpack.c.h.b16 %v1385
    %v1979 = vunpack.c.l.b16 %v1386
    %v1980 = vunpack.c.h.b16 %v1386
    %v1981 = vunpack.c.l.b16 %v1387
    %v1982 = vunpack.c.h.b16 %v1387
    %v1983 = vunpack.c.l.b16 %v1388
    %v1984 = vunpack.c.h.b16 %v1388
    %v1985 = vunpack.c.l.b16 %v1389
    %v1986 = vunpack.c.h.b16 %v1389
    %v1987 = vunpack.c.l.b16 %v1390
    %v1988 = vunpack.c.h.b16 %v1390
    %v1989 = vunpack.c.l.b16 %v1391
    %v1990 = vunpack.c.h.b16 %v1391
    %v1991 = vunpack.c.l.b16 %v1392
    %v1992 = vunpack.c.h.b16 %v1392
    %v1993 = vunpack.c.l.b16 %v1393
    %v1994 = vunpack.c.h.b16 %v1393
    %v1995 = vunpack.c.l.b16 %v1394
    %v1996 = vunpack.c.h.b16 %v1394
    %v1997 = vunpack.c.l.b16 %v1395
    %v1998 = vunpack.c.h.b16 %v1395
    %v1999 = vunpack.c.l.b16 %v1396
    %v2000 = vunpack.c.h.b16 %v1396
    %v2001 = vunpack.c.l.b16 %v1397
    %v2002 = vunpack.c.h.b16 %v1397
    %v2003 = vunpack.c.l.b16 %v1398
    %v2004 = vunpack.c.h.b16 %v1398
    %v2005 = vunpack.c.l.b16 %v1399
    %v2006 = vunpack.c.h.b16 %v1399
    %v2007 = vunpack.c.l.b16 %v1400
    %v2008 = vunpack.c.h.b16 %v1400
    %v2009 = vunpack.c.l.b16 %v1401
    %v2010 = vunpack.c.h.b16 %v1401
    %v2011 = vunpack.c.l.b16 %v1402
    %v2012 = vunpack.c.h.b16 %v1402
    %v2013 = vunpack.c.l.b16 %v1403
    %v2014 = vunpack.c.h.b16 %v1403
    %v2015 = vunpack.c.l.b16 %v1404
    %v2016 = vunpack.c.h.b16 %v1404
    %v2017 = vunpack.c.l.b16 %v1405
    %v2018 = vunpack.c.h.b16 %v1405
    %v2019 = vunpack.c.l.b16 %v1406
    %v2020 = vunpack.c.h.b16 %v1406
    %v2021 = vunpack.c.l.b16 %v1407
    %v2022 = vunpack.c.h.b16 %v1407
    %v2023 = vunpack.c.l.b16 %v1408
    %v2024 = vunpack.c.h.b16 %v1408
    %v2025 = vunpack.c.l.b16 %v1409
    %v2026 = vunpack.c.h.b16 %v1409
    %v2027 = vunpack.c.l.b16 %v1410
    %v2028 = vunpack.c.h.b16 %v1410
    %v2029 = vunpack.c.l.b16 %v1411
    %v2030 = vunpack.c.h.b16 %v1411
    %v2031 = vunpack.c.l.b16 %v1412
    %v2032 = vunpack.c.h.b16 %v1412
    %v2033 = vunpack.c.l.b16 %v1413
    %v2034 = vunpack.c.h.b16 %v1413
    %v2035 = vunpack.c.l.b16 %v1414
    %v2036 = vunpack.c.h.b16 %v1414
    %v2037 = vunpack.c.l.b16 %v1415
    %v2038 = vunpack.c.h.b16 %v1415
    %v2039 = vunpack.c.l.b16 %v1416
    %v2040 = vunpack.c.h.b16 %v1416
    %v2041 = vunpack.c.l.b16 %v1417
    %v2042 = vunpack.c.h.b16 %v1417
    %v2043 = vunpack.c.l.b16 %v1418
    %v2044 = vunpack.c.h.b16 %v1418
    %v2045 = vunpack.c.l.b16 %v1419
    %v2046 = vunpack.c.h.b16 %v1419
    %v2047 = vunpack.c.l.b16 %v1420
    %v2048 = vunpack.c.h.b16 %v1420
    %v2049 = vunpack.c.l.b16 %v1421
    %v2050 = vunpack.c.h.b16 %v1421
    %v2051 = vunpack.c.l.b16 %v1422
    %v2052 = vunpack.c.h.b16 %v1422
    %v2053 = vunpack.c.l.b16 %v1423
    %v2054 = vunpack.c.h.b16 %v1423
    %v2055 = vunpack.c.l.b16 %v1424
    %v2056 = vunpack.c.h.b16 %v1424
    %v2057 = vunpack.c.l.b16 %v1425
    %v2058 = vunpack.c.h.b16 %v1425
    %v2059 = vunpack.c.l.b16 %v1426
    %v2060 = vunpack.c.h.b16 %v1426
    %v2061 = vunpack.c.l.b16 %v1427
    %v2062 = vunpack.c.h.b16 %v1427
    %v2063 = vunpack.c.l.b16 %v1428
    %v2064 = vunpack.c.h.b16 %v1428
    %v2065 = vunpack.c.l.b16 %v1429
    %v2066 = vunpack.c.h.b16 %v1429
    %v2067 = vunpack.c.l.b16 %v1430
    %v2068 = vunpack.c.h.b16 %v1430
    %v2069 = vunpack.c.l.b16 %v1431
    %v2070 = vunpack.c.h.b16 %v1431
    %v2071 = vunpack.c.l.b16 %v1432
    %v2072 = vunpack.c.h.b16 %v1432
    %v2073 = vunpack.c.l.b16 %v1433
    %v2074 = vunpack.c.h.b16 %v1433
    %v2075 = vunpack.c.l.b16 %v1434
    %v2076 = vunpack.c.h.b16 %v1434
    %v2077 = vunpack.c.l.b16 %v1435
    %v2078 = vunpack.c.h.b16 %v1435
    %v2079 = vunpack.c.l.b16 %v1436
    %v2080 = vunpack.c.h.b16 %v1436
    %v2081 = vunpack.c.l.b16 %v1437
    %v2082 = vunpack.c.h.b16 %v1437
    %v2083 = vunpack.c.l.b16 %v1438
    %v2084 = vunpack.c.h.b16 %v1438
    %v2085 = vunpack.c.l.b16 %v1439
    %v2086 = vunpack.c.h.b16 %v1439
    %v2087 = vunpack.c.l.b16 %v1440
    %v2088 = vunpack.c.h.b16 %v1440
    %v2089 = vunpack.c.l.b16 %v1441
    %v2090 = vunpack.c.h.b16 %v1441
    %v2091 = vunpack.c.l.b16 %v1442
    %v2092 = vunpack.c.h.b16 %v1442
    %v2093 = vunpack.c.l.b16 %v1443
    %v2094 = vunpack.c.h.b16 %v1443
    %v2095 = vunpack.c.l.b16 %v1444
    %v2096 = vunpack.c.h.b16 %v1444
    %v2097 = vunpack.c.l.b16 %v1445
    %v2098 = vunpack.c.h.b16 %v1445
    %v2099 = vunpack.c.l.b16 %v1446
    %v2100 = vunpack.c.h.b16 %v1446
    %v2101 = vunpack.c.l.b16 %v1447
    %v2102 = vunpack.c.h.b16 %v1447
    %v2103 = vunpack.c.l.b16 %v1448
    %v2104 = vunpack.c.h.b16 %v1448
    %v2105 = vunpack.c.l.b16 %v1449
    %v2106 = vunpack.c.h.b16 %v1449
    %v2107 = vunpack.c.l.b16 %v1450
    %v2108 = vunpack.c.h.b16 %v1450
    %v2109 = vunpack.c.l.b16 %v1451
    %v2110 = vunpack.c.h.b16 %v1451
    %v2111 = vunpack.c.l.b16 %v1452
    %v2112 = vunpack.c.h.b16 %v1452
    %v2113 = vunpack.c.l.b16 %v1453
    %v2114 = vunpack.c.h.b16 %v1453
    %v2115 = vunpack.c.l.b16 %v1454
    %v2116 = vunpack.c.h.b16 %v1454
    %v2117 = vunpack.c.l.b16 %v1455
    %v2118 = vunpack.c.h.b16 %v1455
    %v2119 = vunpack.c.l.b16 %v1456
    %v2120 = vunpack.c.h.b16 %v1456
    %v2121 = vunpack.c.l.b16 %v1457
    %v2122 = vunpack.c.h.b16 %v1457
    %v2123 = vunpack.c.l.b16 %v1458
    %v2124 = vunpack.c.h.b16 %v1458
    %v2125 = vunpack.c.l.b16 %v1459
    %v2126 = vunpack.c.h.b16 %v1459
    %v2127 = vunpack.c.l.b16 %v1460
    %v2128 = vunpack.c.h.b16 %v1460
    %v2129 = vunpack.c.l.b16 %v1461
    %v2130 = vunpack.c.h.b16 %v1461
    %v2131 = vunpack.c.l.b16 %v1462
    %v2132 = vunpack.c.h.b16 %v1462
    %v2133 = vunpack.c.l.b16 %v1463
    %v2134 = vunpack.c.h.b16 %v1463
    %v2135 = vunpack.c.l.b16 %v1464
    %v2136 = vunpack.c.h.b16 %v1464
    %v2137 = vunpack.c.l.b16 %v1465
    %v2138 = vunpack.c.h.b16 %v1465
    %v2139 = vunpack.c.l.b16 %v1466
    %v2140 = vunpack.c.h.b16 %v1466
    %v2141 = vunpack.c.l.b16 %v1467
    %v2142 = vunpack.c.h.b16 %v1467
    %v2143 = vunpack.c.l.b16 %v1468
    %v2144 = vunpack.c.h.b16 %v1468
    %v2145 = vunpack.c.l.b16 %v1469
    %v2146 = vunpack.c.h.b16 %v1469
    %v2147 = vunpack.c.l.b16 %v1470
    %v2148 = vunpack.c.h.b16 %v1470
    %v2149 = vunpack.c.l.b16 %v1471
    %v2150 = vunpack.c.h.b16 %v1471
    %v2151 = vunpack.c.l.b16 %v1472
    %v2152 = vunpack.c.h.b16 %v1472
    %v2153 = vunpack.c.l.b16 %v1473
    %v2154 = vunpack.c.h.b16 %v1473
    %v2155 = vunpack.c.l.b16 %v1474
    %v2156 = vunpack.c.h.b16 %v1474
    %v2157 = vunpack.c.l.b16 %v1475
    %v2158 = vunpack.c.h.b16 %v1475
    %v2159 = vunpack.c.l.b16 %v1476
    %v2160 = vunpack.c.h.b16 %v1476
    %v2161 = vunpack.c.l.b16 %v1477
    %v2162 = vunpack.c.h.b16 %v1477
    %v2163 = vunpack.c.l.b16 %v1478
    %v2164 = vunpack.c.h.b16 %v1478
    %v2165 = vunpack.c.l.b16 %v1479
    %v2166 = vunpack.c.h.b16 %v1479
    %v2167 = vunpack.c.l.b16 %v1480
    %v2168 = vunpack.c.h.b16 %v1480
    %v2169 = vunpack.c.l.b16 %v1481
    %v2170 = vunpack.c.h.b16 %v1481
    %v2171 = vunpack.c.l.b16 %v1482
    %v2172 = vunpack.c.h.b16 %v1482
    %v2173 = vunpack.c.l.b16 %v1483
    %v2174 = vunpack.c.h.b16 %v1483
    %v2175 = vunpack.c.l.b16 %v1484
    %v2176 = vunpack.c.h.b16 %v1484
    %v2177 = vunpack.c.l.b16 %v1485
    %v2178 = vunpack.c.h.b16 %v1485
    %v2179 = vunpack.c.l.b16 %v1486
    %v2180 = vunpack.c.h.b16 %v1486
    %v2181 = vunpack.c.l.b16 %v1487
    %v2182 = vunpack.c.h.b16 %v1487
    %v2183 = vunpack.c.l.b16 %v1488
    %v2184 = vunpack.c.h.b16 %v1488
    %v2185 = vunpack.c.l.b16 %v1489
    %v2186 = vunpack.c.h.b16 %v1489
    %v2187 = vunpack.c.l.b16 %v1490
    %v2188 = vunpack.c.h.b16 %v1490
    %v2189 = vunpack.c.l.b16 %v1491
    %v2190 = vunpack.c.h.b16 %v1491
    %v2191 = vunpack.c.l.b16 %v1492
    %v2192 = vunpack.c.h.b16 %v1492
    %v2193 = vunpack.c.l.b16 %v1493
    %v2194 = vunpack.c.h.b16 %v1493
    %v2195 = vunpack.c.l.b16 %v1494
    %v2196 = vunpack.c.h.b16 %v1494
    %v2197 = vunpack.c.l.b16 %v1495
    %v2198 = vunpack.c.h.b16 %v1495
    %v2199 = vunpack.c.l.b16 %v1496
    %v2200 = vunpack.c.h.b16 %v1496
    %v2201 = vunpack.c.l.b16 %v1497
    %v2202 = vunpack.c.h.b16 %v1497
    %v2203 = vunpack.c.l.b16 %v1498
    %v2204 = vunpack.c.h.b16 %v1498
    %v2205 = vunpack.c.l.b16 %v1499
    %v2206 = vunpack.c.h.b16 %v1499
    %v2207 = vunpack.c.l.b16 %v1500
    %v2208 = vunpack.c.h.b16 %v1500
    %v2209 = vunpack.c.l.b16 %v1501
    %v2210 = vunpack.c.h.b16 %v1501
    %v2211 = vunpack.c.l.b16 %v1502
    %v2212 = vunpack.c.h.b16 %v1502
    %v2213 = vunpack.c.l.b16 %v1503
    %v2214 = vunpack.c.h.b16 %v1503
    %v2215 = vunpack.c.l.b16 %v1504
    %v2216 = vunpack.c.h.b16 %v1504
    %v2217 = vunpack.c.l.b16 %v1505
    %v2218 = vunpack.c.h.b16 %v1505
    %v2219 = vunpack.c.l.b16 %v1506
    %v2220 = vunpack.c.h.b16 %v1506
    %v2221 = vunpack.c.l.b16 %v1507
    %v2222 = vunpack.c.h.b16 %v1507
    %v2223 = vunpack.c.l.b16 %v1508
    %v2224 = vunpack.c.h.b16 %v1508
    %v2225 = vunpack.c.l.b16 %v1509
    %v2226 = vunpack.c.h.b16 %v1509
    %v2227 = vunpack.c.l.b16 %v1510
    %v2228 = vunpack.c.h.b16 %v1510
    %v2229 = vunpack.c.l.b16 %v1511
    %v2230 = vunpack.c.h.b16 %v1511
    %v2231 = vunpack.c.l.b16 %v1512
    %v2232 = vunpack.c.h.b16 %v1512
    %v2233 = vunpack.c.l.b16 %v1513
    %v2234 = vunpack.c.h.b16 %v1513
    %v2235 = vunpack.c.l.b16 %v1514
    %v2236 = vunpack.c.h.b16 %v1514
    %v2237 = vunpack.c.l.b16 %v1515
    %v2238 = vunpack.c.h.b16 %v1515
    %v2239 = vunpack.c.l.b16 %v1516
    %v2240 = vunpack.c.h.b16 %v1516
    %v2241 = vunpack.c.l.b16 %v1517
    %v2242 = vunpack.c.h.b16 %v1517
    %v2243 = vunpack.c.l.b16 %v1518
    %v2244 = vunpack.c.h.b16 %v1518
    %v2245 = vunpack.c.l.b16 %v1519
    %v2246 = vunpack.c.h.b16 %v1519
    %v2247 = vunpack.c.l.b16 %v1520
    %v2248 = vunpack.c.h.b16 %v1520
    %v2249 = vunpack.c.l.b16 %v1521
    %v2250 = vunpack.c.h.b16 %v1521
    %v2251 = vunpack.c.l.b16 %v1522
    %v2252 = vunpack.c.h.b16 %v1522
    %v2253 = vunpack.c.l.b16 %v1523
    %v2254 = vunpack.c.h.b16 %v1523
    %v2255 = vunpack.c.l.b16 %v1524
    %v2256 = vunpack.c.h.b16 %v1524
    %v2257 = vunpack.c.l.b16 %v1525
    %v2258 = vunpack.c.h.b16 %v1525
    %v2259 = vunpack.c.l.b16 %v1526
    %v2260 = vunpack.c.h.b16 %v1526
    %v2261 = vunpack.c.l.b16 %v1527
    %v2262 = vunpack.c.h.b16 %v1527
    %v2263 = vunpack.c.l.b16 %v1528
    %v2264 = vunpack.c.h.b16 %v1528
    %v2265 = vunpack.c.l.b16 %v1529
    %v2266 = vunpack.c.h.b16 %v1529
    %v2267 = vunpack.c.l.b16 %v1530
    %v2268 = vunpack.c.h.b16 %v1530
    %v2269 = vunpack.c.l.b16 %v1531
    %v2270 = vunpack.c.h.b16 %v1531
    %v2271 = vunpack.c.l.b16 %v1532
    %v2272 = vunpack.c.h.b16 %v1532
    %v2273 = vunpack.c.l.b16 %v1533
    %v2274 = vunpack.c.h.b16 %v1533
    %v2275 = vunpack.c.l.b16 %v1534
    %v2276 = vunpack.c.h.b16 %v1534
    %v2277 = vunpack.c.l.b16 %v1535
    %v2278 = vunpack.c.h.b16 %v1535
    %v2279 = vunpack.c.l.b16 %v1536
    %v2280 = vunpack.c.h.b16 %v1536
    %v2281 = vunpack.c.l.b16 %v1537
    %v2282 = vunpack.c.h.b16 %v1537
    %v2283 = vunpack.c.l.b16 %v1538
    %v2284 = vunpack.c.h.b16 %v1538
    %v2285 = vunpack.c.l.b16 %v1539
    %v2286 = vunpack.c.h.b16 %v1539
    %v2287 = vunpack.c.l.b16 %v1540
    %v2288 = vunpack.c.h.b16 %v1540
    %v2289 = vunpack.c.l.b16 %v1541
    %v2290 = vunpack.c.h.b16 %v1541
    %v2291 = vunpack.c.l.b16 %v1542
    %v2292 = vunpack.c.h.b16 %v1542
    %v2293 = vunpack.c.l.b16 %v1543
    %v2294 = vunpack.c.h.b16 %v1543
    %v2295 = vunpack.c.l.b16 %v1544
    %v2296 = vunpack.c.h.b16 %v1544
    %v2297 = vunpack.c.l.b16 %v1545
    %v2298 = vunpack.c.h.b16 %v1545
    %v2299 = vunpack.c.l.b16 %v1546
    %v2300 = vunpack.c.h.b16 %v1546
    %v2301 = vunpack.c.l.b16 %v1547
    %v2302 = vunpack.c.h.b16 %v1547
    %v2303 = vunpack.c.l.b16 %v1548
    %v2304 = vunpack.c.h.b16 %v1548
    %v2305 = vunpack.c.l.b16 %v1549
    %v2306 = vunpack.c.h.b16 %v1549
    %v2307 = vunpack.c.l.b16 %v1550
    %v2308 = vunpack.c.h.b16 %v1550
    %v2309 = vunpack.c.l.b16 %v1551
    %v2310 = vunpack.c.h.b16 %v1551
    %v2311 = vunpack.c.l.b16 %v1552
    %v2312 = vunpack.c.h.b16 %v1552
    %v2313 = vunpack.c.l.b16 %v1553
    %v2314 = vunpack.c.h.b16 %v1553
    %v2315 = vunpack.c.l.b16 %v1554
    %v2316 = vunpack.c.h.b16 %v1554
    %v2317 = vunpack.c.l.b16 %v1555
    %v2318 = vunpack.c.h.b16 %v1555
    %v2319 = vunpack.c.l.b16 %v1556
    %v2320 = vunpack.c.h.b16 %v1556
    %v2321 = vunpack.c.l.b16 %v1557
    %v2322 = vunpack.c.h.b16 %v1557
    %v2323 = vunpack.c.l.b16 %v1558
    %v2324 = vunpack.c.h.b16 %v1558
    %v2325 = vunpack.c.l.b16 %v1559
    %v2326 = vunpack.c.h.b16 %v1559
    %v2327 = vunpack.c.l.b16 %v1560
    %v2328 = vunpack.c.h.b16 %v1560
    %v2329 = vunpack.c.l.b16 %v1561
    %v2330 = vunpack.c.h.b16 %v1561
    %v2331 = vunpack.c.l.b16 %v1562
    %v2332 = vunpack.c.h.b16 %v1562
    %v2333 = vunpack.c.l.b16 %v1563
    %v2334 = vunpack.c.h.b16 %v1563
    %v2335 = vunpack.c.l.b16 %v1564
    %v2336 = vunpack.c.h.b16 %v1564
    %v2337 = vunpack.c.l.b16 %v1565
    %v2338 = vunpack.c.h.b16 %v1565
    %v2339 = vunpack.c.l.b16 %v1566
    %v2340 = vunpack.c.h.b16 %v1566
    %v2341 = vunpack.c.l.b16 %v1567
    %v2342 = vunpack.c.h.b16 %v1567
    %v2343 = vunpack.c.l.b16 %v1568
    %v2344 = vunpack.c.h.b16 %v1568
    %v2345 = vunpack.c.l.b16 %v1569
    %v2346 = vunpack.c.h.b16 %v1569
    %v2347 = vunpack.c.l.b16 %v1570
    %v2348 = vunpack.c.h.b16 %v1570
    %v2349 = vunpack.c.l.b16 %v1571
    %v2350 = vunpack.c.h.b16 %v1571
    %v2351 = vunpack.c.l.b16 %v1572
    %v2352 = vunpack.c.h.b16 %v1572
    %v2353 = vunpack.c.l.b16 %v1573
    %v2354 = vunpack.c.h.b16 %v1573
    %v2355 = vunpack.c.l.b16 %v1574
    %v2356 = vunpack.c.h.b16 %v1574
    %v2357 = vunpack.c.l.b16 %v1575
    %v2358 = vunpack.c.h.b16 %v1575
    %v2359 = vunpack.c.l.b16 %v1576
    %v2360 = vunpack.c.h.b16 %v1576
    %v2361 = vunpack.c.l.b16 %v1577
    %v2362 = vunpack.c.h.b16 %v1577
    %v2363 = vunpack.c.l.b16 %v1578
    %v2364 = vunpack.c.h.b16 %v1578
    %v2365 = vunpack.c.l.b16 %v1579
    %v2366 = vunpack.c.h.b16 %v1579
    %v2367 = vunpack.c.l.b16 %v1580
    %v2368 = vunpack.c.h.b16 %v1580
    %v2369 = vunpack.c.l.b16 %v1581
    %v2370 = vunpack.c.h.b16 %v1581
    %v2371 = vunpack.c.l.b16 %v1582
    %v2372 = vunpack.c.h.b16 %v1582
    %v2373 = vunpack.c.l.b16 %v1583
    %v2374 = vunpack.c.h.b16 %v1583
    %v2375 = vunpack.c.l.b16 %v1584
    %v2376 = vunpack.c.h.b16 %v1584
    %v2377 = vunpack.c.l.b16 %v1585
    %v2378 = vunpack.c.h.b16 %v1585
    %v2379 = vunpack.c.l.b16 %v1586
    %v2380 = vunpack.c.h.b16 %v1586
    %v2381 = vunpack.c.l.b16 %v1587
    %v2382 = vunpack.c.h.b16 %v1587
    %v2383 = vunpack.c.l.b16 %v1588
    %v2384 = vunpack.c.h.b16 %v1588
    %v2385 = vunpack.c.l.b16 %v1589
    %v2386 = vunpack.c.h.b16 %v1589
    %v2387 = vunpack.c.l.b16 %v1590
    %v2388 = vunpack.c.h.b16 %v1590
    %v2389 = vunpack.c.l.b16 %v1591
    %v2390 = vunpack.c.h.b16 %v1591
    %v2391 = vunpack.c.l.b16 %v1592
    %v2392 = vunpack.c.h.b16 %v1592
    %v2393 = vunpack.c.l.b16 %v1593
    %v2394 = vunpack.c.h.b16 %v1593
    %v2395 = vunpack.c.l.b16 %v1594
    %v2396 = vunpack.c.h.b16 %v1594
    %v2397 = vunpack.c.l.b16 %v1595
    %v2398 = vunpack.c.h.b16 %v1595
    %v2399 = vunpack.c.l.b16 %v1596
    %v2400 = vunpack.c.h.b16 %v1596
    %v2401 = vunpack.c.l.b16 %v1597
    %v2402 = vunpack.c.h.b16 %v1597
    %v2403 = vunpack.c.l.b16 %v1598
    %v2404 = vunpack.c.h.b16 %v1598
    %v2405 = vunpack.c.l.b16 %v1599
    %v2406 = vunpack.c.h.b16 %v1599
    %v2407 = vunpack.c.l.b16 %v1600
    %v2408 = vunpack.c.h.b16 %v1600
    %v2409 = vunpack.c.l.b16 %v1601
    %v2410 = vunpack.c.h.b16 %v1601
    %v2411 = vunpack.c.l.b16 %v1602
    %v2412 = vunpack.c.h.b16 %v1602
    %v2413 = vunpack.c.l.b16 %v1603
    %v2414 = vunpack.c.h.b16 %v1603
    %v2415 = vunpack.c.l.b16 %v1604
    %v2416 = vunpack.c.h.b16 %v1604
    %v2417 = vunpack.c.l.b16 %v1605
    %v2418 = vunpack.c.h.b16 %v1605
    %v2419 = vunpack.c.l.b16 %v1606
    %v2420 = vunpack.c.h.b16 %v1606
    %v2421 = vunpack.c.l.b16 %v1607
    %v2422 = vunpack.c.h.b16 %v1607
    %v2423 = vpack.c.b16 %v1919, %v1911
    %v2424 = vpack.c.b16 %v1920, %v1912
    %v2425 = vpack.c.b16 %v1921, %v1913
    %v2426 = vpack.c.b16 %v1922, %v1914
    %v2427 = vpack.c.b16 %v1923, %v1915
    %v2428 = vpack.c.b16 %v1924, %v1916
    %v2429 = vpack.c.b16 %v1925, %v1917
    %v2430 = vpack.c.b16 %v1926, %v1918
    %v2431 = vpack.c.b16 %v1935, %v1927
    %v2432 = vpack.c.b16 %v1936, %v1928
    %v2433 = vpack.c.b16 %v1937, %v1929
    %v2434 = vpack.c.b16 %v1938, %v1930
    %v2435 = vpack.c.b16 %v1939, %v1931
    %v2436 = vpack.c.b16 %v1940, %v1932
    %v2437 = vpack.c.b16 %v1941, %v1933
    %v2438 = vpack.c.b16 %v1942, %v1934
    %v2439 = vpack.c.b16 %v1951, %v1943
    %v2440 = vpack.c.b16 %v1952, %v1944
    %v2441 = vpack.c.b16 %v1953, %v1945
    %v2442 = vpack.c.b16 %v1954, %v1946
    %v2443 = vpack.c.b16 %v1955, %v1947
    %v2444 = vpack.c.b16 %v1956, %v1948
    %v2445 = vpack.c.b16 %v1957, %v1949
    %v2446 = vpack.c.b16 %v1958, %v1950
    %v2447 = vpack.c.b16 %v1967, %v1959
    %v2448 = vpack.c.b16 %v1968, %v1960
    %v2449 = vpack.c.b16 %v1969, %v1961
    %v2450 = vpack.c.b16 %v1970, %v1962
    %v2451 = vpack.c.b16 %v1971, %v1963
    %v2452 = vpack.c.b16 %v1972, %v1964
    %v2453 = vpack.c.b16 %v1973, %v1965
    %v2454 = vpack.c.b16 %v1974, %v1966
    %v2455 = vpack.c.b16 %v1983, %v1975
    %v2456 = vpack.c.b16 %v1984, %v1976
    %v2457 = vpack.c.b16 %v1985, %v1977
    %v2458 = vpack.c.b16 %v1986, %v1978
    %v2459 = vpack.c.b16 %v1987, %v1979
    %v2460 = vpack.c.b16 %v1988, %v1980
    %v2461 = vpack.c.b16 %v1989, %v1981
    %v2462 = vpack.c.b16 %v1990, %v1982
    %v2463 = vpack.c.b16 %v1999, %v1991
    %v2464 = vpack.c.b16 %v2000, %v1992
    %v2465 = vpack.c.b16 %v2001, %v1993
    %v2466 = vpack.c.b16 %v2002, %v1994
    %v2467 = vpack.c.b16 %v2003, %v1995
    %v2468 = vpack.c.b16 %v2004, %v1996
    %v2469 = vpack.c.b16 %v2005, %v1997
    %v2470 = vpack.c.b16 %v2006, %v1998
    %v2471 = vpack.c.b16 %v2015, %v2007
    %v2472 = vpack.c.b16 %v2016, %v2008
    %v2473 = vpack.c.b16 %v2017, %v2009
    %v2474 = vpack.c.b16 %v2018, %v2010
    %v2475 = vpack.c.b16 %v2019, %v2011
    %v2476 = vpack.c.b16 %v2020, %v2012
    %v2477 = vpack.c.b16 %v2021, %v2013
    %v2478 = vpack.c.b16 %v2022, %v2014
    %v2479 = vpack.c.b16 %v2031, %v2023
    %v2480 = vpack.c.b16 %v2032, %v2024
    %v2481 = vpack.c.b16 %v2033, %v2025
    %v2482 = vpack.c.b16 %v2034, %v2026
    %v2483 = vpack.c.b16 %v2035, %v2027
    %v2484 = vpack.c.b16 %v2036, %v2028
    %v2485 = vpack.c.b16 %v2037, %v2029
    %v2486 = vpack.c.b16 %v2038, %v2030
    %v2487 = vpack.c.b16 %v2047, %v2039
    %v2488 = vpack.c.b16 %v2048, %v2040
    %v2489 = vpack.c.b16 %v2049, %v2041
    %v2490 = vpack.c.b16 %v2050, %v2042
    %v2491 = vpack.c.b16 %v2051, %v2043
    %v2492 = vpack.c.b16 %v2052, %v2044
    %v2493 = vpack.c.b16 %v2053, %v2045
    %v2494 = vpack.c.b16 %v2054, %v2046
    %v2495 = vpack.c.b16 %v2063, %v2055
    %v2496 = vpack.c.b16 %v2064, %v2056
    %v2497 = vpack.c.b16 %v2065, %v2057
    %v2498 = vpack.c.b16 %v2066, %v2058
    %v2499 = vpack.c.b16 %v2067, %v2059
    %v2500 = vpack.c.b16 %v2068, %v2060
    %v2501 = vpack.c.b16 %v2069, %v2061
    %v2502 = vpack.c.b16 %v2070, %v2062
    %v2503 = vpack.c.b16 %v2079, %v2071
    %v2504 = vpack.c.b16 %v2080, %v2072
    %v2505 = vpack.c.b16 %v2081, %v2073
    %v2506 = vpack.c.b16 %v2082, %v2074
    %v2507 = vpack.c.b16 %v2083, %v2075
    %v2508 = vpack.c.b16 %v2084, %v2076
    %v2509 = vpack.c.b16 %v2085, %v2077
    %v2510 = vpack.c.b16 %v2086, %v2078
    %v2511 = vpack.c.b16 %v2095, %v2087
    %v2512 = vpack.c.b16 %v2096, %v2088
    %v2513 = vpack.c.b16 %v2097, %v2089
    %v2514 = vpack.c.b16 %v2098, %v2090
    %v2515 = vpack.c.b16 %v2099, %v2091
    %v2516 = vpack.c.b16 %v2100, %v2092
    %v2517 = vpack.c.b16 %v2101, %v2093
    %v2518 = vpack.c.b16 %v2102, %v2094
    %v2519 = vpack.c.b16 %v2111, %v2103
    %v2520 = vpack.c.b16 %v2112, %v2104
    %v2521 = vpack.c.b16 %v2113, %v2105
    %v2522 = vpack.c.b16 %v2114, %v2106
    %v2523 = vpack.c.b16 %v2115, %v2107
    %v2524 = vpack.c.b16 %v2116, %v2108
    %v2525 = vpack.c.b16 %v2117, %v2109
    %v2526 = vpack.c.b16 %v2118, %v2110
    %v2527 = vpack.c.b16 %v2127, %v2119
    %v2528 = vpack.c.b16 %v2128, %v2120
    %v2529 = vpack.c.b16 %v2129, %v2121
    %v2530 = vpack.c.b16 %v2130, %v2122
    %v2531 = vpack.c.b16 %v2131, %v2123
    %v2532 = vpack.c.b16 %v2132, %v2124
    %v2533 = vpack.c.b16 %v2133, %v2125
    %v2534 = vpack.c.b16 %v2134, %v2126
    %v2535 = vpack.c.b16 %v2143, %v2135
    %v2536 = vpack.c.b16 %v2144, %v2136
    %v2537 = vpack.c.b16 %v2145, %v2137
    %v2538 = vpack.c.b16 %v2146, %v2138
    %v2539 = vpack.c.b16 %v2147, %v2139
    %v2540 = vpack.c.b16 %v2148, %v2140
    %v2541 = vpack.c.b16 %v2149, %v2141
    %v2542 = vpack.c.b16 %v2150, %v2142
    %v2543 = vpack.c.b16 %v2159, %v2151
    %v2544 = vpack.c.b16 %v2160, %v2152
    %v2545 = vpack.c.b16 %v2161, %v2153
    %v2546 = vpack.c.b16 %v2162, %v2154
    %v2547 = vpack.c.b16 %v2163, %v2155
    %v2548 = vpack.c.b16 %v2164, %v2156
    %v2549 = vpack.c.b16 %v2165, %v2157
    %v2550 = vpack.c.b16 %v2166, %v2158
    %v2551 = vpack.c.b16 %v2175, %v2167
    %v2552 = vpack.c.b16 %v2176, %v2168
    %v2553 = vpack.c.b16 %v2177, %v2169
    %v2554 = vpack.c.b16 %v2178, %v2170
    %v2555 = vpack.c.b16 %v2179, %v2171
    %v2556 = vpack.c.b16 %v2180, %v2172
    %v2557 = vpack.c.b16 %v2181, %v2173
    %v2558 = vpack.c.b16 %v2182, %v2174
    %v2559 = vpack.c.b16 %v2191, %v2183
    %v2560 = vpack.c.b16 %v2192, %v2184
    %v2561 = vpack.c.b16 %v2193, %v2185
    %v2562 = vpack.c.b16 %v2194, %v2186
    %v2563 = vpack.c.b16 %v2195, %v2187
    %v2564 = vpack.c.b16 %v2196, %v2188
    %v2565 = vpack.c.b16 %v2197, %v2189
    %v2566 = vpack.c.b16 %v2198, %v2190
    %v2567 = vpack.c.b16 %v2207, %v2199
    %v2568 = vpack.c.b16 %v2208, %v2200
    %v2569 = vpack.c.b16 %v2209, %v2201
    %v2570 = vpack.c.b16 %v2210, %v2202
    %v2571 = vpack.c.b16 %v2211, %v2203
    %v2572 = vpack.c.b16 %v2212, %v2204
    %v2573 = vpack.c.b16 %v2213, %v2205
    %v2574 = vpack.c.b16 %v2214, %v2206
    %v2575 = vpack.c.b16 %v2223, %v2215
    %v2576 = vpack.c.b16 %v2224, %v2216
    %v2577 = vpack.c.b16 %v2225, %v2217
    %v2578 = vpack.c.b16 %v2226, %v2218
    %v2579 = vpack.c.b16 %v2227, %v2219
    %v2580 = vpack.c.b16 %v2228, %v2220
    %v2581 = vpack.c.b16 %v2229, %v2221
    %v2582 = vpack.c.b16 %v2230, %v2222
    %v2583 = vpack.c.b16 %v2239, %v2231
    %v2584 = vpack.c.b16 %v2240, %v2232
    %v2585 = vpack.c.b16 %v2241, %v2233
    %v2586 = vpack.c.b16 %v2242, %v2234
    %v2587 = vpack.c.b16 %v2243, %v2235
    %v2588 = vpack.c.b16 %v2244, %v2236
    %v2589 = vpack.c.b16 %v2245, %v2237
    %v2590 = vpack.c.b16 %v2246, %v2238
    %v2591 = vpack.c.b16 %v2255, %v2247
    %v2592 = vpack.c.b16 %v2256, %v2248
    %v2593 = vpack.c.b16 %v2257, %v2249
    %v2594 = vpack.c.b16 %v2258, %v2250
    %v2595 = vpack.c.b16 %v2259, %v2251
    %v2596 = vpack.c.b16 %v2260, %v2252
    %v2597 = vpack.c.b16 %v2261, %v2253
    %v2598 = vpack.c.b16 %v2262, %v2254
    %v2599 = vpack.c.b16 %v2271, %v2263
    %v2600 = vpack.c.b16 %v2272, %v2264
    %v2601 = vpack.c.b16 %v2273, %v2265
    %v2602 = vpack.c.b16 %v2274, %v2266
    %v2603 = vpack.c.b16 %v2275, %v2267
    %v2604 = vpack.c.b16 %v2276, %v2268
    %v2605 = vpack.c.b16 %v2277, %v2269
    %v2606 = vpack.c.b16 %v2278, %v2270
    %v2607 = vpack.c.b16 %v2287, %v2279
    %v2608 = vpack.c.b16 %v2288, %v2280
    %v2609 = vpack.c.b16 %v2289, %v2281
    %v2610 = vpack.c.b16 %v2290, %v2282
    %v2611 = vpack.c.b16 %v2291, %v2283
    %v2612 = vpack.c.b16 %v2292, %v2284
    %v2613 = vpack.c.b16 %v2293, %v2285
    %v2614 = vpack.c.b16 %v2294, %v2286
    %v2615 = vpack.c.b16 %v2303, %v2295
    %v2616 = vpack.c.b16 %v2304, %v2296
    %v2617 = vpack.c.b16 %v2305, %v2297
    %v2618 = vpack.c.b16 %v2306, %v2298
    %v2619 = vpack.c.b16 %v2307, %v2299
    %v2620 = vpack.c.b16 %v2308, %v2300
    %v2621 = vpack.c.b16 %v2309, %v2301
    %v2622 = vpack.c.b16 %v2310, %v2302
    %v2623 = vpack.c.b16 %v2319, %v2311
    %v2624 = vpack.c.b16 %v2320, %v2312
    %v2625 = vpack.c.b16 %v2321, %v2313
    %v2626 = vpack.c.b16 %v2322, %v2314
    %v2627 = vpack.c.b16 %v2323, %v2315
    %v2628 = vpack.c.b16 %v2324, %v2316
    %v2629 = vpack.c.b16 %v2325, %v2317
    %v2630 = vpack.c.b16 %v2326, %v2318
    %v2631 = vpack.c.b16 %v2335, %v2327
    %v2632 = vpack.c.b16 %v2336, %v2328
    %v2633 = vpack.c.b16 %v2337, %v2329
    %v2634 = vpack.c.b16 %v2338, %v2330
    %v2635 = vpack.c.b16 %v2339, %v2331
    %v2636 = vpack.c.b16 %v2340, %v2332
    %v2637 = vpack.c.b16 %v2341, %v2333
    %v2638 = vpack.c.b16 %v2342, %v2334
    %v2639 = vpack.c.b16 %v2351, %v2343
    %v2640 = vpack.c.b16 %v2352, %v2344
    %v2641 = vpack.c.b16 %v2353, %v2345
    %v2642 = vpack.c.b16 %v2354, %v2346
    %v2643 = vpack.c.b16 %v2355, %v2347
    %v2644 = vpack.c.b16 %v2356, %v2348
    %v2645 = vpack.c.b16 %v2357, %v2349
    %v2646 = vpack.c.b16 %v2358, %v2350
    %v2647 = vpack.c.b16 %v2367, %v2359
    %v2648 = vpack.c.b16 %v2368, %v2360
    %v2649 = vpack.c.b16 %v2369, %v2361
    %v2650 = vpack.c.b16 %v2370, %v2362
    %v2651 = vpack.c.b16 %v2371, %v2363
    %v2652 = vpack.c.b16 %v2372, %v2364
    %v2653 = vpack.c.b16 %v2373, %v2365
    %v2654 = vpack.c.b16 %v2374, %v2366
    %v2655 = vpack.c.b16 %v2383, %v2375
    %v2656 = vpack.c.b16 %v2384, %v2376
    %v2657 = vpack.c.b16 %v2385, %v2377
    %v2658 = vpack.c.b16 %v2386, %v2378
    %v2659 = vpack.c.b16 %v2387, %v2379
    %v2660 = vpack.c.b16 %v2388, %v2380
    %v2661 = vpack.c.b16 %v2389, %v2381
    %v2662 = vpack.c.b16 %v2390, %v2382
    %v2663 = vpack.c.b16 %v2399, %v2391
    %v2664 = vpack.c.b16 %v2400, %v2392
    %v2665 = vpack.c.b16 %v2401, %v2393
    %v2666 = vpack.c.b16 %v2402, %v2394
    %v2667 = vpack.c.b16 %v2403, %v2395
    %v2668 = vpack.c.b16 %v2404, %v2396
    %v2669 = vpack.c.b16 %v2405, %v2397
    %v2670 = vpack.c.b16 %v2406, %v2398
    %v2671 = vpack.c.b16 %v2415, %v2407
    %v2672 = vpack.c.b16 %v2416, %v2408
    %v2673 = vpack.c.b16 %v2417, %v2409
    %v2674 = vpack.c.b16 %v2418, %v2410
    %v2675 = vpack.c.b16 %v2419, %v2411
    %v2676 = vpack.c.b16 %v2420, %v2412
    %v2677 = vpack.c.b16 %v2421, %v2413
    %v2678 = vpack.c.b16 %v2422, %v2414
    %2935 = vmatprep.subr.bf16.mxu0 %v2480
    %2936 = vmatpush1.bf16.msra.mxu0 %v2479
    %2937 = vmatprep.subr.bf16.mxu0 %v2472
    %2938 = vmatpush1.bf16.msra.mxu0 %v2471
    %2939 = vmatprep.subr.bf16.mxu0 %v2464
    %2940 = vmatpush1.bf16.msra.mxu0 %v2463
    %2941 = vmatprep.subr.bf16.mxu0 %v2456
    %2942 = vmatpush1.bf16.msra.mxu0 %v2455
    %2943 = vmatprep.subr.bf16.mxu0 %v2448
    %2944 = vmatpush1.bf16.msra.mxu0 %v2447
    %2945 = vmatprep.subr.bf16.mxu0 %v2440
    %2946 = vmatpush1.bf16.msra.mxu0 %v2439
    %2947 = vmatprep.subr.bf16.mxu0 %v2432
    %2948 = vmatpush1.bf16.msra.mxu0 %v2431
    %2949 = vmatprep.subr.bf16.mxu0 %v2424
    %2950 = vmatpush1.bf16.msra.mxu0 %v2423
    %2951 = vmatprep.subr.bf16.mxu0 %v2544
    %2952 = vmatpush2.bf16.msra.mxu0 %v2543
    %2953 = vmatprep.subr.bf16.mxu0 %v2536
    %2954 = vmatpush2.bf16.msra.mxu0 %v2535
    %2955 = vmatprep.subr.bf16.mxu0 %v2528
    %2956 = vmatpush2.bf16.msra.mxu0 %v2527
    %2957 = vmatprep.subr.bf16.mxu0 %v2520
    %2958 = vmatpush2.bf16.msra.mxu0 %v2519
    %2959 = vmatprep.subr.bf16.mxu0 %v2512
    %2960 = vmatpush2.bf16.msra.mxu0 %v2511
    %2961 = vmatprep.subr.bf16.mxu0 %v2504
    %2962 = vmatpush2.bf16.msra.mxu0 %v2503
    %2963 = vmatprep.subr.bf16.mxu0 %v2496
    %2964 = vmatpush2.bf16.msra.mxu0 %v2495
    %2965 = vmatprep.subr.bf16.mxu0 %v2488
    %2966 = vmatpush2.bf16.msra.mxu0 %v2487
    %2967 = vmatprep.mubr.bf16.mxu0 %v1611
    %2968 = vmatmul.mubr.bf16.gmra.mxu0 %v1610
    %v2969 = vpop.f32.mrf.mxu0
    %v2970 = vadd.f32 %v1618, %v2969
    %v2971 = vpop.f32.mrf.mxu0
    %v2972 = vadd.f32 %v1622, %v2971
    %v2973 = vpop.f32.mrf.mxu0
    %v2974 = vpop.f32.mrf.mxu0
    %2975 = vdwg.mxu0
    %2976 = vmatprep.subr.bf16.mxu0 %v2608
    %2977 = vmatpush1.bf16.msra.mxu0 %v2607
    %2978 = vmatprep.subr.bf16.mxu0 %v2600
    %2979 = vmatpush1.bf16.msra.mxu0 %v2599
    %2980 = vmatprep.subr.bf16.mxu0 %v2592
    %2981 = vmatpush1.bf16.msra.mxu0 %v2591
    %2982 = vmatprep.subr.bf16.mxu0 %v2584
    %2983 = vmatpush1.bf16.msra.mxu0 %v2583
    %2984 = vmatprep.subr.bf16.mxu0 %v2576
    %2985 = vmatpush1.bf16.msra.mxu0 %v2575
    %2986 = vmatprep.subr.bf16.mxu0 %v2568
    %2987 = vmatpush1.bf16.msra.mxu0 %v2567
    %2988 = vmatprep.subr.bf16.mxu0 %v2560
    %2989 = vmatpush1.bf16.msra.mxu0 %v2559
    %2990 = vmatprep.subr.bf16.mxu0 %v2552
    %2991 = vmatpush1.bf16.msra.mxu0 %v2551
    %2992 = vmatprep.subr.bf16.mxu0 %v2672
    %2993 = vmatpush2.bf16.msra.mxu0 %v2671
    %2994 = vmatprep.subr.bf16.mxu0 %v2664
    %2995 = vmatpush2.bf16.msra.mxu0 %v2663
    %2996 = vmatprep.subr.bf16.mxu0 %v2656
    %2997 = vmatpush2.bf16.msra.mxu0 %v2655
    %2998 = vmatprep.subr.bf16.mxu0 %v2648
    %2999 = vmatpush2.bf16.msra.mxu0 %v2647
    %3000 = vmatprep.subr.bf16.mxu0 %v2640
    %3001 = vmatpush2.bf16.msra.mxu0 %v2639
    %3002 = vmatprep.subr.bf16.mxu0 %v2632
    %3003 = vmatpush2.bf16.msra.mxu0 %v2631
    %3004 = vmatprep.subr.bf16.mxu0 %v2624
    %3005 = vmatpush2.bf16.msra.mxu0 %v2623
    %3006 = vmatprep.subr.bf16.mxu0 %v2616
    %3007 = vmatpush2.bf16.msra.mxu0 %v2615
    %3008 = vmatprep.mubr.bf16.mxu0 %v1613
    %3009 = vmatmul.mubr.bf16.gmra.mxu0 %v1612
    %v3010 = vpop.f32.mrf.mxu0
    %v3011 = vadd.f32 %v2970, %v3010
    %v3012 = vpop.f32.mrf.mxu0
    %v3013 = vadd.f32 %v2972, %v3012
    %v3014 = vpop.f32.mrf.mxu0
    %v3015 = vpop.f32.mrf.mxu0
    %3016 = vdwg.mxu0
    %3017 = vmatprep.subr.bf16.mxu0 %v2482
    %3018 = vmatpush1.bf16.msra.mxu0 %v2481
    %3019 = vmatprep.subr.bf16.mxu0 %v2474
    %3020 = vmatpush1.bf16.msra.mxu0 %v2473
    %3021 = vmatprep.subr.bf16.mxu0 %v2466
    %3022 = vmatpush1.bf16.msra.mxu0 %v2465
    %3023 = vmatprep.subr.bf16.mxu0 %v2458
    %3024 = vmatpush1.bf16.msra.mxu0 %v2457
    %3025 = vmatprep.subr.bf16.mxu0 %v2450
    %3026 = vmatpush1.bf16.msra.mxu0 %v2449
    %3027 = vmatprep.subr.bf16.mxu0 %v2442
    %3028 = vmatpush1.bf16.msra.mxu0 %v2441
    %3029 = vmatprep.subr.bf16.mxu0 %v2434
    %3030 = vmatpush1.bf16.msra.mxu0 %v2433
    %3031 = vmatprep.subr.bf16.mxu0 %v2426
    %3032 = vmatpush1.bf16.msra.mxu0 %v2425
    %3033 = vmatprep.subr.bf16.mxu0 %v2546
    %3034 = vmatpush2.bf16.msra.mxu0 %v2545
    %3035 = vmatprep.subr.bf16.mxu0 %v2538
    %3036 = vmatpush2.bf16.msra.mxu0 %v2537
    %3037 = vmatprep.subr.bf16.mxu0 %v2530
    %3038 = vmatpush2.bf16.msra.mxu0 %v2529
    %3039 = vmatprep.subr.bf16.mxu0 %v2522
    %3040 = vmatpush2.bf16.msra.mxu0 %v2521
    %3041 = vmatprep.subr.bf16.mxu0 %v2514
    %3042 = vmatpush2.bf16.msra.mxu0 %v2513
    %3043 = vmatprep.subr.bf16.mxu0 %v2506
    %3044 = vmatpush2.bf16.msra.mxu0 %v2505
    %3045 = vmatprep.subr.bf16.mxu0 %v2498
    %3046 = vmatpush2.bf16.msra.mxu0 %v2497
    %3047 = vmatprep.subr.bf16.mxu0 %v2490
    %3048 = vmatpush2.bf16.msra.mxu0 %v2489
    %3049 = vmatprep.mubr.bf16.mxu0 %v1611
    %3050 = vmatmul.mubr.bf16.gmra.mxu0 %v1610
    %v3051 = vpop.f32.mrf.mxu0
    %v3052 = vadd.f32 %v1626, %v3051
    %v3053 = vpop.f32.mrf.mxu0
    %v3054 = vadd.f32 %v1630, %v3053
    %v3055 = vpop.f32.mrf.mxu0
    %v3056 = vpop.f32.mrf.mxu0
    %3057 = vdwg.mxu0
    %3058 = vmatprep.subr.bf16.mxu0 %v2610
    %3059 = vmatpush1.bf16.msra.mxu0 %v2609
    %3060 = vmatprep.subr.bf16.mxu0 %v2602
    %3061 = vmatpush1.bf16.msra.mxu0 %v2601
    %3062 = vmatprep.subr.bf16.mxu0 %v2594
    %3063 = vmatpush1.bf16.msra.mxu0 %v2593
    %3064 = vmatprep.subr.bf16.mxu0 %v2586
    %3065 = vmatpush1.bf16.msra.mxu0 %v2585
    %3066 = vmatprep.subr.bf16.mxu0 %v2578
    %3067 = vmatpush1.bf16.msra.mxu0 %v2577
    %3068 = vmatprep.subr.bf16.mxu0 %v2570
    %3069 = vmatpush1.bf16.msra.mxu0 %v2569
    %3070 = vmatprep.subr.bf16.mxu0 %v2562
    %3071 = vmatpush1.bf16.msra.mxu0 %v2561
    %3072 = vmatprep.subr.bf16.mxu0 %v2554
    %3073 = vmatpush1.bf16.msra.mxu0 %v2553
    %3074 = vmatprep.subr.bf16.mxu0 %v2674
    %3075 = vmatpush2.bf16.msra.mxu0 %v2673
    %3076 = vmatprep.subr.bf16.mxu0 %v2666
    %3077 = vmatpush2.bf16.msra.mxu0 %v2665
    %3078 = vmatprep.subr.bf16.mxu0 %v2658
    %3079 = vmatpush2.bf16.msra.mxu0 %v2657
    %3080 = vmatprep.subr.bf16.mxu0 %v2650
    %3081 = vmatpush2.bf16.msra.mxu0 %v2649
    %3082 = vmatprep.subr.bf16.mxu0 %v2642
    %3083 = vmatpush2.bf16.msra.mxu0 %v2641
    %3084 = vmatprep.subr.bf16.mxu0 %v2634
    %3085 = vmatpush2.bf16.msra.mxu0 %v2633
    %3086 = vmatprep.subr.bf16.mxu0 %v2626
    %3087 = vmatpush2.bf16.msra.mxu0 %v2625
    %3088 = vmatprep.subr.bf16.mxu0 %v2618
    %3089 = vmatpush2.bf16.msra.mxu0 %v2617
    %3090 = vmatprep.mubr.bf16.mxu0 %v1613
    %3091 = vmatmul.mubr.bf16.gmra.mxu0 %v1612
    %v3092 = vpop.f32.mrf.mxu0
    %v3093 = vadd.f32 %v3052, %v3092
    %v3094 = vpop.f32.mrf.mxu0
    %v3095 = vadd.f32 %v3054, %v3094
    %v3096 = vpop.f32.mrf.mxu0
    %v3097 = vpop.f32.mrf.mxu0
    %3098 = vdwg.mxu0
    %3099 = vmatprep.subr.bf16.mxu0 %v2484
    %3100 = vmatpush1.bf16.msra.mxu0 %v2483
    %3101 = vmatprep.subr.bf16.mxu0 %v2476
    %3102 = vmatpush1.bf16.msra.mxu0 %v2475
    %3103 = vmatprep.subr.bf16.mxu0 %v2468
    %3104 = vmatpush1.bf16.msra.mxu0 %v2467
    %3105 = vmatprep.subr.bf16.mxu0 %v2460
    %3106 = vmatpush1.bf16.msra.mxu0 %v2459
    %3107 = vmatprep.subr.bf16.mxu0 %v2452
    %3108 = vmatpush1.bf16.msra.mxu0 %v2451
    %3109 = vmatprep.subr.bf16.mxu0 %v2444
    %3110 = vmatpush1.bf16.msra.mxu0 %v2443
    %3111 = vmatprep.subr.bf16.mxu0 %v2436
    %3112 = vmatpush1.bf16.msra.mxu0 %v2435
    %3113 = vmatprep.subr.bf16.mxu0 %v2428
    %3114 = vmatpush1.bf16.msra.mxu0 %v2427
    %3115 = vmatprep.subr.bf16.mxu0 %v2548
    %3116 = vmatpush2.bf16.msra.mxu0 %v2547
    %3117 = vmatprep.subr.bf16.mxu0 %v2540
    %3118 = vmatpush2.bf16.msra.mxu0 %v2539
    %3119 = vmatprep.subr.bf16.mxu0 %v2532
    %3120 = vmatpush2.bf16.msra.mxu0 %v2531
    %3121 = vmatprep.subr.bf16.mxu0 %v2524
    %3122 = vmatpush2.bf16.msra.mxu0 %v2523
    %3123 = vmatprep.subr.bf16.mxu0 %v2516
    %3124 = vmatpush2.bf16.msra.mxu0 %v2515
    %3125 = vmatprep.subr.bf16.mxu0 %v2508
    %3126 = vmatpush2.bf16.msra.mxu0 %v2507
    %3127 = vmatprep.subr.bf16.mxu0 %v2500
    %3128 = vmatpush2.bf16.msra.mxu0 %v2499
    %3129 = vmatprep.subr.bf16.mxu0 %v2492
    %3130 = vmatpush2.bf16.msra.mxu0 %v2491
    %3131 = vmatprep.mubr.bf16.mxu0 %v1611
    %3132 = vmatmul.mubr.bf16.gmra.mxu0 %v1610
    %v3133 = vpop.f32.mrf.mxu0
    %v3134 = vadd.f32 %v1634, %v3133
    %v3135 = vpop.f32.mrf.mxu0
    %v3136 = vadd.f32 %v1638, %v3135
    %v3137 = vpop.f32.mrf.mxu0
    %v3138 = vpop.f32.mrf.mxu0
    %3139 = vdwg.mxu0
    %3140 = vmatprep.subr.bf16.mxu0 %v2612
    %3141 = vmatpush1.bf16.msra.mxu0 %v2611
    %3142 = vmatprep.subr.bf16.mxu0 %v2604
    %3143 = vmatpush1.bf16.msra.mxu0 %v2603
    %3144 = vmatprep.subr.bf16.mxu0 %v2596
    %3145 = vmatpush1.bf16.msra.mxu0 %v2595
    %3146 = vmatprep.subr.bf16.mxu0 %v2588
    %3147 = vmatpush1.bf16.msra.mxu0 %v2587
    %3148 = vmatprep.subr.bf16.mxu0 %v2580
    %3149 = vmatpush1.bf16.msra.mxu0 %v2579
    %3150 = vmatprep.subr.bf16.mxu0 %v2572
    %3151 = vmatpush1.bf16.msra.mxu0 %v2571
    %3152 = vmatprep.subr.bf16.mxu0 %v2564
    %3153 = vmatpush1.bf16.msra.mxu0 %v2563
    %3154 = vmatprep.subr.bf16.mxu0 %v2556
    %3155 = vmatpush1.bf16.msra.mxu0 %v2555
    %3156 = vmatprep.subr.bf16.mxu0 %v2676
    %3157 = vmatpush2.bf16.msra.mxu0 %v2675
    %3158 = vmatprep.subr.bf16.mxu0 %v2668
    %3159 = vmatpush2.bf16.msra.mxu0 %v2667
    %3160 = vmatprep.subr.bf16.mxu0 %v2660
    %3161 = vmatpush2.bf16.msra.mxu0 %v2659
    %3162 = vmatprep.subr.bf16.mxu0 %v2652
    %3163 = vmatpush2.bf16.msra.mxu0 %v2651
    %3164 = vmatprep.subr.bf16.mxu0 %v2644
    %3165 = vmatpush2.bf16.msra.mxu0 %v2643
    %3166 = vmatprep.subr.bf16.mxu0 %v2636
    %3167 = vmatpush2.bf16.msra.mxu0 %v2635
    %3168 = vmatprep.subr.bf16.mxu0 %v2628
    %3169 = vmatpush2.bf16.msra.mxu0 %v2627
    %3170 = vmatprep.subr.bf16.mxu0 %v2620
    %3171 = vmatpush2.bf16.msra.mxu0 %v2619
    %3172 = vmatprep.mubr.bf16.mxu0 %v1613
    %3173 = vmatmul.mubr.bf16.gmra.mxu0 %v1612
    %v3174 = vpop.f32.mrf.mxu0
    %v3175 = vadd.f32 %v3134, %v3174
    %v3176 = vpop.f32.mrf.mxu0
    %v3177 = vadd.f32 %v3136, %v3176
    %v3178 = vpop.f32.mrf.mxu0
    %v3179 = vpop.f32.mrf.mxu0
    %3180 = vdwg.mxu0
    %3181 = vmatprep.subr.bf16.mxu0 %v2486
    %3182 = vmatpush1.bf16.msra.mxu0 %v2485
    %3183 = vmatprep.subr.bf16.mxu0 %v2478
    %3184 = vmatpush1.bf16.msra.mxu0 %v2477
    %3185 = vmatprep.subr.bf16.mxu0 %v2470
    %3186 = vmatpush1.bf16.msra.mxu0 %v2469
    %3187 = vmatprep.subr.bf16.mxu0 %v2462
    %3188 = vmatpush1.bf16.msra.mxu0 %v2461
    %3189 = vmatprep.subr.bf16.mxu0 %v2454
    %3190 = vmatpush1.bf16.msra.mxu0 %v2453
    %3191 = vmatprep.subr.bf16.mxu0 %v2446
    %3192 = vmatpush1.bf16.msra.mxu0 %v2445
    %3193 = vmatprep.subr.bf16.mxu0 %v2438
    %3194 = vmatpush1.bf16.msra.mxu0 %v2437
    %3195 = vmatprep.subr.bf16.mxu0 %v2430
    %3196 = vmatpush1.bf16.msra.mxu0 %v2429
    %3197 = vmatprep.subr.bf16.mxu0 %v2550
    %3198 = vmatpush2.bf16.msra.mxu0 %v2549
    %3199 = vmatprep.subr.bf16.mxu0 %v2542
    %3200 = vmatpush2.bf16.msra.mxu0 %v2541
    %3201 = vmatprep.subr.bf16.mxu0 %v2534
    %3202 = vmatpush2.bf16.msra.mxu0 %v2533
    %3203 = vmatprep.subr.bf16.mxu0 %v2526
    %3204 = vmatpush2.bf16.msra.mxu0 %v2525
    %3205 = vmatprep.subr.bf16.mxu0 %v2518
    %3206 = vmatpush2.bf16.msra.mxu0 %v2517
    %3207 = vmatprep.subr.bf16.mxu0 %v2510
    %3208 = vmatpush2.bf16.msra.mxu0 %v2509
    %3209 = vmatprep.subr.bf16.mxu0 %v2502
    %3210 = vmatpush2.bf16.msra.mxu0 %v2501
    %3211 = vmatprep.subr.bf16.mxu0 %v2494
    %3212 = vmatpush2.bf16.msra.mxu0 %v2493
    %3213 = vmatprep.mubr.bf16.mxu0 %v1611
    %3214 = vmatmul.mubr.bf16.gmra.mxu0 %v1610
    %v3215 = vpop.f32.mrf.mxu0
    %v3216 = vadd.f32 %v1642, %v3215
    %v3217 = vpop.f32.mrf.mxu0
    %v3218 = vadd.f32 %v1646, %v3217
    %v3219 = vpop.f32.mrf.mxu0
    %v3220 = vpop.f32.mrf.mxu0
    %3221 = vdwg.mxu0
    %3222 = vmatprep.subr.bf16.mxu0 %v2614
    %3223 = vmatpush1.bf16.msra.mxu0 %v2613
    %3224 = vmatprep.subr.bf16.mxu0 %v2606
    %3225 = vmatpush1.bf16.msra.mxu0 %v2605
    %3226 = vmatprep.subr.bf16.mxu0 %v2598
    %3227 = vmatpush1.bf16.msra.mxu0 %v2597
    %3228 = vmatprep.subr.bf16.mxu0 %v2590
    %3229 = vmatpush1.bf16.msra.mxu0 %v2589
    %3230 = vmatprep.subr.bf16.mxu0 %v2582
    %3231 = vmatpush1.bf16.msra.mxu0 %v2581
    %3232 = vmatprep.subr.bf16.mxu0 %v2574
    %3233 = vmatpush1.bf16.msra.mxu0 %v2573
    %3234 = vmatprep.subr.bf16.mxu0 %v2566
    %3235 = vmatpush1.bf16.msra.mxu0 %v2565
    %3236 = vmatprep.subr.bf16.mxu0 %v2558
    %3237 = vmatpush1.bf16.msra.mxu0 %v2557
    %3238 = vmatprep.subr.bf16.mxu0 %v2678
    %3239 = vmatpush2.bf16.msra.mxu0 %v2677
    %3240 = vmatprep.subr.bf16.mxu0 %v2670
    %3241 = vmatpush2.bf16.msra.mxu0 %v2669
    %3242 = vmatprep.subr.bf16.mxu0 %v2662
    %3243 = vmatpush2.bf16.msra.mxu0 %v2661
    %3244 = vmatprep.subr.bf16.mxu0 %v2654
    %3245 = vmatpush2.bf16.msra.mxu0 %v2653
    %3246 = vmatprep.subr.bf16.mxu0 %v2646
    %3247 = vmatpush2.bf16.msra.mxu0 %v2645
    %3248 = vmatprep.subr.bf16.mxu0 %v2638
    %3249 = vmatpush2.bf16.msra.mxu0 %v2637
    %3250 = vmatprep.subr.bf16.mxu0 %v2630
    %3251 = vmatpush2.bf16.msra.mxu0 %v2629
    %3252 = vmatprep.subr.bf16.mxu0 %v2622
    %3253 = vmatpush2.bf16.msra.mxu0 %v2621
    %3254 = vmatprep.mubr.bf16.mxu0 %v1613
    %3255 = vmatmul.mubr.bf16.gmra.mxu0 %v1612
    %v3256 = vpop.f32.mrf.mxu0
    %v3257 = vadd.f32 %v3216, %v3256
    %v3258 = vpop.f32.mrf.mxu0
    %v3259 = vadd.f32 %v3218, %v3258
    %v3260 = vpop.f32.mrf.mxu0
    %v3261 = vpop.f32.mrf.mxu0
    %3262 = vdwg.mxu0
    %s3263 = scalar_lea.vmem [#allocation15], 37
    %v3264 = vld [vmem:[%s3263] ss:$4 sm:$0xff]
    %s3265 = scalar_lea.vmem [#allocation15], 38
    %v3266 = vld [vmem:[%s3265] ss:$4 sm:$0xff]
    %v3267 = vrot.slane %v3011, 4
    %v3268 = vadd.f32 %v3011, %v3267
    %v3269 = vrot.slane %v3268, 2
    %v3270 = vadd.f32 %v3268, %v3269
    %v3271 = vrot.slane %v3270, 1
    %v3272 = vadd.f32 %v3270, %v3271
    %v3273 = vrot.slane %v3013, 4
    %v3274 = vadd.f32 %v3013, %v3273
    %v3275 = vrot.slane %v3274, 2
    %v3276 = vadd.f32 %v3274, %v3275
    %v3277 = vrot.slane %v3276, 1
    %v3278 = vadd.f32 %v3276, %v3277
    %v3279 = vrot.slane %v3093, 4
    %v3280 = vadd.f32 %v3093, %v3279
    %v3281 = vrot.slane %v3280, 2
    %v3282 = vadd.f32 %v3280, %v3281
    %v3283 = vrot.slane %v3282, 1
    %v3284 = vadd.f32 %v3282, %v3283
    %v3285 = vrot.slane %v3095, 4
    %v3286 = vadd.f32 %v3095, %v3285
    %v3287 = vrot.slane %v3286, 2
    %v3288 = vadd.f32 %v3286, %v3287
    %v3289 = vrot.slane %v3288, 1
    %v3290 = vadd.f32 %v3288, %v3289
    %v3291 = vrot.slane %v3175, 4
    %v3292 = vadd.f32 %v3175, %v3291
    %v3293 = vrot.slane %v3292, 2
    %v3294 = vadd.f32 %v3292, %v3293
    %v3295 = vrot.slane %v3294, 1
    %v3296 = vadd.f32 %v3294, %v3295
    %v3297 = vrot.slane %v3177, 4
    %v3298 = vadd.f32 %v3177, %v3297
    %v3299 = vrot.slane %v3298, 2
    %v3300 = vadd.f32 %v3298, %v3299
    %v3301 = vrot.slane %v3300, 1
    %v3302 = vadd.f32 %v3300, %v3301
    %v3303 = vrot.slane %v3257, 4
    %v3304 = vadd.f32 %v3257, %v3303
    %v3305 = vrot.slane %v3304, 2
    %v3306 = vadd.f32 %v3304, %v3305
    %v3307 = vrot.slane %v3306, 1
    %v3308 = vadd.f32 %v3306, %v3307
    %v3309 = vrot.slane %v3259, 4
    %v3310 = vadd.f32 %v3259, %v3309
    %v3311 = vrot.slane %v3310, 2
    %v3312 = vadd.f32 %v3310, %v3311
    %v3313 = vrot.slane %v3312, 1
    %v3314 = vadd.f32 %v3312, %v3313
    %v3315 = vmul.f32 %v3272, %v241
    %v3316 = vmul.f32 %v3278, %v241
    %v3317 = vmul.f32 %v3284, %v241
    %v3318 = vmul.f32 %v3290, %v241
    %v3319 = vmul.f32 %v3296, %v241
    %v3320 = vmul.f32 %v3302, %v241
    %v3321 = vmul.f32 %v3308, %v241
    %v3322 = vmul.f32 %v3314, %v241
    %v3323 = vmul.f32 %v3011, %v3011
    %v3324 = vmul.f32 %v3013, %v3013
    %v3325 = vmul.f32 %v3093, %v3093
    %v3326 = vmul.f32 %v3095, %v3095
    %v3327 = vmul.f32 %v3175, %v3175
    %v3328 = vmul.f32 %v3177, %v3177
    %v3329 = vmul.f32 %v3257, %v3257
    %v3330 = vmul.f32 %v3259, %v3259
    %v3331 = vrot.slane %v3323, 4
    %v3332 = vadd.f32 %v3323, %v3331
    %v3333 = vrot.slane %v3332, 2
    %v3334 = vadd.f32 %v3332, %v3333
    %v3335 = vrot.slane %v3334, 1
    %v3336 = vadd.f32 %v3334, %v3335
    %v3337 = vrot.slane %v3324, 4
    %v3338 = vadd.f32 %v3324, %v3337
    %v3339 = vrot.slane %v3338, 2
    %v3340 = vadd.f32 %v3338, %v3339
    %v3341 = vrot.slane %v3340, 1
    %v3342 = vadd.f32 %v3340, %v3341
    %v3343 = vrot.slane %v3325, 4
    %v3344 = vadd.f32 %v3325, %v3343
    %v3345 = vrot.slane %v3344, 2
    %v3346 = vadd.f32 %v3344, %v3345
    %v3347 = vrot.slane %v3346, 1
    %v3348 = vadd.f32 %v3346, %v3347
    %v3349 = vrot.slane %v3326, 4
    %v3350 = vadd.f32 %v3326, %v3349
    %v3351 = vrot.slane %v3350, 2
    %v3352 = vadd.f32 %v3350, %v3351
    %v3353 = vrot.slane %v3352, 1
    %v3354 = vadd.f32 %v3352, %v3353
    %v3355 = vrot.slane %v3327, 4
    %v3356 = vadd.f32 %v3327, %v3355
    %v3357 = vrot.slane %v3356, 2
    %v3358 = vadd.f32 %v3356, %v3357
    %v3359 = vrot.slane %v3358, 1
    %v3360 = vadd.f32 %v3358, %v3359
    %v3361 = vrot.slane %v3328, 4
    %v3362 = vadd.f32 %v3328, %v3361
    %v3363 = vrot.slane %v3362, 2
    %v3364 = vadd.f32 %v3362, %v3363
    %v3365 = vrot.slane %v3364, 1
    %v3366 = vadd.f32 %v3364, %v3365
    %v3367 = vrot.slane %v3329, 4
    %v3368 = vadd.f32 %v3329, %v3367
    %v3369 = vrot.slane %v3368, 2
    %v3370 = vadd.f32 %v3368, %v3369
    %v3371 = vrot.slane %v3370, 1
    %v3372 = vadd.f32 %v3370, %v3371
    %v3373 = vrot.slane %v3330, 4
    %v3374 = vadd.f32 %v3330, %v3373
    %v3375 = vrot.slane %v3374, 2
    %v3376 = vadd.f32 %v3374, %v3375
    %v3377 = vrot.slane %v3376, 1
    %v3378 = vadd.f32 %v3376, %v3377
    %v3379 = vmul.f32 %v3336, %v241
    %v3380 = vmul.f32 %v3342, %v241
    %v3381 = vmul.f32 %v3348, %v241
    %v3382 = vmul.f32 %v3354, %v241
    %v3383 = vmul.f32 %v3360, %v241
    %v3384 = vmul.f32 %v3366, %v241
    %v3385 = vmul.f32 %v3372, %v241
    %v3386 = vmul.f32 %v3378, %v241
    %v3387 = vmul.f32 %v3315, %v3315
    %v3388 = vmul.f32 %v3316, %v3316
    %v3389 = vmul.f32 %v3317, %v3317
    %v3390 = vmul.f32 %v3318, %v3318
    %v3391 = vmul.f32 %v3319, %v3319
    %v3392 = vmul.f32 %v3320, %v3320
    %v3393 = vmul.f32 %v3321, %v3321
    %v3394 = vmul.f32 %v3322, %v3322
    %v3395 = vsub.f32 %v3379, %v3387
    %v3396 = vsub.f32 %v3380, %v3388
    %v3397 = vsub.f32 %v3381, %v3389
    %v3398 = vsub.f32 %v3382, %v3390
    %v3399 = vsub.f32 %v3383, %v3391
    %v3400 = vsub.f32 %v3384, %v3392
    %v3401 = vsub.f32 %v3385, %v3393
    %v3402 = vsub.f32 %v3386, %v3394
    %v3403 = vadd.f32 %v3395, 0.8
    %v3404 = vadd.f32 %v3396, 0.8
    %v3405 = vadd.f32 %v3397, 0.8
    %v3406 = vadd.f32 %v3398, 0.8
    %v3407 = vadd.f32 %v3399, 0.8
    %v3408 = vadd.f32 %v3400, 0.8
    %v3409 = vadd.f32 %v3401, 0.8
    %v3410 = vadd.f32 %v3402, 0.8
    %v3411 = vrsqrt.pop %v3403
    %v3412 = vrsqrt.pop %v3404
    %v3413 = vrsqrt.pop %v3405
    %v3414 = vrsqrt.pop %v3406
    %v3415 = vrsqrt.pop %v3407
    %v3416 = vrsqrt.pop %v3408
    %v3417 = vrsqrt.pop %v3409
    %v3418 = vrsqrt.pop %v3410
    %v3427 = vcombine.low %v3411, %v3412
    %v3428 = vcombine.low %v3413, %v3414
    %v3429 = vcombine.low %v3415, %v3416
    %v3430 = vcombine.low %v3417, %v3418
    %v3432 = vunpack.c.l.s4 1966171168
    %v3433 = vunpack.c.0.s8 %v3432
    %v3434 = vlaneseq
    %v3435 = vshrl.u32 %v3434, 7
    %v3436 = vsub.s32 %v3433, %v3435
    %v3437 = vrot.slane %v3427, %v3436
    %v3439 = vunpack.c.l.s4 1966171168
    %v3440 = vunpack.c.0.s8 %v3439
    %v3441 = vlaneseq
    %v3442 = vshrl.u32 %v3441, 7
    %v3443 = vsub.s32 %v3440, %v3442
    %v3444 = vrot.slane %v3428, %v3443
    %v3446 = vunpack.c.l.s4 1966171168
    %v3447 = vunpack.c.0.s8 %v3446
    %v3448 = vlaneseq
    %v3449 = vshrl.u32 %v3448, 7
    %v3450 = vsub.s32 %v3447, %v3449
    %v3451 = vrot.slane %v3429, %v3450
    %v3453 = vunpack.c.l.s4 1966171168
    %v3454 = vunpack.c.0.s8 %v3453
    %v3455 = vlaneseq
    %v3456 = vshrl.u32 %v3455, 7
    %v3457 = vsub.s32 %v3454, %v3456
    %v3458 = vrot.slane %v3430, %v3457
    %v3459 = vcombine.low %v3437, %v3444
    %v3460 = vcombine.low %v3451, %v3458
    %v3462 = vunpack.c.l.s4 1966171168
    %v3463 = vunpack.c.0.s8 %v3462
    %v3464 = vlaneseq
    %v3465 = vshrl.u32 %v3464, 7
    %v3466 = vsub.s32 %v3463, %v3465
    %v3467 = vrot.slane %v3459, %v3466
    %v3469 = vunpack.c.l.s4 1966171168
    %v3470 = vunpack.c.0.s8 %v3469
    %v3471 = vlaneseq
    %v3472 = vshrl.u32 %v3471, 7
    %v3473 = vsub.s32 %v3470, %v3472
    %v3474 = vrot.slane %v3460, %v3473
    %v3475 = vcombine.low %v3467, %v3474
    %v3477 = vmul.f32 %v3264, %v3475
    %v3479 = vlaneseq
    %v3480 = vshrl.u32 %v3479, 7
    %v3481 = vsub.s32 0, %v3480
    %v3482 = vrot.slane %v3477, %v3481
    %v3483 = vlaneseq
    %v3484 = vshrl.u32 %v3483, 7
    %v3485 = vsub.s32 1, %v3484
    %v3486 = vrot.slane %v3477, %v3485
    %v3487 = vlaneseq
    %v3488 = vshrl.u32 %v3487, 7
    %v3489 = vsub.s32 2, %v3488
    %v3490 = vrot.slane %v3477, %v3489
    %v3491 = vlaneseq
    %v3492 = vshrl.u32 %v3491, 7
    %v3493 = vsub.s32 3, %v3492
    %v3494 = vrot.slane %v3477, %v3493
    %v3495 = vlaneseq
    %v3496 = vshrl.u32 %v3495, 7
    %v3497 = vsub.s32 4, %v3496
    %v3498 = vrot.slane %v3477, %v3497
    %v3499 = vlaneseq
    %v3500 = vshrl.u32 %v3499, 7
    %v3501 = vsub.s32 5, %v3500
    %v3502 = vrot.slane %v3477, %v3501
    %v3503 = vlaneseq
    %v3504 = vshrl.u32 %v3503, 7
    %v3505 = vsub.s32 6, %v3504
    %v3506 = vrot.slane %v3477, %v3505
    %v3507 = vlaneseq
    %v3508 = vshrl.u32 %v3507, 7
    %v3509 = vsub.s32 7, %v3508
    %v3510 = vrot.slane %v3477, %v3509
    %v3519 = vmul.f32 %v3315, %v3482
    %v3520 = vmul.f32 %v3316, %v3486
    %v3521 = vmul.f32 %v3317, %v3490
    %v3522 = vmul.f32 %v3318, %v3494
    %v3523 = vmul.f32 %v3319, %v3498
    %v3524 = vmul.f32 %v3320, %v3502
    %v3525 = vmul.f32 %v3321, %v3506
    %v3526 = vmul.f32 %v3322, %v3510
    %v3535 = vcombine.low %v3519, %v3520
    %v3536 = vcombine.low %v3521, %v3522
    %v3537 = vcombine.low %v3523, %v3524
    %v3538 = vcombine.low %v3525, %v3526
    %v3540 = vunpack.c.l.s4 1966171168
    %v3541 = vunpack.c.0.s8 %v3540
    %v3542 = vlaneseq
    %v3543 = vshrl.u32 %v3542, 7
    %v3544 = vsub.s32 %v3541, %v3543
    %v3545 = vrot.slane %v3535, %v3544
    %v3547 = vunpack.c.l.s4 1966171168
    %v3548 = vunpack.c.0.s8 %v3547
    %v3549 = vlaneseq
    %v3550 = vshrl.u32 %v3549, 7
    %v3551 = vsub.s32 %v3548, %v3550
    %v3552 = vrot.slane %v3536, %v3551
    %v3554 = vunpack.c.l.s4 1966171168
    %v3555 = vunpack.c.0.s8 %v3554
    %v3556 = vlaneseq
    %v3557 = vshrl.u32 %v3556, 7
    %v3558 = vsub.s32 %v3555, %v3557
    %v3559 = vrot.slane %v3537, %v3558
    %v3561 = vunpack.c.l.s4 1966171168
    %v3562 = vunpack.c.0.s8 %v3561
    %v3563 = vlaneseq
    %v3564 = vshrl.u32 %v3563, 7
    %v3565 = vsub.s32 %v3562, %v3564
    %v3566 = vrot.slane %v3538, %v3565
    %v3567 = vcombine.low %v3545, %v3552
    %v3568 = vcombine.low %v3559, %v3566
    %v3570 = vunpack.c.l.s4 1966171168
    %v3571 = vunpack.c.0.s8 %v3570
    %v3572 = vlaneseq
    %v3573 = vshrl.u32 %v3572, 7
    %v3574 = vsub.s32 %v3571, %v3573
    %v3575 = vrot.slane %v3567, %v3574
    %v3577 = vunpack.c.l.s4 1966171168
    %v3578 = vunpack.c.0.s8 %v3577
    %v3579 = vlaneseq
    %v3580 = vshrl.u32 %v3579, 7
    %v3581 = vsub.s32 %v3578, %v3580
    %v3582 = vrot.slane %v3568, %v3581
    %v3583 = vcombine.low %v3575, %v3582
    %v3585 = vsub.f32 %v3266, %v3583
    %v3586 = vmul.f32 %v3011, %v3482
    %v3587 = vmul.f32 %v3013, %v3486
    %v3588 = vmul.f32 %v3093, %v3490
    %v3589 = vmul.f32 %v3095, %v3494
    %v3590 = vmul.f32 %v3175, %v3498
    %v3591 = vmul.f32 %v3177, %v3502
    %v3592 = vmul.f32 %v3257, %v3506
    %v3593 = vmul.f32 %v3259, %v3510
    %v3595 = vlaneseq
    %v3596 = vshrl.u32 %v3595, 7
    %v3597 = vsub.s32 0, %v3596
    %v3598 = vrot.slane %v3585, %v3597
    %v3599 = vlaneseq
    %v3600 = vshrl.u32 %v3599, 7
    %v3601 = vsub.s32 1, %v3600
    %v3602 = vrot.slane %v3585, %v3601
    %v3603 = vlaneseq
    %v3604 = vshrl.u32 %v3603, 7
    %v3605 = vsub.s32 2, %v3604
    %v3606 = vrot.slane %v3585, %v3605
    %v3607 = vlaneseq
    %v3608 = vshrl.u32 %v3607, 7
    %v3609 = vsub.s32 3, %v3608
    %v3610 = vrot.slane %v3585, %v3609
    %v3611 = vlaneseq
    %v3612 = vshrl.u32 %v3611, 7
    %v3613 = vsub.s32 4, %v3612
    %v3614 = vrot.slane %v3585, %v3613
    %v3615 = vlaneseq
    %v3616 = vshrl.u32 %v3615, 7
    %v3617 = vsub.s32 5, %v3616
    %v3618 = vrot.slane %v3585, %v3617
    %v3619 = vlaneseq
    %v3620 = vshrl.u32 %v3619, 7
    %v3621 = vsub.s32 6, %v3620
    %v3622 = vrot.slane %v3585, %v3621
    %v3623 = vlaneseq
    %v3624 = vshrl.u32 %v3623, 7
    %v3625 = vsub.s32 7, %v3624
    %v3626 = vrot.slane %v3585, %v3625
    %v3635 = vadd.f32 %v3586, %v3598
    %v3636 = vadd.f32 %v3587, %v3602
    %v3637 = vadd.f32 %v3588, %v3606
    %v3638 = vadd.f32 %v3589, %v3610
    %v3639 = vadd.f32 %v3590, %v3614
    %v3640 = vadd.f32 %v3591, %v3618
    %v3641 = vadd.f32 %v3592, %v3622
    %v3642 = vadd.f32 %v3593, %v3626
    %vm3643 = vcmp.gt.f32.partialorder %v3635, 0.0
    %vm3644 = vcmp.gt.f32.partialorder %v3636, 0.0
    %vm3645 = vcmp.gt.f32.partialorder %v3637, 0.0
    %vm3646 = vcmp.gt.f32.partialorder %v3638, 0.0
    %vm3647 = vcmp.gt.f32.partialorder %v3639, 0.0
    %vm3648 = vcmp.gt.f32.partialorder %v3640, 0.0
    %vm3649 = vcmp.gt.f32.partialorder %v3641, 0.0
    %vm3650 = vcmp.gt.f32.partialorder %v3642, 0.0
    %v3651 = vmul.f32 %v3635, 0.2
    %v3652 = vmul.f32 %v3636, 0.2
    %v3653 = vmul.f32 %v3637, 0.2
    %v3654 = vmul.f32 %v3638, 0.2
    %v3655 = vmul.f32 %v3639, 0.2
    %v3656 = vmul.f32 %v3640, 0.2
    %v3657 = vmul.f32 %v3641, 0.2
    %v3658 = vmul.f32 %v3642, 0.2
    %v3659 = vsel %vm3643, %v3635, %v3651
    %v3660 = vsel %vm3644, %v3636, %v3652
    %v3661 = vsel %vm3645, %v3637, %v3653
    %v3662 = vsel %vm3646, %v3638, %v3654
    %v3663 = vsel %vm3647, %v3639, %v3655
    %v3664 = vsel %vm3648, %v3640, %v3656
    %v3665 = vsel %vm3649, %v3641, %v3657
    %v3666 = vsel %vm3650, %v3642, %v3658
    %s3667 = smul.u32 4, 128
    %s3668 = smul.u32 %s3667, 7
    %s3669 = sshll.u32 %s3668, 4
    %3670 = dma.done [#allocation3], %s3669
    %v3671 = vld [vmem:[#allocation2] sm:$0xff]
    %v3672 = vld [vmem:[#allocation2 + $0x8] sm:$0xff]
    %v3673 = vld [vmem:[#allocation2 + $0x10] sm:$0xff]
    %v3674 = vld [vmem:[#allocation2 + $0x18] sm:$0xf]
    %v3675 = vld [vmem:[#allocation2 + $0x1c] sm:$0xff]
    %v3676 = vld [vmem:[#allocation2 + $0x24] sm:$0xff]
    %v3677 = vld [vmem:[#allocation2 + $0x2c] sm:$0xff]
    %v3678 = vld [vmem:[#allocation2 + $0x34] sm:$0xf]
    %v3679 = vld [vmem:[#allocation2 + $0x38] sm:$0xff]
    %v3680 = vld [vmem:[#allocation2 + $0x40] sm:$0xff]
    %v3681 = vld [vmem:[#allocation2 + $0x48] sm:$0xff]
    %v3682 = vld [vmem:[#allocation2 + $0x50] sm:$0xf]
    %v3683 = vld [vmem:[#allocation2 + $0x54] sm:$0xff]
    %v3684 = vld [vmem:[#allocation2 + $0x5c] sm:$0xff]
    %v3685 = vld [vmem:[#allocation2 + $0x64] sm:$0xff]
    %v3686 = vld [vmem:[#allocation2 + $0x6c] sm:$0xf]
    %v3687 = vld [vmem:[#allocation2 + $0x70] sm:$0xff]
    %v3688 = vld [vmem:[#allocation2 + $0x78] sm:$0xff]
    %v3689 = vld [vmem:[#allocation2 + $0x80] sm:$0xff]
    %v3690 = vld [vmem:[#allocation2 + $0x88] sm:$0xf]
    %v3691 = vld [vmem:[#allocation2 + $0x8c] sm:$0xff]
    %v3692 = vld [vmem:[#allocation2 + $0x94] sm:$0xff]
    %v3693 = vld [vmem:[#allocation2 + $0x9c] sm:$0xff]
    %v3694 = vld [vmem:[#allocation2 + $0xa4] sm:$0xf]
    %v3695 = vld [vmem:[#allocation2 + $0xa8] sm:$0xff]
    %v3696 = vld [vmem:[#allocation2 + $0xb0] sm:$0xff]
    %v3697 = vld [vmem:[#allocation2 + $0xb8] sm:$0xff]
    %v3698 = vld [vmem:[#allocation2 + $0xc0] sm:$0xf]
    %v3699 = vld [vmem:[#allocation2 + $0xc4] sm:$0xff]
    %v3700 = vld [vmem:[#allocation2 + $0xcc] sm:$0xff]
    %v3701 = vld [vmem:[#allocation2 + $0xd4] sm:$0xff]
    %v3702 = vld [vmem:[#allocation2 + $0xdc] sm:$0xf]
    %v3703 = vld [vmem:[#allocation2 + $0xe0] sm:$0xff]
    %v3704 = vld [vmem:[#allocation2 + $0xe8] sm:$0xff]
    %v3705 = vld [vmem:[#allocation2 + $0xf0] sm:$0xff]
    %v3706 = vld [vmem:[#allocation2 + $0xf8] sm:$0xf]
    %v3707 = vld [vmem:[#allocation2 + $0xfc] sm:$0xff]
    %v3708 = vld [vmem:[#allocation2 + $0x104] sm:$0xff]
    %v3709 = vld [vmem:[#allocation2 + $0x10c] sm:$0xff]
    %v3710 = vld [vmem:[#allocation2 + $0x114] sm:$0xf]
    %v3711 = vld [vmem:[#allocation2 + $0x118] sm:$0xff]
    %v3712 = vld [vmem:[#allocation2 + $0x120] sm:$0xff]
    %v3713 = vld [vmem:[#allocation2 + $0x128] sm:$0xff]
    %v3714 = vld [vmem:[#allocation2 + $0x130] sm:$0xf]
    %v3715 = vld [vmem:[#allocation2 + $0x134] sm:$0xff]
    %v3716 = vld [vmem:[#allocation2 + $0x13c] sm:$0xff]
    %v3717 = vld [vmem:[#allocation2 + $0x144] sm:$0xff]
    %v3718 = vld [vmem:[#allocation2 + $0x14c] sm:$0xf]
    %v3719 = vld [vmem:[#allocation2 + $0x150] sm:$0xff]
    %v3720 = vld [vmem:[#allocation2 + $0x158] sm:$0xff]
    %v3721 = vld [vmem:[#allocation2 + $0x160] sm:$0xff]
    %v3722 = vld [vmem:[#allocation2 + $0x168] sm:$0xf]
    %v3723 = vld [vmem:[#allocation2 + $0x16c] sm:$0xff]
    %v3724 = vld [vmem:[#allocation2 + $0x174] sm:$0xff]
    %v3725 = vld [vmem:[#allocation2 + $0x17c] sm:$0xff]
    %v3726 = vld [vmem:[#allocation2 + $0x184] sm:$0xf]
    %v3727 = vld [vmem:[#allocation2 + $0x188] sm:$0xff]
    %v3728 = vld [vmem:[#allocation2 + $0x190] sm:$0xff]
    %v3729 = vld [vmem:[#allocation2 + $0x198] sm:$0xff]
    %v3730 = vld [vmem:[#allocation2 + $0x1a0] sm:$0xf]
    %v3731 = vld [vmem:[#allocation2 + $0x1a4] sm:$0xff]
    %v3732 = vld [vmem:[#allocation2 + $0x1ac] sm:$0xff]
    %v3733 = vld [vmem:[#allocation2 + $0x1b4] sm:$0xff]
    %v3734 = vld [vmem:[#allocation2 + $0x1bc] sm:$0xf]
    %v3735 = vld [vmem:[#allocation2 + $0x1c0] sm:$0xff]
    %v3736 = vld [vmem:[#allocation2 + $0x1c8] sm:$0xff]
    %v3737 = vld [vmem:[#allocation2 + $0x1d0] sm:$0xff]
    %v3738 = vld [vmem:[#allocation2 + $0x1d8] sm:$0xf]
    %v3739 = vld [vmem:[#allocation2 + $0x1dc] sm:$0xff]
    %v3740 = vld [vmem:[#allocation2 + $0x1e4] sm:$0xff]
    %v3741 = vld [vmem:[#allocation2 + $0x1ec] sm:$0xff]
    %v3742 = vld [vmem:[#allocation2 + $0x1f4] sm:$0xf]
    %v3743 = vld [vmem:[#allocation2 + $0x1f8] sm:$0xff]
    %v3744 = vld [vmem:[#allocation2 + $0x200] sm:$0xff]
    %v3745 = vld [vmem:[#allocation2 + $0x208] sm:$0xff]
    %v3746 = vld [vmem:[#allocation2 + $0x210] sm:$0xf]
    %v3747 = vld [vmem:[#allocation2 + $0x214] sm:$0xff]
    %v3748 = vld [vmem:[#allocation2 + $0x21c] sm:$0xff]
    %v3749 = vld [vmem:[#allocation2 + $0x224] sm:$0xff]
    %v3750 = vld [vmem:[#allocation2 + $0x22c] sm:$0xf]
    %v3751 = vld [vmem:[#allocation2 + $0x230] sm:$0xff]
    %v3752 = vld [vmem:[#allocation2 + $0x238] sm:$0xff]
    %v3753 = vld [vmem:[#allocation2 + $0x240] sm:$0xff]
    %v3754 = vld [vmem:[#allocation2 + $0x248] sm:$0xf]
    %v3755 = vld [vmem:[#allocation2 + $0x24c] sm:$0xff]
    %v3756 = vld [vmem:[#allocation2 + $0x254] sm:$0xff]
    %v3757 = vld [vmem:[#allocation2 + $0x25c] sm:$0xff]
    %v3758 = vld [vmem:[#allocation2 + $0x264] sm:$0xf]
    %v3759 = vld [vmem:[#allocation2 + $0x268] sm:$0xff]
    %v3760 = vld [vmem:[#allocation2 + $0x270] sm:$0xff]
    %v3761 = vld [vmem:[#allocation2 + $0x278] sm:$0xff]
    %v3762 = vld [vmem:[#allocation2 + $0x280] sm:$0xf]
    %v3763 = vld [vmem:[#allocation2 + $0x284] sm:$0xff]
    %v3764 = vld [vmem:[#allocation2 + $0x28c] sm:$0xff]
    %v3765 = vld [vmem:[#allocation2 + $0x294] sm:$0xff]
    %v3766 = vld [vmem:[#allocation2 + $0x29c] sm:$0xf]
    %v3767 = vld [vmem:[#allocation2 + $0x2a0] sm:$0xff]
    %v3768 = vld [vmem:[#allocation2 + $0x2a8] sm:$0xff]
    %v3769 = vld [vmem:[#allocation2 + $0x2b0] sm:$0xff]
    %v3770 = vld [vmem:[#allocation2 + $0x2b8] sm:$0xf]
    %v3771 = vld [vmem:[#allocation2 + $0x2bc] sm:$0xff]
    %v3772 = vld [vmem:[#allocation2 + $0x2c4] sm:$0xff]
    %v3773 = vld [vmem:[#allocation2 + $0x2cc] sm:$0xff]
    %v3774 = vld [vmem:[#allocation2 + $0x2d4] sm:$0xf]
    %v3775 = vld [vmem:[#allocation2 + $0x2d8] sm:$0xff]
    %v3776 = vld [vmem:[#allocation2 + $0x2e0] sm:$0xff]
    %v3777 = vld [vmem:[#allocation2 + $0x2e8] sm:$0xff]
    %v3778 = vld [vmem:[#allocation2 + $0x2f0] sm:$0xf]
    %v3779 = vld [vmem:[#allocation2 + $0x2f4] sm:$0xff]
    %v3780 = vld [vmem:[#allocation2 + $0x2fc] sm:$0xff]
    %v3781 = vld [vmem:[#allocation2 + $0x304] sm:$0xff]
    %v3782 = vld [vmem:[#allocation2 + $0x30c] sm:$0xf]
    %v3783 = vld [vmem:[#allocation2 + $0x310] sm:$0xff]
    %v3784 = vld [vmem:[#allocation2 + $0x318] sm:$0xff]
    %v3785 = vld [vmem:[#allocation2 + $0x320] sm:$0xff]
    %v3786 = vld [vmem:[#allocation2 + $0x328] sm:$0xf]
    %v3787 = vld [vmem:[#allocation2 + $0x32c] sm:$0xff]
    %v3788 = vld [vmem:[#allocation2 + $0x334] sm:$0xff]
    %v3789 = vld [vmem:[#allocation2 + $0x33c] sm:$0xff]
    %v3790 = vld [vmem:[#allocation2 + $0x344] sm:$0xf]
    %v3791 = vld [vmem:[#allocation2 + $0x348] sm:$0xff]
    %v3792 = vld [vmem:[#allocation2 + $0x350] sm:$0xff]
    %v3793 = vld [vmem:[#allocation2 + $0x358] sm:$0xff]
    %v3794 = vld [vmem:[#allocation2 + $0x360] sm:$0xf]
    %v3795 = vld [vmem:[#allocation2 + $0x364] sm:$0xff]
    %v3796 = vld [vmem:[#allocation2 + $0x36c] sm:$0xff]
    %v3797 = vld [vmem:[#allocation2 + $0x374] sm:$0xff]
    %v3798 = vld [vmem:[#allocation2 + $0x37c] sm:$0xf]
    %v3799 = vld [vmem:[#allocation2 + $0x380] sm:$0xff]
    %v3800 = vld [vmem:[#allocation2 + $0x388] sm:$0xff]
    %v3801 = vld [vmem:[#allocation2 + $0x390] sm:$0xff]
    %v3802 = vld [vmem:[#allocation2 + $0x398] sm:$0xf]
    %v3803 = vld [vmem:[#allocation2 + $0x39c] sm:$0xff]
    %v3804 = vld [vmem:[#allocation2 + $0x3a4] sm:$0xff]
    %v3805 = vld [vmem:[#allocation2 + $0x3ac] sm:$0xff]
    %v3806 = vld [vmem:[#allocation2 + $0x3b4] sm:$0xf]
    %v3807 = vld [vmem:[#allocation2 + $0x3b8] sm:$0xff]
    %v3808 = vld [vmem:[#allocation2 + $0x3c0] sm:$0xff]
    %v3809 = vld [vmem:[#allocation2 + $0x3c8] sm:$0xff]
    %v3810 = vld [vmem:[#allocation2 + $0x3d0] sm:$0xf]
    %v3811 = vld [vmem:[#allocation2 + $0x3d4] sm:$0xff]
    %v3812 = vld [vmem:[#allocation2 + $0x3dc] sm:$0xff]
    %v3813 = vld [vmem:[#allocation2 + $0x3e4] sm:$0xff]
    %v3814 = vld [vmem:[#allocation2 + $0x3ec] sm:$0xf]
    %v3815 = vld [vmem:[#allocation2 + $0x3f0] sm:$0xff]
    %v3816 = vld [vmem:[#allocation2 + $0x3f8] sm:$0xff]
    %v3817 = vld [vmem:[#allocation2 + $0x400] sm:$0xff]
    %v3818 = vld [vmem:[#allocation2 + $0x408] sm:$0xf]
    %v3819 = vld [vmem:[#allocation2 + $0x40c] sm:$0xff]
    %v3820 = vld [vmem:[#allocation2 + $0x414] sm:$0xff]
    %v3821 = vld [vmem:[#allocation2 + $0x41c] sm:$0xff]
    %v3822 = vld [vmem:[#allocation2 + $0x424] sm:$0xf]
    %v3823 = vld [vmem:[#allocation2 + $0x428] sm:$0xff]
    %v3824 = vld [vmem:[#allocation2 + $0x430] sm:$0xff]
    %v3825 = vld [vmem:[#allocation2 + $0x438] sm:$0xff]
    %v3826 = vld [vmem:[#allocation2 + $0x440] sm:$0xf]
    %v3827 = vld [vmem:[#allocation2 + $0x444] sm:$0xff]
    %v3828 = vld [vmem:[#allocation2 + $0x44c] sm:$0xff]
    %v3829 = vld [vmem:[#allocation2 + $0x454] sm:$0xff]
    %v3830 = vld [vmem:[#allocation2 + $0x45c] sm:$0xf]
    %v3831 = vld [vmem:[#allocation2 + $0x460] sm:$0xff]
    %v3832 = vld [vmem:[#allocation2 + $0x468] sm:$0xff]
    %v3833 = vld [vmem:[#allocation2 + $0x470] sm:$0xff]
    %v3834 = vld [vmem:[#allocation2 + $0x478] sm:$0xf]
    %v3835 = vld [vmem:[#allocation2 + $0x47c] sm:$0xff]
    %v3836 = vld [vmem:[#allocation2 + $0x484] sm:$0xff]
    %v3837 = vld [vmem:[#allocation2 + $0x48c] sm:$0xff]
    %v3838 = vld [vmem:[#allocation2 + $0x494] sm:$0xf]
    %v3839 = vld [vmem:[#allocation2 + $0x498] sm:$0xff]
    %v3840 = vld [vmem:[#allocation2 + $0x4a0] sm:$0xff]
    %v3841 = vld [vmem:[#allocation2 + $0x4a8] sm:$0xff]
    %v3842 = vld [vmem:[#allocation2 + $0x4b0] sm:$0xf]
    %v3843 = vld [vmem:[#allocation2 + $0x4b4] sm:$0xff]
    %v3844 = vld [vmem:[#allocation2 + $0x4bc] sm:$0xff]
    %v3845 = vld [vmem:[#allocation2 + $0x4c4] sm:$0xff]
    %v3846 = vld [vmem:[#allocation2 + $0x4cc] sm:$0xf]
    %v3847 = vld [vmem:[#allocation2 + $0x4d0] sm:$0xff]
    %v3848 = vld [vmem:[#allocation2 + $0x4d8] sm:$0xff]
    %v3849 = vld [vmem:[#allocation2 + $0x4e0] sm:$0xff]
    %v3850 = vld [vmem:[#allocation2 + $0x4e8] sm:$0xf]
    %v3851 = vld [vmem:[#allocation2 + $0x4ec] sm:$0xff]
    %v3852 = vld [vmem:[#allocation2 + $0x4f4] sm:$0xff]
    %v3853 = vld [vmem:[#allocation2 + $0x4fc] sm:$0xff]
    %v3854 = vld [vmem:[#allocation2 + $0x504] sm:$0xf]
    %v3855 = vld [vmem:[#allocation2 + $0x508] sm:$0xff]
    %v3856 = vld [vmem:[#allocation2 + $0x510] sm:$0xff]
    %v3857 = vld [vmem:[#allocation2 + $0x518] sm:$0xff]
    %v3858 = vld [vmem:[#allocation2 + $0x520] sm:$0xf]
    %v3859 = vld [vmem:[#allocation2 + $0x524] sm:$0xff]
    %v3860 = vld [vmem:[#allocation2 + $0x52c] sm:$0xff]
    %v3861 = vld [vmem:[#allocation2 + $0x534] sm:$0xff]
    %v3862 = vld [vmem:[#allocation2 + $0x53c] sm:$0xf]
    %v3863 = vld [vmem:[#allocation2 + $0x540] sm:$0xff]
    %v3864 = vld [vmem:[#allocation2 + $0x548] sm:$0xff]
    %v3865 = vld [vmem:[#allocation2 + $0x550] sm:$0xff]
    %v3866 = vld [vmem:[#allocation2 + $0x558] sm:$0xf]
    %v3867 = vld [vmem:[#allocation2 + $0x55c] sm:$0xff]
    %v3868 = vld [vmem:[#allocation2 + $0x564] sm:$0xff]
    %v3869 = vld [vmem:[#allocation2 + $0x56c] sm:$0xff]
    %v3870 = vld [vmem:[#allocation2 + $0x574] sm:$0xf]
    %v3871 = vld [vmem:[#allocation2 + $0x578] sm:$0xff]
    %v3872 = vld [vmem:[#allocation2 + $0x580] sm:$0xff]
    %v3873 = vld [vmem:[#allocation2 + $0x588] sm:$0xff]
    %v3874 = vld [vmem:[#allocation2 + $0x590] sm:$0xf]
    %v3875 = vld [vmem:[#allocation2 + $0x594] sm:$0xff]
    %v3876 = vld [vmem:[#allocation2 + $0x59c] sm:$0xff]
    %v3877 = vld [vmem:[#allocation2 + $0x5a4] sm:$0xff]
    %v3878 = vld [vmem:[#allocation2 + $0x5ac] sm:$0xf]
    %v3879 = vld [vmem:[#allocation2 + $0x5b0] sm:$0xff]
    %v3880 = vld [vmem:[#allocation2 + $0x5b8] sm:$0xff]
    %v3881 = vld [vmem:[#allocation2 + $0x5c0] sm:$0xff]
    %v3882 = vld [vmem:[#allocation2 + $0x5c8] sm:$0xf]
    %v3883 = vld [vmem:[#allocation2 + $0x5cc] sm:$0xff]
    %v3884 = vld [vmem:[#allocation2 + $0x5d4] sm:$0xff]
    %v3885 = vld [vmem:[#allocation2 + $0x5dc] sm:$0xff]
    %v3886 = vld [vmem:[#allocation2 + $0x5e4] sm:$0xf]
    %v3887 = vld [vmem:[#allocation2 + $0x5e8] sm:$0xff]
    %v3888 = vld [vmem:[#allocation2 + $0x5f0] sm:$0xff]
    %v3889 = vld [vmem:[#allocation2 + $0x5f8] sm:$0xff]
    %v3890 = vld [vmem:[#allocation2 + $0x600] sm:$0xf]
    %v3891 = vld [vmem:[#allocation2 + $0x604] sm:$0xff]
    %v3892 = vld [vmem:[#allocation2 + $0x60c] sm:$0xff]
    %v3893 = vld [vmem:[#allocation2 + $0x614] sm:$0xff]
    %v3894 = vld [vmem:[#allocation2 + $0x61c] sm:$0xf]
    %v3895 = vld [vmem:[#allocation2 + $0x620] sm:$0xff]
    %v3896 = vld [vmem:[#allocation2 + $0x628] sm:$0xff]
    %v3897 = vld [vmem:[#allocation2 + $0x630] sm:$0xff]
    %v3898 = vld [vmem:[#allocation2 + $0x638] sm:$0xf]
    %v3899 = vld [vmem:[#allocation2 + $0x63c] sm:$0xff]
    %v3900 = vld [vmem:[#allocation2 + $0x644] sm:$0xff]
    %v3901 = vld [vmem:[#allocation2 + $0x64c] sm:$0xff]
    %v3902 = vld [vmem:[#allocation2 + $0x654] sm:$0xf]
    %v3903 = vld [vmem:[#allocation2 + $0x658] sm:$0xff]
    %v3904 = vld [vmem:[#allocation2 + $0x660] sm:$0xff]
    %v3905 = vld [vmem:[#allocation2 + $0x668] sm:$0xff]
    %v3906 = vld [vmem:[#allocation2 + $0x670] sm:$0xf]
    %v3907 = vld [vmem:[#allocation2 + $0x674] sm:$0xff]
    %v3908 = vld [vmem:[#allocation2 + $0x67c] sm:$0xff]
    %v3909 = vld [vmem:[#allocation2 + $0x684] sm:$0xff]
    %v3910 = vld [vmem:[#allocation2 + $0x68c] sm:$0xf]
    %v3911 = vld [vmem:[#allocation2 + $0x690] sm:$0xff]
    %v3912 = vld [vmem:[#allocation2 + $0x698] sm:$0xff]
    %v3913 = vld [vmem:[#allocation2 + $0x6a0] sm:$0xff]
    %v3914 = vld [vmem:[#allocation2 + $0x6a8] sm:$0xf]
    %v3915 = vld [vmem:[#allocation2 + $0x6ac] sm:$0xff]
    %v3916 = vld [vmem:[#allocation2 + $0x6b4] sm:$0xff]
    %v3917 = vld [vmem:[#allocation2 + $0x6bc] sm:$0xff]
    %v3918 = vld [vmem:[#allocation2 + $0x6c4] sm:$0xf]
    %v3919 = vld [vmem:[#allocation2 + $0x6c8] sm:$0xff]
    %v3920 = vld [vmem:[#allocation2 + $0x6d0] sm:$0xff]
    %v3921 = vld [vmem:[#allocation2 + $0x6d8] sm:$0xff]
    %v3922 = vld [vmem:[#allocation2 + $0x6e0] sm:$0xf]
    %v3923 = vld [vmem:[#allocation2 + $0x6e4] sm:$0xff]
    %v3924 = vld [vmem:[#allocation2 + $0x6ec] sm:$0xff]
    %v3925 = vld [vmem:[#allocation2 + $0x6f4] sm:$0xff]
    %v3926 = vld [vmem:[#allocation2 + $0x6fc] sm:$0xf]
    %v3927 = vld [vmem:[#allocation2 + $0x700] sm:$0xff]
    %v3928 = vld [vmem:[#allocation2 + $0x708] sm:$0xff]
    %v3929 = vld [vmem:[#allocation2 + $0x710] sm:$0xff]
    %v3930 = vld [vmem:[#allocation2 + $0x718] sm:$0xf]
    %v3931 = vld [vmem:[#allocation2 + $0x71c] sm:$0xff]
    %v3932 = vld [vmem:[#allocation2 + $0x724] sm:$0xff]
    %v3933 = vld [vmem:[#allocation2 + $0x72c] sm:$0xff]
    %v3934 = vld [vmem:[#allocation2 + $0x734] sm:$0xf]
    %v3935 = vld [vmem:[#allocation2 + $0x738] sm:$0xff]
    %v3936 = vld [vmem:[#allocation2 + $0x740] sm:$0xff]
    %v3937 = vld [vmem:[#allocation2 + $0x748] sm:$0xff]
    %v3938 = vld [vmem:[#allocation2 + $0x750] sm:$0xf]
    %v3939 = vld [vmem:[#allocation2 + $0x754] sm:$0xff]
    %v3940 = vld [vmem:[#allocation2 + $0x75c] sm:$0xff]
    %v3941 = vld [vmem:[#allocation2 + $0x764] sm:$0xff]
    %v3942 = vld [vmem:[#allocation2 + $0x76c] sm:$0xf]
    %v3943 = vld [vmem:[#allocation2 + $0x770] sm:$0xff]
    %v3944 = vld [vmem:[#allocation2 + $0x778] sm:$0xff]
    %v3945 = vld [vmem:[#allocation2 + $0x780] sm:$0xff]
    %v3946 = vld [vmem:[#allocation2 + $0x788] sm:$0xf]
    %v3947 = vld [vmem:[#allocation2 + $0x78c] sm:$0xff]
    %v3948 = vld [vmem:[#allocation2 + $0x794] sm:$0xff]
    %v3949 = vld [vmem:[#allocation2 + $0x79c] sm:$0xff]
    %v3950 = vld [vmem:[#allocation2 + $0x7a4] sm:$0xf]
    %v3951 = vld [vmem:[#allocation2 + $0x7a8] sm:$0xff]
    %v3952 = vld [vmem:[#allocation2 + $0x7b0] sm:$0xff]
    %v3953 = vld [vmem:[#allocation2 + $0x7b8] sm:$0xff]
    %v3954 = vld [vmem:[#allocation2 + $0x7c0] sm:$0xf]
    %v3955 = vld [vmem:[#allocation2 + $0x7c4] sm:$0xff]
    %v3956 = vld [vmem:[#allocation2 + $0x7cc] sm:$0xff]
    %v3957 = vld [vmem:[#allocation2 + $0x7d4] sm:$0xff]
    %v3958 = vld [vmem:[#allocation2 + $0x7dc] sm:$0xf]
    %v3959 = vld [vmem:[#allocation2 + $0x7e0] sm:$0xff]
    %v3960 = vld [vmem:[#allocation2 + $0x7e8] sm:$0xff]
    %v3961 = vld [vmem:[#allocation2 + $0x7f0] sm:$0xff]
    %v3962 = vld [vmem:[#allocation2 + $0x7f8] sm:$0xf]
    %v3963 = vld [vmem:[#allocation2 + $0x7fc] sm:$0xff]
    %v3964 = vld [vmem:[#allocation2 + $0x804] sm:$0xff]
    %v3965 = vld [vmem:[#allocation2 + $0x80c] sm:$0xff]
    %v3966 = vld [vmem:[#allocation2 + $0x814] sm:$0xf]
    %v3967 = vld [vmem:[#allocation2 + $0x818] sm:$0xff]
    %v3968 = vld [vmem:[#allocation2 + $0x820] sm:$0xff]
    %v3969 = vld [vmem:[#allocation2 + $0x828] sm:$0xff]
    %v3970 = vld [vmem:[#allocation2 + $0x830] sm:$0xf]
    %v3971 = vld [vmem:[#allocation2 + $0x834] sm:$0xff]
    %v3972 = vld [vmem:[#allocation2 + $0x83c] sm:$0xff]
    %v3973 = vld [vmem:[#allocation2 + $0x844] sm:$0xff]
    %v3974 = vld [vmem:[#allocation2 + $0x84c] sm:$0xf]
    %v3975 = vld [vmem:[#allocation2 + $0x850] sm:$0xff]
    %v3976 = vld [vmem:[#allocation2 + $0x858] sm:$0xff]
    %v3977 = vld [vmem:[#allocation2 + $0x860] sm:$0xff]
    %v3978 = vld [vmem:[#allocation2 + $0x868] sm:$0xf]
    %v3979 = vld [vmem:[#allocation2 + $0x86c] sm:$0xff]
    %v3980 = vld [vmem:[#allocation2 + $0x874] sm:$0xff]
    %v3981 = vld [vmem:[#allocation2 + $0x87c] sm:$0xff]
    %v3982 = vld [vmem:[#allocation2 + $0x884] sm:$0xf]
    %v3983 = vld [vmem:[#allocation2 + $0x888] sm:$0xff]
    %v3984 = vld [vmem:[#allocation2 + $0x890] sm:$0xff]
    %v3985 = vld [vmem:[#allocation2 + $0x898] sm:$0xff]
    %v3986 = vld [vmem:[#allocation2 + $0x8a0] sm:$0xf]
    %v3987 = vld [vmem:[#allocation2 + $0x8a4] sm:$0xff]
    %v3988 = vld [vmem:[#allocation2 + $0x8ac] sm:$0xff]
    %v3989 = vld [vmem:[#allocation2 + $0x8b4] sm:$0xff]
    %v3990 = vld [vmem:[#allocation2 + $0x8bc] sm:$0xf]
    %v3991 = vld [vmem:[#allocation2 + $0x8c0] sm:$0xff]
    %v3992 = vld [vmem:[#allocation2 + $0x8c8] sm:$0xff]
    %v3993 = vld [vmem:[#allocation2 + $0x8d0] sm:$0xff]
    %v3994 = vld [vmem:[#allocation2 + $0x8d8] sm:$0xf]
    %v3995 = vld [vmem:[#allocation2 + $0x8dc] sm:$0xff]
    %v3996 = vld [vmem:[#allocation2 + $0x8e4] sm:$0xff]
    %v3997 = vld [vmem:[#allocation2 + $0x8ec] sm:$0xff]
    %v3998 = vld [vmem:[#allocation2 + $0x8f4] sm:$0xf]
    %v3999 = vld [vmem:[#allocation2 + $0x8f8] sm:$0xff]
    %v4000 = vld [vmem:[#allocation2 + $0x900] sm:$0xff]
    %v4001 = vld [vmem:[#allocation2 + $0x908] sm:$0xff]
    %v4002 = vld [vmem:[#allocation2 + $0x910] sm:$0xf]
    %v4003 = vld [vmem:[#allocation2 + $0x914] sm:$0xff]
    %v4004 = vld [vmem:[#allocation2 + $0x91c] sm:$0xff]
    %v4005 = vld [vmem:[#allocation2 + $0x924] sm:$0xff]
    %v4006 = vld [vmem:[#allocation2 + $0x92c] sm:$0xf]
    %v4007 = vld [vmem:[#allocation2 + $0x930] sm:$0xff]
    %v4008 = vld [vmem:[#allocation2 + $0x938] sm:$0xff]
    %v4009 = vld [vmem:[#allocation2 + $0x940] sm:$0xff]
    %v4010 = vld [vmem:[#allocation2 + $0x948] sm:$0xf]
    %v4011 = vld [vmem:[#allocation2 + $0x94c] sm:$0xff]
    %v4012 = vld [vmem:[#allocation2 + $0x954] sm:$0xff]
    %v4013 = vld [vmem:[#allocation2 + $0x95c] sm:$0xff]
    %v4014 = vld [vmem:[#allocation2 + $0x964] sm:$0xf]
    %v4015 = vld [vmem:[#allocation2 + $0x968] sm:$0xff]
    %v4016 = vld [vmem:[#allocation2 + $0x970] sm:$0xff]
    %v4017 = vld [vmem:[#allocation2 + $0x978] sm:$0xff]
    %v4018 = vld [vmem:[#allocation2 + $0x980] sm:$0xf]
    %v4019 = vld [vmem:[#allocation2 + $0x984] sm:$0xff]
    %v4020 = vld [vmem:[#allocation2 + $0x98c] sm:$0xff]
    %v4021 = vld [vmem:[#allocation2 + $0x994] sm:$0xff]
    %v4022 = vld [vmem:[#allocation2 + $0x99c] sm:$0xf]
    %v4023 = vld [vmem:[#allocation2 + $0x9a0] sm:$0xff]
    %v4024 = vld [vmem:[#allocation2 + $0x9a8] sm:$0xff]
    %v4025 = vld [vmem:[#allocation2 + $0x9b0] sm:$0xff]
    %v4026 = vld [vmem:[#allocation2 + $0x9b8] sm:$0xf]
    %v4027 = vld [vmem:[#allocation2 + $0x9bc] sm:$0xff]
    %v4028 = vld [vmem:[#allocation2 + $0x9c4] sm:$0xff]
    %v4029 = vld [vmem:[#allocation2 + $0x9cc] sm:$0xff]
    %v4030 = vld [vmem:[#allocation2 + $0x9d4] sm:$0xf]
    %v4031 = vld [vmem:[#allocation2 + $0x9d8] sm:$0xff]
    %v4032 = vld [vmem:[#allocation2 + $0x9e0] sm:$0xff]
    %v4033 = vld [vmem:[#allocation2 + $0x9e8] sm:$0xff]
    %v4034 = vld [vmem:[#allocation2 + $0x9f0] sm:$0xf]
    %v4035 = vld [vmem:[#allocation2 + $0x9f4] sm:$0xff]
    %v4036 = vld [vmem:[#allocation2 + $0x9fc] sm:$0xff]
    %v4037 = vld [vmem:[#allocation2 + $0xa04] sm:$0xff]
    %v4038 = vld [vmem:[#allocation2 + $0xa0c] sm:$0xf]
    %v4039 = vld [vmem:[#allocation2 + $0xa10] sm:$0xff]
    %v4040 = vld [vmem:[#allocation2 + $0xa18] sm:$0xff]
    %v4041 = vld [vmem:[#allocation2 + $0xa20] sm:$0xff]
    %v4042 = vld [vmem:[#allocation2 + $0xa28] sm:$0xf]
    %v4043 = vld [vmem:[#allocation2 + $0xa2c] sm:$0xff]
    %v4044 = vld [vmem:[#allocation2 + $0xa34] sm:$0xff]
    %v4045 = vld [vmem:[#allocation2 + $0xa3c] sm:$0xff]
    %v4046 = vld [vmem:[#allocation2 + $0xa44] sm:$0xf]
    %v4047 = vld [vmem:[#allocation2 + $0xa48] sm:$0xff]
    %v4048 = vld [vmem:[#allocation2 + $0xa50] sm:$0xff]
    %v4049 = vld [vmem:[#allocation2 + $0xa58] sm:$0xff]
    %v4050 = vld [vmem:[#allocation2 + $0xa60] sm:$0xf]
    %v4051 = vld [vmem:[#allocation2 + $0xa64] sm:$0xff]
    %v4052 = vld [vmem:[#allocation2 + $0xa6c] sm:$0xff]
    %v4053 = vld [vmem:[#allocation2 + $0xa74] sm:$0xff]
    %v4054 = vld [vmem:[#allocation2 + $0xa7c] sm:$0xf]
    %v4055 = vld [vmem:[#allocation2 + $0xa80] sm:$0xff]
    %v4056 = vld [vmem:[#allocation2 + $0xa88] sm:$0xff]
    %v4057 = vld [vmem:[#allocation2 + $0xa90] sm:$0xff]
    %v4058 = vld [vmem:[#allocation2 + $0xa98] sm:$0xf]
    %v4059 = vld [vmem:[#allocation2 + $0xa9c] sm:$0xff]
    %v4060 = vld [vmem:[#allocation2 + $0xaa4] sm:$0xff]
    %v4061 = vld [vmem:[#allocation2 + $0xaac] sm:$0xff]
    %v4062 = vld [vmem:[#allocation2 + $0xab4] sm:$0xf]
    %v4063 = vld [vmem:[#allocation2 + $0xab8] sm:$0xff]
    %v4064 = vld [vmem:[#allocation2 + $0xac0] sm:$0xff]
    %v4065 = vld [vmem:[#allocation2 + $0xac8] sm:$0xff]
    %v4066 = vld [vmem:[#allocation2 + $0xad0] sm:$0xf]
    %v4067 = vld [vmem:[#allocation2 + $0xad4] sm:$0xff]
    %v4068 = vld [vmem:[#allocation2 + $0xadc] sm:$0xff]
    %v4069 = vld [vmem:[#allocation2 + $0xae4] sm:$0xff]
    %v4070 = vld [vmem:[#allocation2 + $0xaec] sm:$0xf]
    %v4071 = vld [vmem:[#allocation2 + $0xaf0] sm:$0xff]
    %v4072 = vld [vmem:[#allocation2 + $0xaf8] sm:$0xff]
    %v4073 = vld [vmem:[#allocation2 + $0xb00] sm:$0xff]
    %v4074 = vld [vmem:[#allocation2 + $0xb08] sm:$0xf]
    %v4075 = vld [vmem:[#allocation2 + $0xb0c] sm:$0xff]
    %v4076 = vld [vmem:[#allocation2 + $0xb14] sm:$0xff]
    %v4077 = vld [vmem:[#allocation2 + $0xb1c] sm:$0xff]
    %v4078 = vld [vmem:[#allocation2 + $0xb24] sm:$0xf]
    %v4079 = vld [vmem:[#allocation2 + $0xb28] sm:$0xff]
    %v4080 = vld [vmem:[#allocation2 + $0xb30] sm:$0xff]
    %v4081 = vld [vmem:[#allocation2 + $0xb38] sm:$0xff]
    %v4082 = vld [vmem:[#allocation2 + $0xb40] sm:$0xf]
    %v4083 = vld [vmem:[#allocation2 + $0xb44] sm:$0xff]
    %v4084 = vld [vmem:[#allocation2 + $0xb4c] sm:$0xff]
    %v4085 = vld [vmem:[#allocation2 + $0xb54] sm:$0xff]
    %v4086 = vld [vmem:[#allocation2 + $0xb5c] sm:$0xf]
    %v4087 = vld [vmem:[#allocation2 + $0xb60] sm:$0xff]
    %v4088 = vld [vmem:[#allocation2 + $0xb68] sm:$0xff]
    %v4089 = vld [vmem:[#allocation2 + $0xb70] sm:$0xff]
    %v4090 = vld [vmem:[#allocation2 + $0xb78] sm:$0xf]
    %v4091 = vld [vmem:[#allocation2 + $0xb7c] sm:$0xff]
    %v4092 = vld [vmem:[#allocation2 + $0xb84] sm:$0xff]
    %v4093 = vld [vmem:[#allocation2 + $0xb8c] sm:$0xff]
    %v4094 = vld [vmem:[#allocation2 + $0xb94] sm:$0xf]
    %v4095 = vld [vmem:[#allocation2 + $0xb98] sm:$0xff]
    %v4096 = vld [vmem:[#allocation2 + $0xba0] sm:$0xff]
    %v4097 = vld [vmem:[#allocation2 + $0xba8] sm:$0xff]
    %v4098 = vld [vmem:[#allocation2 + $0xbb0] sm:$0xf]
    %v4099 = vld [vmem:[#allocation2 + $0xbb4] sm:$0xff]
    %v4100 = vld [vmem:[#allocation2 + $0xbbc] sm:$0xff]
    %v4101 = vld [vmem:[#allocation2 + $0xbc4] sm:$0xff]
    %v4102 = vld [vmem:[#allocation2 + $0xbcc] sm:$0xf]
    %v4103 = vld [vmem:[#allocation2 + $0xbd0] sm:$0xff]
    %v4104 = vld [vmem:[#allocation2 + $0xbd8] sm:$0xff]
    %v4105 = vld [vmem:[#allocation2 + $0xbe0] sm:$0xff]
    %v4106 = vld [vmem:[#allocation2 + $0xbe8] sm:$0xf]
    %v4107 = vld [vmem:[#allocation2 + $0xbec] sm:$0xff]
    %v4108 = vld [vmem:[#allocation2 + $0xbf4] sm:$0xff]
    %v4109 = vld [vmem:[#allocation2 + $0xbfc] sm:$0xff]
    %v4110 = vld [vmem:[#allocation2 + $0xc04] sm:$0xf]
    %v4111 = vld [vmem:[#allocation2 + $0xc08] sm:$0xff]
    %v4112 = vld [vmem:[#allocation2 + $0xc10] sm:$0xff]
    %v4113 = vld [vmem:[#allocation2 + $0xc18] sm:$0xff]
    %v4114 = vld [vmem:[#allocation2 + $0xc20] sm:$0xf]
    %v4115 = vld [vmem:[#allocation2 + $0xc24] sm:$0xff]
    %v4116 = vld [vmem:[#allocation2 + $0xc2c] sm:$0xff]
    %v4117 = vld [vmem:[#allocation2 + $0xc34] sm:$0xff]
    %v4118 = vld [vmem:[#allocation2 + $0xc3c] sm:$0xf]
    %v4119 = vld [vmem:[#allocation2 + $0xc40] sm:$0xff]
    %v4120 = vld [vmem:[#allocation2 + $0xc48] sm:$0xff]
    %v4121 = vld [vmem:[#allocation2 + $0xc50] sm:$0xff]
    %v4122 = vld [vmem:[#allocation2 + $0xc58] sm:$0xf]
    %v4123 = vld [vmem:[#allocation2 + $0xc5c] sm:$0xff]
    %v4124 = vld [vmem:[#allocation2 + $0xc64] sm:$0xff]
    %v4125 = vld [vmem:[#allocation2 + $0xc6c] sm:$0xff]
    %v4126 = vld [vmem:[#allocation2 + $0xc74] sm:$0xf]
    %v4127 = vld [vmem:[#allocation2 + $0xc78] sm:$0xff]
    %v4128 = vld [vmem:[#allocation2 + $0xc80] sm:$0xff]
    %v4129 = vld [vmem:[#allocation2 + $0xc88] sm:$0xff]
    %v4130 = vld [vmem:[#allocation2 + $0xc90] sm:$0xf]
    %v4131 = vld [vmem:[#allocation2 + $0xc94] sm:$0xff]
    %v4132 = vld [vmem:[#allocation2 + $0xc9c] sm:$0xff]
    %v4133 = vld [vmem:[#allocation2 + $0xca4] sm:$0xff]
    %v4134 = vld [vmem:[#allocation2 + $0xcac] sm:$0xf]
    %v4135 = vld [vmem:[#allocation2 + $0xcb0] sm:$0xff]
    %v4136 = vld [vmem:[#allocation2 + $0xcb8] sm:$0xff]
    %v4137 = vld [vmem:[#allocation2 + $0xcc0] sm:$0xff]
    %v4138 = vld [vmem:[#allocation2 + $0xcc8] sm:$0xf]
    %v4139 = vld [vmem:[#allocation2 + $0xccc] sm:$0xff]
    %v4140 = vld [vmem:[#allocation2 + $0xcd4] sm:$0xff]
    %v4141 = vld [vmem:[#allocation2 + $0xcdc] sm:$0xff]
    %v4142 = vld [vmem:[#allocation2 + $0xce4] sm:$0xf]
    %v4143 = vld [vmem:[#allocation2 + $0xce8] sm:$0xff]
    %v4144 = vld [vmem:[#allocation2 + $0xcf0] sm:$0xff]
    %v4145 = vld [vmem:[#allocation2 + $0xcf8] sm:$0xff]
    %v4146 = vld [vmem:[#allocation2 + $0xd00] sm:$0xf]
    %v4147 = vld [vmem:[#allocation2 + $0xd04] sm:$0xff]
    %v4148 = vld [vmem:[#allocation2 + $0xd0c] sm:$0xff]
    %v4149 = vld [vmem:[#allocation2 + $0xd14] sm:$0xff]
    %v4150 = vld [vmem:[#allocation2 + $0xd1c] sm:$0xf]
    %v4151 = vld [vmem:[#allocation2 + $0xd20] sm:$0xff]
    %v4152 = vld [vmem:[#allocation2 + $0xd28] sm:$0xff]
    %v4153 = vld [vmem:[#allocation2 + $0xd30] sm:$0xff]
    %v4154 = vld [vmem:[#allocation2 + $0xd38] sm:$0xf]
    %v4155 = vld [vmem:[#allocation2 + $0xd3c] sm:$0xff]
    %v4156 = vld [vmem:[#allocation2 + $0xd44] sm:$0xff]
    %v4157 = vld [vmem:[#allocation2 + $0xd4c] sm:$0xff]
    %v4158 = vld [vmem:[#allocation2 + $0xd54] sm:$0xf]
    %v4159 = vld [vmem:[#allocation2 + $0xd58] sm:$0xff]
    %v4160 = vld [vmem:[#allocation2 + $0xd60] sm:$0xff]
    %v4161 = vld [vmem:[#allocation2 + $0xd68] sm:$0xff]
    %v4162 = vld [vmem:[#allocation2 + $0xd70] sm:$0xf]
    %v4163 = vld [vmem:[#allocation2 + $0xd74] sm:$0xff]
    %v4164 = vld [vmem:[#allocation2 + $0xd7c] sm:$0xff]
    %v4165 = vld [vmem:[#allocation2 + $0xd84] sm:$0xff]
    %v4166 = vld [vmem:[#allocation2 + $0xd8c] sm:$0xf]
    %v4167 = vld [vmem:[#allocation2 + $0xd90] sm:$0xff]
    %v4168 = vld [vmem:[#allocation2 + $0xd98] sm:$0xff]
    %v4169 = vld [vmem:[#allocation2 + $0xda0] sm:$0xff]
    %v4170 = vld [vmem:[#allocation2 + $0xda8] sm:$0xf]
    %v4171 = vld [vmem:[#allocation2 + $0xdac] sm:$0xff]
    %v4172 = vld [vmem:[#allocation2 + $0xdb4] sm:$0xff]
    %v4173 = vld [vmem:[#allocation2 + $0xdbc] sm:$0xff]
    %v4174 = vld [vmem:[#allocation2 + $0xdc4] sm:$0xf]
    %v4175 = vld [vmem:[#allocation2 + $0xdc8] sm:$0xff]
    %v4176 = vld [vmem:[#allocation2 + $0xdd0] sm:$0xff]
    %v4177 = vld [vmem:[#allocation2 + $0xdd8] sm:$0xff]
    %v4178 = vld [vmem:[#allocation2 + $0xde0] sm:$0xf]
    %v4179 = vld [vmem:[#allocation2 + $0xde4] sm:$0xff]
    %v4180 = vld [vmem:[#allocation2 + $0xdec] sm:$0xff]
    %v4181 = vld [vmem:[#allocation2 + $0xdf4] sm:$0xff]
    %v4182 = vld [vmem:[#allocation2 + $0xdfc] sm:$0xf]
    %s4183 = scalar_lea.vmem [#allocation15], 68
    %v4184 = vld [vmem:[%s4183] ss:$4 sm:$0xff]
    %v4185 = vpack.c.bf16 %v3659, %v3659
    %v4186 = vpack.c.bf16 %v3660, %v3660
    %v4187 = vpack.c.bf16 %v3661, %v3661
    %v4188 = vpack.c.bf16 %v3662, %v3662
    %v4189 = vpack.c.bf16 %v3663, %v3663
    %v4190 = vpack.c.bf16 %v3664, %v3664
    %v4191 = vpack.c.bf16 %v3665, %v3665
    %v4192 = vpack.c.bf16 %v3666, %v3666
    %v4194 = vlaneseq
    %v4195 = vshrl.u32 %v4194, 7
    %v4196 = vsub.s32 0, %v4195
    %v4197 = vrot.slane %v4184, %v4196
    %v4198 = vlaneseq
    %v4199 = vshrl.u32 %v4198, 7
    %v4200 = vsub.s32 1, %v4199
    %v4201 = vrot.slane %v4184, %v4200
    %v4202 = vlaneseq
    %v4203 = vshrl.u32 %v4202, 7
    %v4204 = vsub.s32 2, %v4203
    %v4205 = vrot.slane %v4184, %v4204
    %v4206 = vlaneseq
    %v4207 = vshrl.u32 %v4206, 7
    %v4208 = vsub.s32 3, %v4207
    %v4209 = vrot.slane %v4184, %v4208
    %v4210 = vlaneseq
    %v4211 = vshrl.u32 %v4210, 7
    %v4212 = vsub.s32 4, %v4211
    %v4213 = vrot.slane %v4184, %v4212
    %v4214 = vlaneseq
    %v4215 = vshrl.u32 %v4214, 7
    %v4216 = vsub.s32 5, %v4215
    %v4217 = vrot.slane %v4184, %v4216
    %v4218 = vlaneseq
    %v4219 = vshrl.u32 %v4218, 7
    %v4220 = vsub.s32 6, %v4219
    %v4221 = vrot.slane %v4184, %v4220
    %v4741 = vunpack.c.l.b16 %v3671
    %v4742 = vunpack.c.h.b16 %v3671
    %v4743 = vunpack.c.l.b16 %v3672
    %v4744 = vunpack.c.h.b16 %v3672
    %v4745 = vunpack.c.l.b16 %v3673
    %v4746 = vunpack.c.h.b16 %v3673
    %v4747 = vunpack.c.l.b16 %v3674
    %v4748 = vunpack.c.l.b16 %v3675
    %v4749 = vunpack.c.h.b16 %v3675
    %v4750 = vunpack.c.l.b16 %v3676
    %v4751 = vunpack.c.h.b16 %v3676
    %v4752 = vunpack.c.l.b16 %v3677
    %v4753 = vunpack.c.h.b16 %v3677
    %v4754 = vunpack.c.l.b16 %v3678
    %v4755 = vunpack.c.l.b16 %v3679
    %v4756 = vunpack.c.h.b16 %v3679
    %v4757 = vunpack.c.l.b16 %v3680
    %v4758 = vunpack.c.h.b16 %v3680
    %v4759 = vunpack.c.l.b16 %v3681
    %v4760 = vunpack.c.h.b16 %v3681
    %v4761 = vunpack.c.l.b16 %v3682
    %v4762 = vunpack.c.l.b16 %v3683
    %v4763 = vunpack.c.h.b16 %v3683
    %v4764 = vunpack.c.l.b16 %v3684
    %v4765 = vunpack.c.h.b16 %v3684
    %v4766 = vunpack.c.l.b16 %v3685
    %v4767 = vunpack.c.h.b16 %v3685
    %v4768 = vunpack.c.l.b16 %v3686
    %v4769 = vunpack.c.l.b16 %v3687
    %v4770 = vunpack.c.h.b16 %v3687
    %v4771 = vunpack.c.l.b16 %v3688
    %v4772 = vunpack.c.h.b16 %v3688
    %v4773 = vunpack.c.l.b16 %v3689
    %v4774 = vunpack.c.h.b16 %v3689
    %v4775 = vunpack.c.l.b16 %v3690
    %v4776 = vunpack.c.l.b16 %v3691
    %v4777 = vunpack.c.h.b16 %v3691
    %v4778 = vunpack.c.l.b16 %v3692
    %v4779 = vunpack.c.h.b16 %v3692
    %v4780 = vunpack.c.l.b16 %v3693
    %v4781 = vunpack.c.h.b16 %v3693
    %v4782 = vunpack.c.l.b16 %v3694
    %v4783 = vunpack.c.l.b16 %v3695
    %v4784 = vunpack.c.h.b16 %v3695
    %v4785 = vunpack.c.l.b16 %v3696
    %v4786 = vunpack.c.h.b16 %v3696
    %v4787 = vunpack.c.l.b16 %v3697
    %v4788 = vunpack.c.h.b16 %v3697
    %v4789 = vunpack.c.l.b16 %v3698
    %v4790 = vunpack.c.l.b16 %v3699
    %v4791 = vunpack.c.h.b16 %v3699
    %v4792 = vunpack.c.l.b16 %v3700
    %v4793 = vunpack.c.h.b16 %v3700
    %v4794 = vunpack.c.l.b16 %v3701
    %v4795 = vunpack.c.h.b16 %v3701
    %v4796 = vunpack.c.l.b16 %v3702
    %v4797 = vunpack.c.l.b16 %v3703
    %v4798 = vunpack.c.h.b16 %v3703
    %v4799 = vunpack.c.l.b16 %v3704
    %v4800 = vunpack.c.h.b16 %v3704
    %v4801 = vunpack.c.l.b16 %v3705
    %v4802 = vunpack.c.h.b16 %v3705
    %v4803 = vunpack.c.l.b16 %v3706
    %v4804 = vunpack.c.l.b16 %v3707
    %v4805 = vunpack.c.h.b16 %v3707
    %v4806 = vunpack.c.l.b16 %v3708
    %v4807 = vunpack.c.h.b16 %v3708
    %v4808 = vunpack.c.l.b16 %v3709
    %v4809 = vunpack.c.h.b16 %v3709
    %v4810 = vunpack.c.l.b16 %v3710
    %v4811 = vunpack.c.l.b16 %v3711
    %v4812 = vunpack.c.h.b16 %v3711
    %v4813 = vunpack.c.l.b16 %v3712
    %v4814 = vunpack.c.h.b16 %v3712
    %v4815 = vunpack.c.l.b16 %v3713
    %v4816 = vunpack.c.h.b16 %v3713
    %v4817 = vunpack.c.l.b16 %v3714
    %v4818 = vunpack.c.l.b16 %v3715
    %v4819 = vunpack.c.h.b16 %v3715
    %v4820 = vunpack.c.l.b16 %v3716
    %v4821 = vunpack.c.h.b16 %v3716
    %v4822 = vunpack.c.l.b16 %v3717
    %v4823 = vunpack.c.h.b16 %v3717
    %v4824 = vunpack.c.l.b16 %v3718
    %v4825 = vunpack.c.l.b16 %v3719
    %v4826 = vunpack.c.h.b16 %v3719
    %v4827 = vunpack.c.l.b16 %v3720
    %v4828 = vunpack.c.h.b16 %v3720
    %v4829 = vunpack.c.l.b16 %v3721
    %v4830 = vunpack.c.h.b16 %v3721
    %v4831 = vunpack.c.l.b16 %v3722
    %v4832 = vunpack.c.l.b16 %v3723
    %v4833 = vunpack.c.h.b16 %v3723
    %v4834 = vunpack.c.l.b16 %v3724
    %v4835 = vunpack.c.h.b16 %v3724
    %v4836 = vunpack.c.l.b16 %v3725
    %v4837 = vunpack.c.h.b16 %v3725
    %v4838 = vunpack.c.l.b16 %v3726
    %v4839 = vunpack.c.l.b16 %v3727
    %v4840 = vunpack.c.h.b16 %v3727
    %v4841 = vunpack.c.l.b16 %v3728
    %v4842 = vunpack.c.h.b16 %v3728
    %v4843 = vunpack.c.l.b16 %v3729
    %v4844 = vunpack.c.h.b16 %v3729
    %v4845 = vunpack.c.l.b16 %v3730
    %v4846 = vunpack.c.l.b16 %v3731
    %v4847 = vunpack.c.h.b16 %v3731
    %v4848 = vunpack.c.l.b16 %v3732
    %v4849 = vunpack.c.h.b16 %v3732
    %v4850 = vunpack.c.l.b16 %v3733
    %v4851 = vunpack.c.h.b16 %v3733
    %v4852 = vunpack.c.l.b16 %v3734
    %v4853 = vunpack.c.l.b16 %v3735
    %v4854 = vunpack.c.h.b16 %v3735
    %v4855 = vunpack.c.l.b16 %v3736
    %v4856 = vunpack.c.h.b16 %v3736
    %v4857 = vunpack.c.l.b16 %v3737
    %v4858 = vunpack.c.h.b16 %v3737
    %v4859 = vunpack.c.l.b16 %v3738
    %v4860 = vunpack.c.l.b16 %v3739
    %v4861 = vunpack.c.h.b16 %v3739
    %v4862 = vunpack.c.l.b16 %v3740
    %v4863 = vunpack.c.h.b16 %v3740
    %v4864 = vunpack.c.l.b16 %v3741
    %v4865 = vunpack.c.h.b16 %v3741
    %v4866 = vunpack.c.l.b16 %v3742
    %v4867 = vunpack.c.l.b16 %v3743
    %v4868 = vunpack.c.h.b16 %v3743
    %v4869 = vunpack.c.l.b16 %v3744
    %v4870 = vunpack.c.h.b16 %v3744
    %v4871 = vunpack.c.l.b16 %v3745
    %v4872 = vunpack.c.h.b16 %v3745
    %v4873 = vunpack.c.l.b16 %v3746
    %v4874 = vunpack.c.l.b16 %v3747
    %v4875 = vunpack.c.h.b16 %v3747
    %v4876 = vunpack.c.l.b16 %v3748
    %v4877 = vunpack.c.h.b16 %v3748
    %v4878 = vunpack.c.l.b16 %v3749
    %v4879 = vunpack.c.h.b16 %v3749
    %v4880 = vunpack.c.l.b16 %v3750
    %v4881 = vunpack.c.l.b16 %v3751
    %v4882 = vunpack.c.h.b16 %v3751
    %v4883 = vunpack.c.l.b16 %v3752
    %v4884 = vunpack.c.h.b16 %v3752
    %v4885 = vunpack.c.l.b16 %v3753
    %v4886 = vunpack.c.h.b16 %v3753
    %v4887 = vunpack.c.l.b16 %v3754
    %v4888 = vunpack.c.l.b16 %v3755
    %v4889 = vunpack.c.h.b16 %v3755
    %v4890 = vunpack.c.l.b16 %v3756
    %v4891 = vunpack.c.h.b16 %v3756
    %v4892 = vunpack.c.l.b16 %v3757
    %v4893 = vunpack.c.h.b16 %v3757
    %v4894 = vunpack.c.l.b16 %v3758
    %v4895 = vunpack.c.l.b16 %v3759
    %v4896 = vunpack.c.h.b16 %v3759
    %v4897 = vunpack.c.l.b16 %v3760
    %v4898 = vunpack.c.h.b16 %v3760
    %v4899 = vunpack.c.l.b16 %v3761
    %v4900 = vunpack.c.h.b16 %v3761
    %v4901 = vunpack.c.l.b16 %v3762
    %v4902 = vunpack.c.l.b16 %v3763
    %v4903 = vunpack.c.h.b16 %v3763
    %v4904 = vunpack.c.l.b16 %v3764
    %v4905 = vunpack.c.h.b16 %v3764
    %v4906 = vunpack.c.l.b16 %v3765
    %v4907 = vunpack.c.h.b16 %v3765
    %v4908 = vunpack.c.l.b16 %v3766
    %v4909 = vunpack.c.l.b16 %v3767
    %v4910 = vunpack.c.h.b16 %v3767
    %v4911 = vunpack.c.l.b16 %v3768
    %v4912 = vunpack.c.h.b16 %v3768
    %v4913 = vunpack.c.l.b16 %v3769
    %v4914 = vunpack.c.h.b16 %v3769
    %v4915 = vunpack.c.l.b16 %v3770
    %v4916 = vunpack.c.l.b16 %v3771
    %v4917 = vunpack.c.h.b16 %v3771
    %v4918 = vunpack.c.l.b16 %v3772
    %v4919 = vunpack.c.h.b16 %v3772
    %v4920 = vunpack.c.l.b16 %v3773
    %v4921 = vunpack.c.h.b16 %v3773
    %v4922 = vunpack.c.l.b16 %v3774
    %v4923 = vunpack.c.l.b16 %v3775
    %v4924 = vunpack.c.h.b16 %v3775
    %v4925 = vunpack.c.l.b16 %v3776
    %v4926 = vunpack.c.h.b16 %v3776
    %v4927 = vunpack.c.l.b16 %v3777
    %v4928 = vunpack.c.h.b16 %v3777
    %v4929 = vunpack.c.l.b16 %v3778
    %v4930 = vunpack.c.l.b16 %v3779
    %v4931 = vunpack.c.h.b16 %v3779
    %v4932 = vunpack.c.l.b16 %v3780
    %v4933 = vunpack.c.h.b16 %v3780
    %v4934 = vunpack.c.l.b16 %v3781
    %v4935 = vunpack.c.h.b16 %v3781
    %v4936 = vunpack.c.l.b16 %v3782
    %v4937 = vunpack.c.l.b16 %v3783
    %v4938 = vunpack.c.h.b16 %v3783
    %v4939 = vunpack.c.l.b16 %v3784
    %v4940 = vunpack.c.h.b16 %v3784
    %v4941 = vunpack.c.l.b16 %v3785
    %v4942 = vunpack.c.h.b16 %v3785
    %v4943 = vunpack.c.l.b16 %v3786
    %v4944 = vunpack.c.l.b16 %v3787
    %v4945 = vunpack.c.h.b16 %v3787
    %v4946 = vunpack.c.l.b16 %v3788
    %v4947 = vunpack.c.h.b16 %v3788
    %v4948 = vunpack.c.l.b16 %v3789
    %v4949 = vunpack.c.h.b16 %v3789
    %v4950 = vunpack.c.l.b16 %v3790
    %v4951 = vunpack.c.l.b16 %v3791
    %v4952 = vunpack.c.h.b16 %v3791
    %v4953 = vunpack.c.l.b16 %v3792
    %v4954 = vunpack.c.h.b16 %v3792
    %v4955 = vunpack.c.l.b16 %v3793
    %v4956 = vunpack.c.h.b16 %v3793
    %v4957 = vunpack.c.l.b16 %v3794
    %v4958 = vunpack.c.l.b16 %v3795
    %v4959 = vunpack.c.h.b16 %v3795
    %v4960 = vunpack.c.l.b16 %v3796
    %v4961 = vunpack.c.h.b16 %v3796
    %v4962 = vunpack.c.l.b16 %v3797
    %v4963 = vunpack.c.h.b16 %v3797
    %v4964 = vunpack.c.l.b16 %v3798
    %v4965 = vunpack.c.l.b16 %v3799
    %v4966 = vunpack.c.h.b16 %v3799
    %v4967 = vunpack.c.l.b16 %v3800
    %v4968 = vunpack.c.h.b16 %v3800
    %v4969 = vunpack.c.l.b16 %v3801
    %v4970 = vunpack.c.h.b16 %v3801
    %v4971 = vunpack.c.l.b16 %v3802
    %v4972 = vunpack.c.l.b16 %v3803
    %v4973 = vunpack.c.h.b16 %v3803
    %v4974 = vunpack.c.l.b16 %v3804
    %v4975 = vunpack.c.h.b16 %v3804
    %v4976 = vunpack.c.l.b16 %v3805
    %v4977 = vunpack.c.h.b16 %v3805
    %v4978 = vunpack.c.l.b16 %v3806
    %v4979 = vunpack.c.l.b16 %v3807
    %v4980 = vunpack.c.h.b16 %v3807
    %v4981 = vunpack.c.l.b16 %v3808
    %v4982 = vunpack.c.h.b16 %v3808
    %v4983 = vunpack.c.l.b16 %v3809
    %v4984 = vunpack.c.h.b16 %v3809
    %v4985 = vunpack.c.l.b16 %v3810
    %v4986 = vunpack.c.l.b16 %v3811
    %v4987 = vunpack.c.h.b16 %v3811
    %v4988 = vunpack.c.l.b16 %v3812
    %v4989 = vunpack.c.h.b16 %v3812
    %v4990 = vunpack.c.l.b16 %v3813
    %v4991 = vunpack.c.h.b16 %v3813
    %v4992 = vunpack.c.l.b16 %v3814
    %v4993 = vunpack.c.l.b16 %v3815
    %v4994 = vunpack.c.h.b16 %v3815
    %v4995 = vunpack.c.l.b16 %v3816
    %v4996 = vunpack.c.h.b16 %v3816
    %v4997 = vunpack.c.l.b16 %v3817
    %v4998 = vunpack.c.h.b16 %v3817
    %v4999 = vunpack.c.l.b16 %v3818
    %v5000 = vunpack.c.l.b16 %v3819
    %v5001 = vunpack.c.h.b16 %v3819
    %v5002 = vunpack.c.l.b16 %v3820
    %v5003 = vunpack.c.h.b16 %v3820
    %v5004 = vunpack.c.l.b16 %v3821
    %v5005 = vunpack.c.h.b16 %v3821
    %v5006 = vunpack.c.l.b16 %v3822
    %v5007 = vunpack.c.l.b16 %v3823
    %v5008 = vunpack.c.h.b16 %v3823
    %v5009 = vunpack.c.l.b16 %v3824
    %v5010 = vunpack.c.h.b16 %v3824
    %v5011 = vunpack.c.l.b16 %v3825
    %v5012 = vunpack.c.h.b16 %v3825
    %v5013 = vunpack.c.l.b16 %v3826
    %v5014 = vunpack.c.l.b16 %v3827
    %v5015 = vunpack.c.h.b16 %v3827
    %v5016 = vunpack.c.l.b16 %v3828
    %v5017 = vunpack.c.h.b16 %v3828
    %v5018 = vunpack.c.l.b16 %v3829
    %v5019 = vunpack.c.h.b16 %v3829
    %v5020 = vunpack.c.l.b16 %v3830
    %v5021 = vunpack.c.l.b16 %v3831
    %v5022 = vunpack.c.h.b16 %v3831
    %v5023 = vunpack.c.l.b16 %v3832
    %v5024 = vunpack.c.h.b16 %v3832
    %v5025 = vunpack.c.l.b16 %v3833
    %v5026 = vunpack.c.h.b16 %v3833
    %v5027 = vunpack.c.l.b16 %v3834
    %v5028 = vunpack.c.l.b16 %v3835
    %v5029 = vunpack.c.h.b16 %v3835
    %v5030 = vunpack.c.l.b16 %v3836
    %v5031 = vunpack.c.h.b16 %v3836
    %v5032 = vunpack.c.l.b16 %v3837
    %v5033 = vunpack.c.h.b16 %v3837
    %v5034 = vunpack.c.l.b16 %v3838
    %v5035 = vunpack.c.l.b16 %v3839
    %v5036 = vunpack.c.h.b16 %v3839
    %v5037 = vunpack.c.l.b16 %v3840
    %v5038 = vunpack.c.h.b16 %v3840
    %v5039 = vunpack.c.l.b16 %v3841
    %v5040 = vunpack.c.h.b16 %v3841
    %v5041 = vunpack.c.l.b16 %v3842
    %v5042 = vunpack.c.l.b16 %v3843
    %v5043 = vunpack.c.h.b16 %v3843
    %v5044 = vunpack.c.l.b16 %v3844
    %v5045 = vunpack.c.h.b16 %v3844
    %v5046 = vunpack.c.l.b16 %v3845
    %v5047 = vunpack.c.h.b16 %v3845
    %v5048 = vunpack.c.l.b16 %v3846
    %v5049 = vunpack.c.l.b16 %v3847
    %v5050 = vunpack.c.h.b16 %v3847
    %v5051 = vunpack.c.l.b16 %v3848
    %v5052 = vunpack.c.h.b16 %v3848
    %v5053 = vunpack.c.l.b16 %v3849
    %v5054 = vunpack.c.h.b16 %v3849
    %v5055 = vunpack.c.l.b16 %v3850
    %v5056 = vunpack.c.l.b16 %v3851
    %v5057 = vunpack.c.h.b16 %v3851
    %v5058 = vunpack.c.l.b16 %v3852
    %v5059 = vunpack.c.h.b16 %v3852
    %v5060 = vunpack.c.l.b16 %v3853
    %v5061 = vunpack.c.h.b16 %v3853
    %v5062 = vunpack.c.l.b16 %v3854
    %v5063 = vunpack.c.l.b16 %v3855
    %v5064 = vunpack.c.h.b16 %v3855
    %v5065 = vunpack.c.l.b16 %v3856
    %v5066 = vunpack.c.h.b16 %v3856
    %v5067 = vunpack.c.l.b16 %v3857
    %v5068 = vunpack.c.h.b16 %v3857
    %v5069 = vunpack.c.l.b16 %v3858
    %v5070 = vunpack.c.l.b16 %v3859
    %v5071 = vunpack.c.h.b16 %v3859
    %v5072 = vunpack.c.l.b16 %v3860
    %v5073 = vunpack.c.h.b16 %v3860
    %v5074 = vunpack.c.l.b16 %v3861
    %v5075 = vunpack.c.h.b16 %v3861
    %v5076 = vunpack.c.l.b16 %v3862
    %v5077 = vunpack.c.l.b16 %v3863
    %v5078 = vunpack.c.h.b16 %v3863
    %v5079 = vunpack.c.l.b16 %v3864
    %v5080 = vunpack.c.h.b16 %v3864
    %v5081 = vunpack.c.l.b16 %v3865
    %v5082 = vunpack.c.h.b16 %v3865
    %v5083 = vunpack.c.l.b16 %v3866
    %v5084 = vunpack.c.l.b16 %v3867
    %v5085 = vunpack.c.h.b16 %v3867
    %v5086 = vunpack.c.l.b16 %v3868
    %v5087 = vunpack.c.h.b16 %v3868
    %v5088 = vunpack.c.l.b16 %v3869
    %v5089 = vunpack.c.h.b16 %v3869
    %v5090 = vunpack.c.l.b16 %v3870
    %v5091 = vunpack.c.l.b16 %v3871
    %v5092 = vunpack.c.h.b16 %v3871
    %v5093 = vunpack.c.l.b16 %v3872
    %v5094 = vunpack.c.h.b16 %v3872
    %v5095 = vunpack.c.l.b16 %v3873
    %v5096 = vunpack.c.h.b16 %v3873
    %v5097 = vunpack.c.l.b16 %v3874
    %v5098 = vunpack.c.l.b16 %v3875
    %v5099 = vunpack.c.h.b16 %v3875
    %v5100 = vunpack.c.l.b16 %v3876
    %v5101 = vunpack.c.h.b16 %v3876
    %v5102 = vunpack.c.l.b16 %v3877
    %v5103 = vunpack.c.h.b16 %v3877
    %v5104 = vunpack.c.l.b16 %v3878
    %v5105 = vunpack.c.l.b16 %v3879
    %v5106 = vunpack.c.h.b16 %v3879
    %v5107 = vunpack.c.l.b16 %v3880
    %v5108 = vunpack.c.h.b16 %v3880
    %v5109 = vunpack.c.l.b16 %v3881
    %v5110 = vunpack.c.h.b16 %v3881
    %v5111 = vunpack.c.l.b16 %v3882
    %v5112 = vunpack.c.l.b16 %v3883
    %v5113 = vunpack.c.h.b16 %v3883
    %v5114 = vunpack.c.l.b16 %v3884
    %v5115 = vunpack.c.h.b16 %v3884
    %v5116 = vunpack.c.l.b16 %v3885
    %v5117 = vunpack.c.h.b16 %v3885
    %v5118 = vunpack.c.l.b16 %v3886
    %v5119 = vunpack.c.l.b16 %v3887
    %v5120 = vunpack.c.h.b16 %v3887
    %v5121 = vunpack.c.l.b16 %v3888
    %v5122 = vunpack.c.h.b16 %v3888
    %v5123 = vunpack.c.l.b16 %v3889
    %v5124 = vunpack.c.h.b16 %v3889
    %v5125 = vunpack.c.l.b16 %v3890
    %v5126 = vunpack.c.l.b16 %v3891
    %v5127 = vunpack.c.h.b16 %v3891
    %v5128 = vunpack.c.l.b16 %v3892
    %v5129 = vunpack.c.h.b16 %v3892
    %v5130 = vunpack.c.l.b16 %v3893
    %v5131 = vunpack.c.h.b16 %v3893
    %v5132 = vunpack.c.l.b16 %v3894
    %v5133 = vunpack.c.l.b16 %v3895
    %v5134 = vunpack.c.h.b16 %v3895
    %v5135 = vunpack.c.l.b16 %v3896
    %v5136 = vunpack.c.h.b16 %v3896
    %v5137 = vunpack.c.l.b16 %v3897
    %v5138 = vunpack.c.h.b16 %v3897
    %v5139 = vunpack.c.l.b16 %v3898
    %v5140 = vunpack.c.l.b16 %v3899
    %v5141 = vunpack.c.h.b16 %v3899
    %v5142 = vunpack.c.l.b16 %v3900
    %v5143 = vunpack.c.h.b16 %v3900
    %v5144 = vunpack.c.l.b16 %v3901
    %v5145 = vunpack.c.h.b16 %v3901
    %v5146 = vunpack.c.l.b16 %v3902
    %v5147 = vunpack.c.l.b16 %v3903
    %v5148 = vunpack.c.h.b16 %v3903
    %v5149 = vunpack.c.l.b16 %v3904
    %v5150 = vunpack.c.h.b16 %v3904
    %v5151 = vunpack.c.l.b16 %v3905
    %v5152 = vunpack.c.h.b16 %v3905
    %v5153 = vunpack.c.l.b16 %v3906
    %v5154 = vunpack.c.l.b16 %v3907
    %v5155 = vunpack.c.h.b16 %v3907
    %v5156 = vunpack.c.l.b16 %v3908
    %v5157 = vunpack.c.h.b16 %v3908
    %v5158 = vunpack.c.l.b16 %v3909
    %v5159 = vunpack.c.h.b16 %v3909
    %v5160 = vunpack.c.l.b16 %v3910
    %v5161 = vunpack.c.l.b16 %v3911
    %v5162 = vunpack.c.h.b16 %v3911
    %v5163 = vunpack.c.l.b16 %v3912
    %v5164 = vunpack.c.h.b16 %v3912
    %v5165 = vunpack.c.l.b16 %v3913
    %v5166 = vunpack.c.h.b16 %v3913
    %v5167 = vunpack.c.l.b16 %v3914
    %v5168 = vunpack.c.l.b16 %v3915
    %v5169 = vunpack.c.h.b16 %v3915
    %v5170 = vunpack.c.l.b16 %v3916
    %v5171 = vunpack.c.h.b16 %v3916
    %v5172 = vunpack.c.l.b16 %v3917
    %v5173 = vunpack.c.h.b16 %v3917
    %v5174 = vunpack.c.l.b16 %v3918
    %v5175 = vunpack.c.l.b16 %v3919
    %v5176 = vunpack.c.h.b16 %v3919
    %v5177 = vunpack.c.l.b16 %v3920
    %v5178 = vunpack.c.h.b16 %v3920
    %v5179 = vunpack.c.l.b16 %v3921
    %v5180 = vunpack.c.h.b16 %v3921
    %v5181 = vunpack.c.l.b16 %v3922
    %v5182 = vunpack.c.l.b16 %v3923
    %v5183 = vunpack.c.h.b16 %v3923
    %v5184 = vunpack.c.l.b16 %v3924
    %v5185 = vunpack.c.h.b16 %v3924
    %v5186 = vunpack.c.l.b16 %v3925
    %v5187 = vunpack.c.h.b16 %v3925
    %v5188 = vunpack.c.l.b16 %v3926
    %v5189 = vunpack.c.l.b16 %v3927
    %v5190 = vunpack.c.h.b16 %v3927
    %v5191 = vunpack.c.l.b16 %v3928
    %v5192 = vunpack.c.h.b16 %v3928
    %v5193 = vunpack.c.l.b16 %v3929
    %v5194 = vunpack.c.h.b16 %v3929
    %v5195 = vunpack.c.l.b16 %v3930
    %v5196 = vunpack.c.l.b16 %v3931
    %v5197 = vunpack.c.h.b16 %v3931
    %v5198 = vunpack.c.l.b16 %v3932
    %v5199 = vunpack.c.h.b16 %v3932
    %v5200 = vunpack.c.l.b16 %v3933
    %v5201 = vunpack.c.h.b16 %v3933
    %v5202 = vunpack.c.l.b16 %v3934
    %v5203 = vunpack.c.l.b16 %v3935
    %v5204 = vunpack.c.h.b16 %v3935
    %v5205 = vunpack.c.l.b16 %v3936
    %v5206 = vunpack.c.h.b16 %v3936
    %v5207 = vunpack.c.l.b16 %v3937
    %v5208 = vunpack.c.h.b16 %v3937
    %v5209 = vunpack.c.l.b16 %v3938
    %v5210 = vunpack.c.l.b16 %v3939
    %v5211 = vunpack.c.h.b16 %v3939
    %v5212 = vunpack.c.l.b16 %v3940
    %v5213 = vunpack.c.h.b16 %v3940
    %v5214 = vunpack.c.l.b16 %v3941
    %v5215 = vunpack.c.h.b16 %v3941
    %v5216 = vunpack.c.l.b16 %v3942
    %v5217 = vunpack.c.l.b16 %v3943
    %v5218 = vunpack.c.h.b16 %v3943
    %v5219 = vunpack.c.l.b16 %v3944
    %v5220 = vunpack.c.h.b16 %v3944
    %v5221 = vunpack.c.l.b16 %v3945
    %v5222 = vunpack.c.h.b16 %v3945
    %v5223 = vunpack.c.l.b16 %v3946
    %v5224 = vunpack.c.l.b16 %v3947
    %v5225 = vunpack.c.h.b16 %v3947
    %v5226 = vunpack.c.l.b16 %v3948
    %v5227 = vunpack.c.h.b16 %v3948
    %v5228 = vunpack.c.l.b16 %v3949
    %v5229 = vunpack.c.h.b16 %v3949
    %v5230 = vunpack.c.l.b16 %v3950
    %v5231 = vunpack.c.l.b16 %v3951
    %v5232 = vunpack.c.h.b16 %v3951
    %v5233 = vunpack.c.l.b16 %v3952
    %v5234 = vunpack.c.h.b16 %v3952
    %v5235 = vunpack.c.l.b16 %v3953
    %v5236 = vunpack.c.h.b16 %v3953
    %v5237 = vunpack.c.l.b16 %v3954
    %v5238 = vunpack.c.l.b16 %v3955
    %v5239 = vunpack.c.h.b16 %v3955
    %v5240 = vunpack.c.l.b16 %v3956
    %v5241 = vunpack.c.h.b16 %v3956
    %v5242 = vunpack.c.l.b16 %v3957
    %v5243 = vunpack.c.h.b16 %v3957
    %v5244 = vunpack.c.l.b16 %v3958
    %v5245 = vunpack.c.l.b16 %v3959
    %v5246 = vunpack.c.h.b16 %v3959
    %v5247 = vunpack.c.l.b16 %v3960
    %v5248 = vunpack.c.h.b16 %v3960
    %v5249 = vunpack.c.l.b16 %v3961
    %v5250 = vunpack.c.h.b16 %v3961
    %v5251 = vunpack.c.l.b16 %v3962
    %v5252 = vunpack.c.l.b16 %v3963
    %v5253 = vunpack.c.h.b16 %v3963
    %v5254 = vunpack.c.l.b16 %v3964
    %v5255 = vunpack.c.h.b16 %v3964
    %v5256 = vunpack.c.l.b16 %v3965
    %v5257 = vunpack.c.h.b16 %v3965
    %v5258 = vunpack.c.l.b16 %v3966
    %v5259 = vunpack.c.l.b16 %v3967
    %v5260 = vunpack.c.h.b16 %v3967
    %v5261 = vunpack.c.l.b16 %v3968
    %v5262 = vunpack.c.h.b16 %v3968
    %v5263 = vunpack.c.l.b16 %v3969
    %v5264 = vunpack.c.h.b16 %v3969
    %v5265 = vunpack.c.l.b16 %v3970
    %v5266 = vunpack.c.l.b16 %v3971
    %v5267 = vunpack.c.h.b16 %v3971
    %v5268 = vunpack.c.l.b16 %v3972
    %v5269 = vunpack.c.h.b16 %v3972
    %v5270 = vunpack.c.l.b16 %v3973
    %v5271 = vunpack.c.h.b16 %v3973
    %v5272 = vunpack.c.l.b16 %v3974
    %v5273 = vunpack.c.l.b16 %v3975
    %v5274 = vunpack.c.h.b16 %v3975
    %v5275 = vunpack.c.l.b16 %v3976
    %v5276 = vunpack.c.h.b16 %v3976
    %v5277 = vunpack.c.l.b16 %v3977
    %v5278 = vunpack.c.h.b16 %v3977
    %v5279 = vunpack.c.l.b16 %v3978
    %v5280 = vunpack.c.l.b16 %v3979
    %v5281 = vunpack.c.h.b16 %v3979
    %v5282 = vunpack.c.l.b16 %v3980
    %v5283 = vunpack.c.h.b16 %v3980
    %v5284 = vunpack.c.l.b16 %v3981
    %v5285 = vunpack.c.h.b16 %v3981
    %v5286 = vunpack.c.l.b16 %v3982
    %v5287 = vunpack.c.l.b16 %v3983
    %v5288 = vunpack.c.h.b16 %v3983
    %v5289 = vunpack.c.l.b16 %v3984
    %v5290 = vunpack.c.h.b16 %v3984
    %v5291 = vunpack.c.l.b16 %v3985
    %v5292 = vunpack.c.h.b16 %v3985
    %v5293 = vunpack.c.l.b16 %v3986
    %v5294 = vunpack.c.l.b16 %v3987
    %v5295 = vunpack.c.h.b16 %v3987
    %v5296 = vunpack.c.l.b16 %v3988
    %v5297 = vunpack.c.h.b16 %v3988
    %v5298 = vunpack.c.l.b16 %v3989
    %v5299 = vunpack.c.h.b16 %v3989
    %v5300 = vunpack.c.l.b16 %v3990
    %v5301 = vunpack.c.l.b16 %v3991
    %v5302 = vunpack.c.h.b16 %v3991
    %v5303 = vunpack.c.l.b16 %v3992
    %v5304 = vunpack.c.h.b16 %v3992
    %v5305 = vunpack.c.l.b16 %v3993
    %v5306 = vunpack.c.h.b16 %v3993
    %v5307 = vunpack.c.l.b16 %v3994
    %v5308 = vunpack.c.l.b16 %v3995
    %v5309 = vunpack.c.h.b16 %v3995
    %v5310 = vunpack.c.l.b16 %v3996
    %v5311 = vunpack.c.h.b16 %v3996
    %v5312 = vunpack.c.l.b16 %v3997
    %v5313 = vunpack.c.h.b16 %v3997
    %v5314 = vunpack.c.l.b16 %v3998
    %v5315 = vunpack.c.l.b16 %v3999
    %v5316 = vunpack.c.h.b16 %v3999
    %v5317 = vunpack.c.l.b16 %v4000
    %v5318 = vunpack.c.h.b16 %v4000
    %v5319 = vunpack.c.l.b16 %v4001
    %v5320 = vunpack.c.h.b16 %v4001
    %v5321 = vunpack.c.l.b16 %v4002
    %v5322 = vunpack.c.l.b16 %v4003
    %v5323 = vunpack.c.h.b16 %v4003
    %v5324 = vunpack.c.l.b16 %v4004
    %v5325 = vunpack.c.h.b16 %v4004
    %v5326 = vunpack.c.l.b16 %v4005
    %v5327 = vunpack.c.h.b16 %v4005
    %v5328 = vunpack.c.l.b16 %v4006
    %v5329 = vunpack.c.l.b16 %v4007
    %v5330 = vunpack.c.h.b16 %v4007
    %v5331 = vunpack.c.l.b16 %v4008
    %v5332 = vunpack.c.h.b16 %v4008
    %v5333 = vunpack.c.l.b16 %v4009
    %v5334 = vunpack.c.h.b16 %v4009
    %v5335 = vunpack.c.l.b16 %v4010
    %v5336 = vunpack.c.l.b16 %v4011
    %v5337 = vunpack.c.h.b16 %v4011
    %v5338 = vunpack.c.l.b16 %v4012
    %v5339 = vunpack.c.h.b16 %v4012
    %v5340 = vunpack.c.l.b16 %v4013
    %v5341 = vunpack.c.h.b16 %v4013
    %v5342 = vunpack.c.l.b16 %v4014
    %v5343 = vunpack.c.l.b16 %v4015
    %v5344 = vunpack.c.h.b16 %v4015
    %v5345 = vunpack.c.l.b16 %v4016
    %v5346 = vunpack.c.h.b16 %v4016
    %v5347 = vunpack.c.l.b16 %v4017
    %v5348 = vunpack.c.h.b16 %v4017
    %v5349 = vunpack.c.l.b16 %v4018
    %v5350 = vunpack.c.l.b16 %v4019
    %v5351 = vunpack.c.h.b16 %v4019
    %v5352 = vunpack.c.l.b16 %v4020
    %v5353 = vunpack.c.h.b16 %v4020
    %v5354 = vunpack.c.l.b16 %v4021
    %v5355 = vunpack.c.h.b16 %v4021
    %v5356 = vunpack.c.l.b16 %v4022
    %v5357 = vunpack.c.l.b16 %v4023
    %v5358 = vunpack.c.h.b16 %v4023
    %v5359 = vunpack.c.l.b16 %v4024
    %v5360 = vunpack.c.h.b16 %v4024
    %v5361 = vunpack.c.l.b16 %v4025
    %v5362 = vunpack.c.h.b16 %v4025
    %v5363 = vunpack.c.l.b16 %v4026
    %v5364 = vunpack.c.l.b16 %v4027
    %v5365 = vunpack.c.h.b16 %v4027
    %v5366 = vunpack.c.l.b16 %v4028
    %v5367 = vunpack.c.h.b16 %v4028
    %v5368 = vunpack.c.l.b16 %v4029
    %v5369 = vunpack.c.h.b16 %v4029
    %v5370 = vunpack.c.l.b16 %v4030
    %v5371 = vunpack.c.l.b16 %v4031
    %v5372 = vunpack.c.h.b16 %v4031
    %v5373 = vunpack.c.l.b16 %v4032
    %v5374 = vunpack.c.h.b16 %v4032
    %v5375 = vunpack.c.l.b16 %v4033
    %v5376 = vunpack.c.h.b16 %v4033
    %v5377 = vunpack.c.l.b16 %v4034
    %v5378 = vunpack.c.l.b16 %v4035
    %v5379 = vunpack.c.h.b16 %v4035
    %v5380 = vunpack.c.l.b16 %v4036
    %v5381 = vunpack.c.h.b16 %v4036
    %v5382 = vunpack.c.l.b16 %v4037
    %v5383 = vunpack.c.h.b16 %v4037
    %v5384 = vunpack.c.l.b16 %v4038
    %v5385 = vunpack.c.l.b16 %v4039
    %v5386 = vunpack.c.h.b16 %v4039
    %v5387 = vunpack.c.l.b16 %v4040
    %v5388 = vunpack.c.h.b16 %v4040
    %v5389 = vunpack.c.l.b16 %v4041
    %v5390 = vunpack.c.h.b16 %v4041
    %v5391 = vunpack.c.l.b16 %v4042
    %v5392 = vunpack.c.l.b16 %v4043
    %v5393 = vunpack.c.h.b16 %v4043
    %v5394 = vunpack.c.l.b16 %v4044
    %v5395 = vunpack.c.h.b16 %v4044
    %v5396 = vunpack.c.l.b16 %v4045
    %v5397 = vunpack.c.h.b16 %v4045
    %v5398 = vunpack.c.l.b16 %v4046
    %v5399 = vunpack.c.l.b16 %v4047
    %v5400 = vunpack.c.h.b16 %v4047
    %v5401 = vunpack.c.l.b16 %v4048
    %v5402 = vunpack.c.h.b16 %v4048
    %v5403 = vunpack.c.l.b16 %v4049
    %v5404 = vunpack.c.h.b16 %v4049
    %v5405 = vunpack.c.l.b16 %v4050
    %v5406 = vunpack.c.l.b16 %v4051
    %v5407 = vunpack.c.h.b16 %v4051
    %v5408 = vunpack.c.l.b16 %v4052
    %v5409 = vunpack.c.h.b16 %v4052
    %v5410 = vunpack.c.l.b16 %v4053
    %v5411 = vunpack.c.h.b16 %v4053
    %v5412 = vunpack.c.l.b16 %v4054
    %v5413 = vunpack.c.l.b16 %v4055
    %v5414 = vunpack.c.h.b16 %v4055
    %v5415 = vunpack.c.l.b16 %v4056
    %v5416 = vunpack.c.h.b16 %v4056
    %v5417 = vunpack.c.l.b16 %v4057
    %v5418 = vunpack.c.h.b16 %v4057
    %v5419 = vunpack.c.l.b16 %v4058
    %v5420 = vunpack.c.l.b16 %v4059
    %v5421 = vunpack.c.h.b16 %v4059
    %v5422 = vunpack.c.l.b16 %v4060
    %v5423 = vunpack.c.h.b16 %v4060
    %v5424 = vunpack.c.l.b16 %v4061
    %v5425 = vunpack.c.h.b16 %v4061
    %v5426 = vunpack.c.l.b16 %v4062
    %v5427 = vunpack.c.l.b16 %v4063
    %v5428 = vunpack.c.h.b16 %v4063
    %v5429 = vunpack.c.l.b16 %v4064
    %v5430 = vunpack.c.h.b16 %v4064
    %v5431 = vunpack.c.l.b16 %v4065
    %v5432 = vunpack.c.h.b16 %v4065
    %v5433 = vunpack.c.l.b16 %v4066
    %v5434 = vunpack.c.l.b16 %v4067
    %v5435 = vunpack.c.h.b16 %v4067
    %v5436 = vunpack.c.l.b16 %v4068
    %v5437 = vunpack.c.h.b16 %v4068
    %v5438 = vunpack.c.l.b16 %v4069
    %v5439 = vunpack.c.h.b16 %v4069
    %v5440 = vunpack.c.l.b16 %v4070
    %v5441 = vunpack.c.l.b16 %v4071
    %v5442 = vunpack.c.h.b16 %v4071
    %v5443 = vunpack.c.l.b16 %v4072
    %v5444 = vunpack.c.h.b16 %v4072
    %v5445 = vunpack.c.l.b16 %v4073
    %v5446 = vunpack.c.h.b16 %v4073
    %v5447 = vunpack.c.l.b16 %v4074
    %v5448 = vunpack.c.l.b16 %v4075
    %v5449 = vunpack.c.h.b16 %v4075
    %v5450 = vunpack.c.l.b16 %v4076
    %v5451 = vunpack.c.h.b16 %v4076
    %v5452 = vunpack.c.l.b16 %v4077
    %v5453 = vunpack.c.h.b16 %v4077
    %v5454 = vunpack.c.l.b16 %v4078
    %v5455 = vunpack.c.l.b16 %v4079
    %v5456 = vunpack.c.h.b16 %v4079
    %v5457 = vunpack.c.l.b16 %v4080
    %v5458 = vunpack.c.h.b16 %v4080
    %v5459 = vunpack.c.l.b16 %v4081
    %v5460 = vunpack.c.h.b16 %v4081
    %v5461 = vunpack.c.l.b16 %v4082
    %v5462 = vunpack.c.l.b16 %v4083
    %v5463 = vunpack.c.h.b16 %v4083
    %v5464 = vunpack.c.l.b16 %v4084
    %v5465 = vunpack.c.h.b16 %v4084
    %v5466 = vunpack.c.l.b16 %v4085
    %v5467 = vunpack.c.h.b16 %v4085
    %v5468 = vunpack.c.l.b16 %v4086
    %v5469 = vunpack.c.l.b16 %v4087
    %v5470 = vunpack.c.h.b16 %v4087
    %v5471 = vunpack.c.l.b16 %v4088
    %v5472 = vunpack.c.h.b16 %v4088
    %v5473 = vunpack.c.l.b16 %v4089
    %v5474 = vunpack.c.h.b16 %v4089
    %v5475 = vunpack.c.l.b16 %v4090
    %v5476 = vunpack.c.l.b16 %v4091
    %v5477 = vunpack.c.h.b16 %v4091
    %v5478 = vunpack.c.l.b16 %v4092
    %v5479 = vunpack.c.h.b16 %v4092
    %v5480 = vunpack.c.l.b16 %v4093
    %v5481 = vunpack.c.h.b16 %v4093
    %v5482 = vunpack.c.l.b16 %v4094
    %v5483 = vunpack.c.l.b16 %v4095
    %v5484 = vunpack.c.h.b16 %v4095
    %v5485 = vunpack.c.l.b16 %v4096
    %v5486 = vunpack.c.h.b16 %v4096
    %v5487 = vunpack.c.l.b16 %v4097
    %v5488 = vunpack.c.h.b16 %v4097
    %v5489 = vunpack.c.l.b16 %v4098
    %v5490 = vunpack.c.l.b16 %v4099
    %v5491 = vunpack.c.h.b16 %v4099
    %v5492 = vunpack.c.l.b16 %v4100
    %v5493 = vunpack.c.h.b16 %v4100
    %v5494 = vunpack.c.l.b16 %v4101
    %v5495 = vunpack.c.h.b16 %v4101
    %v5496 = vunpack.c.l.b16 %v4102
    %v5497 = vunpack.c.l.b16 %v4103
    %v5498 = vunpack.c.h.b16 %v4103
    %v5499 = vunpack.c.l.b16 %v4104
    %v5500 = vunpack.c.h.b16 %v4104
    %v5501 = vunpack.c.l.b16 %v4105
    %v5502 = vunpack.c.h.b16 %v4105
    %v5503 = vunpack.c.l.b16 %v4106
    %v5504 = vunpack.c.l.b16 %v4107
    %v5505 = vunpack.c.h.b16 %v4107
    %v5506 = vunpack.c.l.b16 %v4108
    %v5507 = vunpack.c.h.b16 %v4108
    %v5508 = vunpack.c.l.b16 %v4109
    %v5509 = vunpack.c.h.b16 %v4109
    %v5510 = vunpack.c.l.b16 %v4110
    %v5511 = vunpack.c.l.b16 %v4111
    %v5512 = vunpack.c.h.b16 %v4111
    %v5513 = vunpack.c.l.b16 %v4112
    %v5514 = vunpack.c.h.b16 %v4112
    %v5515 = vunpack.c.l.b16 %v4113
    %v5516 = vunpack.c.h.b16 %v4113
    %v5517 = vunpack.c.l.b16 %v4114
    %v5518 = vunpack.c.l.b16 %v4115
    %v5519 = vunpack.c.h.b16 %v4115
    %v5520 = vunpack.c.l.b16 %v4116
    %v5521 = vunpack.c.h.b16 %v4116
    %v5522 = vunpack.c.l.b16 %v4117
    %v5523 = vunpack.c.h.b16 %v4117
    %v5524 = vunpack.c.l.b16 %v4118
    %v5525 = vunpack.c.l.b16 %v4119
    %v5526 = vunpack.c.h.b16 %v4119
    %v5527 = vunpack.c.l.b16 %v4120
    %v5528 = vunpack.c.h.b16 %v4120
    %v5529 = vunpack.c.l.b16 %v4121
    %v5530 = vunpack.c.h.b16 %v4121
    %v5531 = vunpack.c.l.b16 %v4122
    %v5532 = vunpack.c.l.b16 %v4123
    %v5533 = vunpack.c.h.b16 %v4123
    %v5534 = vunpack.c.l.b16 %v4124
    %v5535 = vunpack.c.h.b16 %v4124
    %v5536 = vunpack.c.l.b16 %v4125
    %v5537 = vunpack.c.h.b16 %v4125
    %v5538 = vunpack.c.l.b16 %v4126
    %v5539 = vunpack.c.l.b16 %v4127
    %v5540 = vunpack.c.h.b16 %v4127
    %v5541 = vunpack.c.l.b16 %v4128
    %v5542 = vunpack.c.h.b16 %v4128
    %v5543 = vunpack.c.l.b16 %v4129
    %v5544 = vunpack.c.h.b16 %v4129
    %v5545 = vunpack.c.l.b16 %v4130
    %v5546 = vunpack.c.l.b16 %v4131
    %v5547 = vunpack.c.h.b16 %v4131
    %v5548 = vunpack.c.l.b16 %v4132
    %v5549 = vunpack.c.h.b16 %v4132
    %v5550 = vunpack.c.l.b16 %v4133
    %v5551 = vunpack.c.h.b16 %v4133
    %v5552 = vunpack.c.l.b16 %v4134
    %v5553 = vunpack.c.l.b16 %v4135
    %v5554 = vunpack.c.h.b16 %v4135
    %v5555 = vunpack.c.l.b16 %v4136
    %v5556 = vunpack.c.h.b16 %v4136
    %v5557 = vunpack.c.l.b16 %v4137
    %v5558 = vunpack.c.h.b16 %v4137
    %v5559 = vunpack.c.l.b16 %v4138
    %v5560 = vunpack.c.l.b16 %v4139
    %v5561 = vunpack.c.h.b16 %v4139
    %v5562 = vunpack.c.l.b16 %v4140
    %v5563 = vunpack.c.h.b16 %v4140
    %v5564 = vunpack.c.l.b16 %v4141
    %v5565 = vunpack.c.h.b16 %v4141
    %v5566 = vunpack.c.l.b16 %v4142
    %v5567 = vunpack.c.l.b16 %v4143
    %v5568 = vunpack.c.h.b16 %v4143
    %v5569 = vunpack.c.l.b16 %v4144
    %v5570 = vunpack.c.h.b16 %v4144
    %v5571 = vunpack.c.l.b16 %v4145
    %v5572 = vunpack.c.h.b16 %v4145
    %v5573 = vunpack.c.l.b16 %v4146
    %v5574 = vunpack.c.l.b16 %v4147
    %v5575 = vunpack.c.h.b16 %v4147
    %v5576 = vunpack.c.l.b16 %v4148
    %v5577 = vunpack.c.h.b16 %v4148
    %v5578 = vunpack.c.l.b16 %v4149
    %v5579 = vunpack.c.h.b16 %v4149
    %v5580 = vunpack.c.l.b16 %v4150
    %v5581 = vunpack.c.l.b16 %v4151
    %v5582 = vunpack.c.h.b16 %v4151
    %v5583 = vunpack.c.l.b16 %v4152
    %v5584 = vunpack.c.h.b16 %v4152
    %v5585 = vunpack.c.l.b16 %v4153
    %v5586 = vunpack.c.h.b16 %v4153
    %v5587 = vunpack.c.l.b16 %v4154
    %v5588 = vunpack.c.l.b16 %v4155
    %v5589 = vunpack.c.h.b16 %v4155
    %v5590 = vunpack.c.l.b16 %v4156
    %v5591 = vunpack.c.h.b16 %v4156
    %v5592 = vunpack.c.l.b16 %v4157
    %v5593 = vunpack.c.h.b16 %v4157
    %v5594 = vunpack.c.l.b16 %v4158
    %v5595 = vunpack.c.l.b16 %v4159
    %v5596 = vunpack.c.h.b16 %v4159
    %v5597 = vunpack.c.l.b16 %v4160
    %v5598 = vunpack.c.h.b16 %v4160
    %v5599 = vunpack.c.l.b16 %v4161
    %v5600 = vunpack.c.h.b16 %v4161
    %v5601 = vunpack.c.l.b16 %v4162
    %v5602 = vunpack.c.l.b16 %v4163
    %v5603 = vunpack.c.h.b16 %v4163
    %v5604 = vunpack.c.l.b16 %v4164
    %v5605 = vunpack.c.h.b16 %v4164
    %v5606 = vunpack.c.l.b16 %v4165
    %v5607 = vunpack.c.h.b16 %v4165
    %v5608 = vunpack.c.l.b16 %v4166
    %v5609 = vunpack.c.l.b16 %v4167
    %v5610 = vunpack.c.h.b16 %v4167
    %v5611 = vunpack.c.l.b16 %v4168
    %v5612 = vunpack.c.h.b16 %v4168
    %v5613 = vunpack.c.l.b16 %v4169
    %v5614 = vunpack.c.h.b16 %v4169
    %v5615 = vunpack.c.l.b16 %v4170
    %v5616 = vunpack.c.l.b16 %v4171
    %v5617 = vunpack.c.h.b16 %v4171
    %v5618 = vunpack.c.l.b16 %v4172
    %v5619 = vunpack.c.h.b16 %v4172
    %v5620 = vunpack.c.l.b16 %v4173
    %v5621 = vunpack.c.h.b16 %v4173
    %v5622 = vunpack.c.l.b16 %v4174
    %v5623 = vunpack.c.l.b16 %v4175
    %v5624 = vunpack.c.h.b16 %v4175
    %v5625 = vunpack.c.l.b16 %v4176
    %v5626 = vunpack.c.h.b16 %v4176
    %v5627 = vunpack.c.l.b16 %v4177
    %v5628 = vunpack.c.h.b16 %v4177
    %v5629 = vunpack.c.l.b16 %v4178
    %v5630 = vunpack.c.l.b16 %v4179
    %v5631 = vunpack.c.h.b16 %v4179
    %v5632 = vunpack.c.l.b16 %v4180
    %v5633 = vunpack.c.h.b16 %v4180
    %v5634 = vunpack.c.l.b16 %v4181
    %v5635 = vunpack.c.h.b16 %v4181
    %v5636 = vunpack.c.l.b16 %v4182
    %v5637 = vpack.c.b16 %v4748, %v4741
    %v5638 = vpack.c.b16 %v4749, %v4742
    %v5639 = vpack.c.b16 %v4750, %v4743
    %v5640 = vpack.c.b16 %v4751, %v4744
    %v5641 = vpack.c.b16 %v4752, %v4745
    %v5642 = vpack.c.b16 %v4753, %v4746
    %v5643 = vpack.c.b16 %v4754, %v4747
    %v5644 = vpack.c.b16 %v4762, %v4755
    %v5645 = vpack.c.b16 %v4763, %v4756
    %v5646 = vpack.c.b16 %v4764, %v4757
    %v5647 = vpack.c.b16 %v4765, %v4758
    %v5648 = vpack.c.b16 %v4766, %v4759
    %v5649 = vpack.c.b16 %v4767, %v4760
    %v5650 = vpack.c.b16 %v4768, %v4761
    %v5651 = vpack.c.b16 %v4776, %v4769
    %v5652 = vpack.c.b16 %v4777, %v4770
    %v5653 = vpack.c.b16 %v4778, %v4771
    %v5654 = vpack.c.b16 %v4779, %v4772
    %v5655 = vpack.c.b16 %v4780, %v4773
    %v5656 = vpack.c.b16 %v4781, %v4774
    %v5657 = vpack.c.b16 %v4782, %v4775
    %v5658 = vpack.c.b16 %v4790, %v4783
    %v5659 = vpack.c.b16 %v4791, %v4784
    %v5660 = vpack.c.b16 %v4792, %v4785
    %v5661 = vpack.c.b16 %v4793, %v4786
    %v5662 = vpack.c.b16 %v4794, %v4787
    %v5663 = vpack.c.b16 %v4795, %v4788
    %v5664 = vpack.c.b16 %v4796, %v4789
    %v5665 = vpack.c.b16 %v4804, %v4797
    %v5666 = vpack.c.b16 %v4805, %v4798
    %v5667 = vpack.c.b16 %v4806, %v4799
    %v5668 = vpack.c.b16 %v4807, %v4800
    %v5669 = vpack.c.b16 %v4808, %v4801
    %v5670 = vpack.c.b16 %v4809, %v4802
    %v5671 = vpack.c.b16 %v4810, %v4803
    %v5672 = vpack.c.b16 %v4818, %v4811
    %v5673 = vpack.c.b16 %v4819, %v4812
    %v5674 = vpack.c.b16 %v4820, %v4813
    %v5675 = vpack.c.b16 %v4821, %v4814
    %v5676 = vpack.c.b16 %v4822, %v4815
    %v5677 = vpack.c.b16 %v4823, %v4816
    %v5678 = vpack.c.b16 %v4824, %v4817
    %v5679 = vpack.c.b16 %v4832, %v4825
    %v5680 = vpack.c.b16 %v4833, %v4826
    %v5681 = vpack.c.b16 %v4834, %v4827
    %v5682 = vpack.c.b16 %v4835, %v4828
    %v5683 = vpack.c.b16 %v4836, %v4829
    %v5684 = vpack.c.b16 %v4837, %v4830
    %v5685 = vpack.c.b16 %v4838, %v4831
    %v5686 = vpack.c.b16 %v4846, %v4839
    %v5687 = vpack.c.b16 %v4847, %v4840
    %v5688 = vpack.c.b16 %v4848, %v4841
    %v5689 = vpack.c.b16 %v4849, %v4842
    %v5690 = vpack.c.b16 %v4850, %v4843
    %v5691 = vpack.c.b16 %v4851, %v4844
    %v5692 = vpack.c.b16 %v4852, %v4845
    %v5693 = vpack.c.b16 %v4860, %v4853
    %v5694 = vpack.c.b16 %v4861, %v4854
    %v5695 = vpack.c.b16 %v4862, %v4855
    %v5696 = vpack.c.b16 %v4863, %v4856
    %v5697 = vpack.c.b16 %v4864, %v4857
    %v5698 = vpack.c.b16 %v4865, %v4858
    %v5699 = vpack.c.b16 %v4866, %v4859
    %v5700 = vpack.c.b16 %v4874, %v4867
    %v5701 = vpack.c.b16 %v4875, %v4868
    %v5702 = vpack.c.b16 %v4876, %v4869
    %v5703 = vpack.c.b16 %v4877, %v4870
    %v5704 = vpack.c.b16 %v4878, %v4871
    %v5705 = vpack.c.b16 %v4879, %v4872
    %v5706 = vpack.c.b16 %v4880, %v4873
    %v5707 = vpack.c.b16 %v4888, %v4881
    %v5708 = vpack.c.b16 %v4889, %v4882
    %v5709 = vpack.c.b16 %v4890, %v4883
    %v5710 = vpack.c.b16 %v4891, %v4884
    %v5711 = vpack.c.b16 %v4892, %v4885
    %v5712 = vpack.c.b16 %v4893, %v4886
    %v5713 = vpack.c.b16 %v4894, %v4887
    %v5714 = vpack.c.b16 %v4902, %v4895
    %v5715 = vpack.c.b16 %v4903, %v4896
    %v5716 = vpack.c.b16 %v4904, %v4897
    %v5717 = vpack.c.b16 %v4905, %v4898
    %v5718 = vpack.c.b16 %v4906, %v4899
    %v5719 = vpack.c.b16 %v4907, %v4900
    %v5720 = vpack.c.b16 %v4908, %v4901
    %v5721 = vpack.c.b16 %v4916, %v4909
    %v5722 = vpack.c.b16 %v4917, %v4910
    %v5723 = vpack.c.b16 %v4918, %v4911
    %v5724 = vpack.c.b16 %v4919, %v4912
    %v5725 = vpack.c.b16 %v4920, %v4913
    %v5726 = vpack.c.b16 %v4921, %v4914
    %v5727 = vpack.c.b16 %v4922, %v4915
    %v5728 = vpack.c.b16 %v4930, %v4923
    %v5729 = vpack.c.b16 %v4931, %v4924
    %v5730 = vpack.c.b16 %v4932, %v4925
    %v5731 = vpack.c.b16 %v4933, %v4926
    %v5732 = vpack.c.b16 %v4934, %v4927
    %v5733 = vpack.c.b16 %v4935, %v4928
    %v5734 = vpack.c.b16 %v4936, %v4929
    %v5735 = vpack.c.b16 %v4944, %v4937
    %v5736 = vpack.c.b16 %v4945, %v4938
    %v5737 = vpack.c.b16 %v4946, %v4939
    %v5738 = vpack.c.b16 %v4947, %v4940
    %v5739 = vpack.c.b16 %v4948, %v4941
    %v5740 = vpack.c.b16 %v4949, %v4942
    %v5741 = vpack.c.b16 %v4950, %v4943
    %v5742 = vpack.c.b16 %v4958, %v4951
    %v5743 = vpack.c.b16 %v4959, %v4952
    %v5744 = vpack.c.b16 %v4960, %v4953
    %v5745 = vpack.c.b16 %v4961, %v4954
    %v5746 = vpack.c.b16 %v4962, %v4955
    %v5747 = vpack.c.b16 %v4963, %v4956
    %v5748 = vpack.c.b16 %v4964, %v4957
    %v5749 = vpack.c.b16 %v4972, %v4965
    %v5750 = vpack.c.b16 %v4973, %v4966
    %v5751 = vpack.c.b16 %v4974, %v4967
    %v5752 = vpack.c.b16 %v4975, %v4968
    %v5753 = vpack.c.b16 %v4976, %v4969
    %v5754 = vpack.c.b16 %v4977, %v4970
    %v5755 = vpack.c.b16 %v4978, %v4971
    %v5756 = vpack.c.b16 %v4986, %v4979
    %v5757 = vpack.c.b16 %v4987, %v4980
    %v5758 = vpack.c.b16 %v4988, %v4981
    %v5759 = vpack.c.b16 %v4989, %v4982
    %v5760 = vpack.c.b16 %v4990, %v4983
    %v5761 = vpack.c.b16 %v4991, %v4984
    %v5762 = vpack.c.b16 %v4992, %v4985
    %v5763 = vpack.c.b16 %v5000, %v4993
    %v5764 = vpack.c.b16 %v5001, %v4994
    %v5765 = vpack.c.b16 %v5002, %v4995
    %v5766 = vpack.c.b16 %v5003, %v4996
    %v5767 = vpack.c.b16 %v5004, %v4997
    %v5768 = vpack.c.b16 %v5005, %v4998
    %v5769 = vpack.c.b16 %v5006, %v4999
    %v5770 = vpack.c.b16 %v5014, %v5007
    %v5771 = vpack.c.b16 %v5015, %v5008
    %v5772 = vpack.c.b16 %v5016, %v5009
    %v5773 = vpack.c.b16 %v5017, %v5010
    %v5774 = vpack.c.b16 %v5018, %v5011
    %v5775 = vpack.c.b16 %v5019, %v5012
    %v5776 = vpack.c.b16 %v5020, %v5013
    %v5777 = vpack.c.b16 %v5028, %v5021
    %v5778 = vpack.c.b16 %v5029, %v5022
    %v5779 = vpack.c.b16 %v5030, %v5023
    %v5780 = vpack.c.b16 %v5031, %v5024
    %v5781 = vpack.c.b16 %v5032, %v5025
    %v5782 = vpack.c.b16 %v5033, %v5026
    %v5783 = vpack.c.b16 %v5034, %v5027
    %v5784 = vpack.c.b16 %v5042, %v5035
    %v5785 = vpack.c.b16 %v5043, %v5036
    %v5786 = vpack.c.b16 %v5044, %v5037
    %v5787 = vpack.c.b16 %v5045, %v5038
    %v5788 = vpack.c.b16 %v5046, %v5039
    %v5789 = vpack.c.b16 %v5047, %v5040
    %v5790 = vpack.c.b16 %v5048, %v5041
    %v5791 = vpack.c.b16 %v5056, %v5049
    %v5792 = vpack.c.b16 %v5057, %v5050
    %v5793 = vpack.c.b16 %v5058, %v5051
    %v5794 = vpack.c.b16 %v5059, %v5052
    %v5795 = vpack.c.b16 %v5060, %v5053
    %v5796 = vpack.c.b16 %v5061, %v5054
    %v5797 = vpack.c.b16 %v5062, %v5055
    %v5798 = vpack.c.b16 %v5070, %v5063
    %v5799 = vpack.c.b16 %v5071, %v5064
    %v5800 = vpack.c.b16 %v5072, %v5065
    %v5801 = vpack.c.b16 %v5073, %v5066
    %v5802 = vpack.c.b16 %v5074, %v5067
    %v5803 = vpack.c.b16 %v5075, %v5068
    %v5804 = vpack.c.b16 %v5076, %v5069
    %v5805 = vpack.c.b16 %v5084, %v5077
    %v5806 = vpack.c.b16 %v5085, %v5078
    %v5807 = vpack.c.b16 %v5086, %v5079
    %v5808 = vpack.c.b16 %v5087, %v5080
    %v5809 = vpack.c.b16 %v5088, %v5081
    %v5810 = vpack.c.b16 %v5089, %v5082
    %v5811 = vpack.c.b16 %v5090, %v5083
    %v5812 = vpack.c.b16 %v5098, %v5091
    %v5813 = vpack.c.b16 %v5099, %v5092
    %v5814 = vpack.c.b16 %v5100, %v5093
    %v5815 = vpack.c.b16 %v5101, %v5094
    %v5816 = vpack.c.b16 %v5102, %v5095
    %v5817 = vpack.c.b16 %v5103, %v5096
    %v5818 = vpack.c.b16 %v5104, %v5097
    %v5819 = vpack.c.b16 %v5112, %v5105
    %v5820 = vpack.c.b16 %v5113, %v5106
    %v5821 = vpack.c.b16 %v5114, %v5107
    %v5822 = vpack.c.b16 %v5115, %v5108
    %v5823 = vpack.c.b16 %v5116, %v5109
    %v5824 = vpack.c.b16 %v5117, %v5110
    %v5825 = vpack.c.b16 %v5118, %v5111
    %v5826 = vpack.c.b16 %v5126, %v5119
    %v5827 = vpack.c.b16 %v5127, %v5120
    %v5828 = vpack.c.b16 %v5128, %v5121
    %v5829 = vpack.c.b16 %v5129, %v5122
    %v5830 = vpack.c.b16 %v5130, %v5123
    %v5831 = vpack.c.b16 %v5131, %v5124
    %v5832 = vpack.c.b16 %v5132, %v5125
    %v5833 = vpack.c.b16 %v5140, %v5133
    %v5834 = vpack.c.b16 %v5141, %v5134
    %v5835 = vpack.c.b16 %v5142, %v5135
    %v5836 = vpack.c.b16 %v5143, %v5136
    %v5837 = vpack.c.b16 %v5144, %v5137
    %v5838 = vpack.c.b16 %v5145, %v5138
    %v5839 = vpack.c.b16 %v5146, %v5139
    %v5840 = vpack.c.b16 %v5154, %v5147
    %v5841 = vpack.c.b16 %v5155, %v5148
    %v5842 = vpack.c.b16 %v5156, %v5149
    %v5843 = vpack.c.b16 %v5157, %v5150
    %v5844 = vpack.c.b16 %v5158, %v5151
    %v5845 = vpack.c.b16 %v5159, %v5152
    %v5846 = vpack.c.b16 %v5160, %v5153
    %v5847 = vpack.c.b16 %v5168, %v5161
    %v5848 = vpack.c.b16 %v5169, %v5162
    %v5849 = vpack.c.b16 %v5170, %v5163
    %v5850 = vpack.c.b16 %v5171, %v5164
    %v5851 = vpack.c.b16 %v5172, %v5165
    %v5852 = vpack.c.b16 %v5173, %v5166
    %v5853 = vpack.c.b16 %v5174, %v5167
    %v5854 = vpack.c.b16 %v5182, %v5175
    %v5855 = vpack.c.b16 %v5183, %v5176
    %v5856 = vpack.c.b16 %v5184, %v5177
    %v5857 = vpack.c.b16 %v5185, %v5178
    %v5858 = vpack.c.b16 %v5186, %v5179
    %v5859 = vpack.c.b16 %v5187, %v5180
    %v5860 = vpack.c.b16 %v5188, %v5181
    %v5861 = vpack.c.b16 %v5196, %v5189
    %v5862 = vpack.c.b16 %v5197, %v5190
    %v5863 = vpack.c.b16 %v5198, %v5191
    %v5864 = vpack.c.b16 %v5199, %v5192
    %v5865 = vpack.c.b16 %v5200, %v5193
    %v5866 = vpack.c.b16 %v5201, %v5194
    %v5867 = vpack.c.b16 %v5202, %v5195
    %v5868 = vpack.c.b16 %v5210, %v5203
    %v5869 = vpack.c.b16 %v5211, %v5204
    %v5870 = vpack.c.b16 %v5212, %v5205
    %v5871 = vpack.c.b16 %v5213, %v5206
    %v5872 = vpack.c.b16 %v5214, %v5207
    %v5873 = vpack.c.b16 %v5215, %v5208
    %v5874 = vpack.c.b16 %v5216, %v5209
    %v5875 = vpack.c.b16 %v5224, %v5217
    %v5876 = vpack.c.b16 %v5225, %v5218
    %v5877 = vpack.c.b16 %v5226, %v5219
    %v5878 = vpack.c.b16 %v5227, %v5220
    %v5879 = vpack.c.b16 %v5228, %v5221
    %v5880 = vpack.c.b16 %v5229, %v5222
    %v5881 = vpack.c.b16 %v5230, %v5223
    %v5882 = vpack.c.b16 %v5238, %v5231
    %v5883 = vpack.c.b16 %v5239, %v5232
    %v5884 = vpack.c.b16 %v5240, %v5233
    %v5885 = vpack.c.b16 %v5241, %v5234
    %v5886 = vpack.c.b16 %v5242, %v5235
    %v5887 = vpack.c.b16 %v5243, %v5236
    %v5888 = vpack.c.b16 %v5244, %v5237
    %v5889 = vpack.c.b16 %v5252, %v5245
    %v5890 = vpack.c.b16 %v5253, %v5246
    %v5891 = vpack.c.b16 %v5254, %v5247
    %v5892 = vpack.c.b16 %v5255, %v5248
    %v5893 = vpack.c.b16 %v5256, %v5249
    %v5894 = vpack.c.b16 %v5257, %v5250
    %v5895 = vpack.c.b16 %v5258, %v5251
    %v5896 = vpack.c.b16 %v5266, %v5259
    %v5897 = vpack.c.b16 %v5267, %v5260
    %v5898 = vpack.c.b16 %v5268, %v5261
    %v5899 = vpack.c.b16 %v5269, %v5262
    %v5900 = vpack.c.b16 %v5270, %v5263
    %v5901 = vpack.c.b16 %v5271, %v5264
    %v5902 = vpack.c.b16 %v5272, %v5265
    %v5903 = vpack.c.b16 %v5280, %v5273
    %v5904 = vpack.c.b16 %v5281, %v5274
    %v5905 = vpack.c.b16 %v5282, %v5275
    %v5906 = vpack.c.b16 %v5283, %v5276
    %v5907 = vpack.c.b16 %v5284, %v5277
    %v5908 = vpack.c.b16 %v5285, %v5278
    %v5909 = vpack.c.b16 %v5286, %v5279
    %v5910 = vpack.c.b16 %v5294, %v5287
    %v5911 = vpack.c.b16 %v5295, %v5288
    %v5912 = vpack.c.b16 %v5296, %v5289
    %v5913 = vpack.c.b16 %v5297, %v5290
    %v5914 = vpack.c.b16 %v5298, %v5291
    %v5915 = vpack.c.b16 %v5299, %v5292
    %v5916 = vpack.c.b16 %v5300, %v5293
    %v5917 = vpack.c.b16 %v5308, %v5301
    %v5918 = vpack.c.b16 %v5309, %v5302
    %v5919 = vpack.c.b16 %v5310, %v5303
    %v5920 = vpack.c.b16 %v5311, %v5304
    %v5921 = vpack.c.b16 %v5312, %v5305
    %v5922 = vpack.c.b16 %v5313, %v5306
    %v5923 = vpack.c.b16 %v5314, %v5307
    %v5924 = vpack.c.b16 %v5322, %v5315
    %v5925 = vpack.c.b16 %v5323, %v5316
    %v5926 = vpack.c.b16 %v5324, %v5317
    %v5927 = vpack.c.b16 %v5325, %v5318
    %v5928 = vpack.c.b16 %v5326, %v5319
    %v5929 = vpack.c.b16 %v5327, %v5320
    %v5930 = vpack.c.b16 %v5328, %v5321
    %v5931 = vpack.c.b16 %v5336, %v5329
    %v5932 = vpack.c.b16 %v5337, %v5330
    %v5933 = vpack.c.b16 %v5338, %v5331
    %v5934 = vpack.c.b16 %v5339, %v5332
    %v5935 = vpack.c.b16 %v5340, %v5333
    %v5936 = vpack.c.b16 %v5341, %v5334
    %v5937 = vpack.c.b16 %v5342, %v5335
    %v5938 = vpack.c.b16 %v5350, %v5343
    %v5939 = vpack.c.b16 %v5351, %v5344
    %v5940 = vpack.c.b16 %v5352, %v5345
    %v5941 = vpack.c.b16 %v5353, %v5346
    %v5942 = vpack.c.b16 %v5354, %v5347
    %v5943 = vpack.c.b16 %v5355, %v5348
    %v5944 = vpack.c.b16 %v5356, %v5349
    %v5945 = vpack.c.b16 %v5364, %v5357
    %v5946 = vpack.c.b16 %v5365, %v5358
    %v5947 = vpack.c.b16 %v5366, %v5359
    %v5948 = vpack.c.b16 %v5367, %v5360
    %v5949 = vpack.c.b16 %v5368, %v5361
    %v5950 = vpack.c.b16 %v5369, %v5362
    %v5951 = vpack.c.b16 %v5370, %v5363
    %v5952 = vpack.c.b16 %v5378, %v5371
    %v5953 = vpack.c.b16 %v5379, %v5372
    %v5954 = vpack.c.b16 %v5380, %v5373
    %v5955 = vpack.c.b16 %v5381, %v5374
    %v5956 = vpack.c.b16 %v5382, %v5375
    %v5957 = vpack.c.b16 %v5383, %v5376
    %v5958 = vpack.c.b16 %v5384, %v5377
    %v5959 = vpack.c.b16 %v5392, %v5385
    %v5960 = vpack.c.b16 %v5393, %v5386
    %v5961 = vpack.c.b16 %v5394, %v5387
    %v5962 = vpack.c.b16 %v5395, %v5388
    %v5963 = vpack.c.b16 %v5396, %v5389
    %v5964 = vpack.c.b16 %v5397, %v5390
    %v5965 = vpack.c.b16 %v5398, %v5391
    %v5966 = vpack.c.b16 %v5406, %v5399
    %v5967 = vpack.c.b16 %v5407, %v5400
    %v5968 = vpack.c.b16 %v5408, %v5401
    %v5969 = vpack.c.b16 %v5409, %v5402
    %v5970 = vpack.c.b16 %v5410, %v5403
    %v5971 = vpack.c.b16 %v5411, %v5404
    %v5972 = vpack.c.b16 %v5412, %v5405
    %v5973 = vpack.c.b16 %v5420, %v5413
    %v5974 = vpack.c.b16 %v5421, %v5414
    %v5975 = vpack.c.b16 %v5422, %v5415
    %v5976 = vpack.c.b16 %v5423, %v5416
    %v5977 = vpack.c.b16 %v5424, %v5417
    %v5978 = vpack.c.b16 %v5425, %v5418
    %v5979 = vpack.c.b16 %v5426, %v5419
    %v5980 = vpack.c.b16 %v5434, %v5427
    %v5981 = vpack.c.b16 %v5435, %v5428
    %v5982 = vpack.c.b16 %v5436, %v5429
    %v5983 = vpack.c.b16 %v5437, %v5430
    %v5984 = vpack.c.b16 %v5438, %v5431
    %v5985 = vpack.c.b16 %v5439, %v5432
    %v5986 = vpack.c.b16 %v5440, %v5433
    %v5987 = vpack.c.b16 %v5448, %v5441
    %v5988 = vpack.c.b16 %v5449, %v5442
    %v5989 = vpack.c.b16 %v5450, %v5443
    %v5990 = vpack.c.b16 %v5451, %v5444
    %v5991 = vpack.c.b16 %v5452, %v5445
    %v5992 = vpack.c.b16 %v5453, %v5446
    %v5993 = vpack.c.b16 %v5454, %v5447
    %v5994 = vpack.c.b16 %v5462, %v5455
    %v5995 = vpack.c.b16 %v5463, %v5456
    %v5996 = vpack.c.b16 %v5464, %v5457
    %v5997 = vpack.c.b16 %v5465, %v5458
    %v5998 = vpack.c.b16 %v5466, %v5459
    %v5999 = vpack.c.b16 %v5467, %v5460
    %v6000 = vpack.c.b16 %v5468, %v5461
    %v6001 = vpack.c.b16 %v5476, %v5469
    %v6002 = vpack.c.b16 %v5477, %v5470
    %v6003 = vpack.c.b16 %v5478, %v5471
    %v6004 = vpack.c.b16 %v5479, %v5472
    %v6005 = vpack.c.b16 %v5480, %v5473
    %v6006 = vpack.c.b16 %v5481, %v5474
    %v6007 = vpack.c.b16 %v5482, %v5475
    %v6008 = vpack.c.b16 %v5490, %v5483
    %v6009 = vpack.c.b16 %v5491, %v5484
    %v6010 = vpack.c.b16 %v5492, %v5485
    %v6011 = vpack.c.b16 %v5493, %v5486
    %v6012 = vpack.c.b16 %v5494, %v5487
    %v6013 = vpack.c.b16 %v5495, %v5488
    %v6014 = vpack.c.b16 %v5496, %v5489
    %v6015 = vpack.c.b16 %v5504, %v5497
    %v6016 = vpack.c.b16 %v5505, %v5498
    %v6017 = vpack.c.b16 %v5506, %v5499
    %v6018 = vpack.c.b16 %v5507, %v5500
    %v6019 = vpack.c.b16 %v5508, %v5501
    %v6020 = vpack.c.b16 %v5509, %v5502
    %v6021 = vpack.c.b16 %v5510, %v5503
    %v6022 = vpack.c.b16 %v5518, %v5511
    %v6023 = vpack.c.b16 %v5519, %v5512
    %v6024 = vpack.c.b16 %v5520, %v5513
    %v6025 = vpack.c.b16 %v5521, %v5514
    %v6026 = vpack.c.b16 %v5522, %v5515
    %v6027 = vpack.c.b16 %v5523, %v5516
    %v6028 = vpack.c.b16 %v5524, %v5517
    %v6029 = vpack.c.b16 %v5532, %v5525
    %v6030 = vpack.c.b16 %v5533, %v5526
    %v6031 = vpack.c.b16 %v5534, %v5527
    %v6032 = vpack.c.b16 %v5535, %v5528
    %v6033 = vpack.c.b16 %v5536, %v5529
    %v6034 = vpack.c.b16 %v5537, %v5530
    %v6035 = vpack.c.b16 %v5538, %v5531
    %v6036 = vpack.c.b16 %v5546, %v5539
    %v6037 = vpack.c.b16 %v5547, %v5540
    %v6038 = vpack.c.b16 %v5548, %v5541
    %v6039 = vpack.c.b16 %v5549, %v5542
    %v6040 = vpack.c.b16 %v5550, %v5543
    %v6041 = vpack.c.b16 %v5551, %v5544
    %v6042 = vpack.c.b16 %v5552, %v5545
    %v6043 = vpack.c.b16 %v5560, %v5553
    %v6044 = vpack.c.b16 %v5561, %v5554
    %v6045 = vpack.c.b16 %v5562, %v5555
    %v6046 = vpack.c.b16 %v5563, %v5556
    %v6047 = vpack.c.b16 %v5564, %v5557
    %v6048 = vpack.c.b16 %v5565, %v5558
    %v6049 = vpack.c.b16 %v5566, %v5559
    %v6050 = vpack.c.b16 %v5574, %v5567
    %v6051 = vpack.c.b16 %v5575, %v5568
    %v6052 = vpack.c.b16 %v5576, %v5569
    %v6053 = vpack.c.b16 %v5577, %v5570
    %v6054 = vpack.c.b16 %v5578, %v5571
    %v6055 = vpack.c.b16 %v5579, %v5572
    %v6056 = vpack.c.b16 %v5580, %v5573
    %v6057 = vpack.c.b16 %v5588, %v5581
    %v6058 = vpack.c.b16 %v5589, %v5582
    %v6059 = vpack.c.b16 %v5590, %v5583
    %v6060 = vpack.c.b16 %v5591, %v5584
    %v6061 = vpack.c.b16 %v5592, %v5585
    %v6062 = vpack.c.b16 %v5593, %v5586
    %v6063 = vpack.c.b16 %v5594, %v5587
    %v6064 = vpack.c.b16 %v5602, %v5595
    %v6065 = vpack.c.b16 %v5603, %v5596
    %v6066 = vpack.c.b16 %v5604, %v5597
    %v6067 = vpack.c.b16 %v5605, %v5598
    %v6068 = vpack.c.b16 %v5606, %v5599
    %v6069 = vpack.c.b16 %v5607, %v5600
    %v6070 = vpack.c.b16 %v5608, %v5601
    %v6071 = vpack.c.b16 %v5616, %v5609
    %v6072 = vpack.c.b16 %v5617, %v5610
    %v6073 = vpack.c.b16 %v5618, %v5611
    %v6074 = vpack.c.b16 %v5619, %v5612
    %v6075 = vpack.c.b16 %v5620, %v5613
    %v6076 = vpack.c.b16 %v5621, %v5614
    %v6077 = vpack.c.b16 %v5622, %v5615
    %v6078 = vpack.c.b16 %v5630, %v5623
    %v6079 = vpack.c.b16 %v5631, %v5624
    %v6080 = vpack.c.b16 %v5632, %v5625
    %v6081 = vpack.c.b16 %v5633, %v5626
    %v6082 = vpack.c.b16 %v5634, %v5627
    %v6083 = vpack.c.b16 %v5635, %v5628
    %v6084 = vpack.c.b16 %v5636, %v5629
    %6533 = vmatprep.subr.bf16.mxu0 %v5687
    %6534 = vmatpush1.bf16.msra.mxu0 %v5686
    %6535 = vmatprep.subr.bf16.mxu0 %v5680
    %6536 = vmatpush1.bf16.msra.mxu0 %v5679
    %6537 = vmatprep.subr.bf16.mxu0 %v5673
    %6538 = vmatpush1.bf16.msra.mxu0 %v5672
    %6539 = vmatprep.subr.bf16.mxu0 %v5666
    %6540 = vmatpush1.bf16.msra.mxu0 %v5665
    %6541 = vmatprep.subr.bf16.mxu0 %v5659
    %6542 = vmatpush1.bf16.msra.mxu0 %v5658
    %6543 = vmatprep.subr.bf16.mxu0 %v5652
    %6544 = vmatpush1.bf16.msra.mxu0 %v5651
    %6545 = vmatprep.subr.bf16.mxu0 %v5645
    %6546 = vmatpush1.bf16.msra.mxu0 %v5644
    %6547 = vmatprep.subr.bf16.mxu0 %v5638
    %6548 = vmatpush1.bf16.msra.mxu0 %v5637
    %6549 = vmatprep.subr.bf16.mxu0 %v5743
    %6550 = vmatpush2.bf16.msra.mxu0 %v5742
    %6551 = vmatprep.subr.bf16.mxu0 %v5736
    %6552 = vmatpush2.bf16.msra.mxu0 %v5735
    %6553 = vmatprep.subr.bf16.mxu0 %v5729
    %6554 = vmatpush2.bf16.msra.mxu0 %v5728
    %6555 = vmatprep.subr.bf16.mxu0 %v5722
    %6556 = vmatpush2.bf16.msra.mxu0 %v5721
    %6557 = vmatprep.subr.bf16.mxu0 %v5715
    %6558 = vmatpush2.bf16.msra.mxu0 %v5714
    %6559 = vmatprep.subr.bf16.mxu0 %v5708
    %6560 = vmatpush2.bf16.msra.mxu0 %v5707
    %6561 = vmatprep.subr.bf16.mxu0 %v5701
    %6562 = vmatpush2.bf16.msra.mxu0 %v5700
    %6563 = vmatprep.subr.bf16.mxu0 %v5694
    %6564 = vmatpush2.bf16.msra.mxu0 %v5693
    %6565 = vmatprep.mubr.bf16.mxu0 %v4186
    %6566 = vmatmul.mubr.bf16.gmra.mxu0 %v4185
    %v6567 = vpop.f32.mrf.mxu0
    %v6568 = vadd.f32 %v4197, %v6567
    %v6569 = vpop.f32.mrf.mxu0
    %v6570 = vadd.f32 %v4201, %v6569
    %v6571 = vpop.f32.mrf.mxu0
    %v6572 = vpop.f32.mrf.mxu0
    %6573 = vdwg.mxu0
    %6574 = vmatprep.subr.bf16.mxu0 %v5799
    %6575 = vmatpush1.bf16.msra.mxu0 %v5798
    %6576 = vmatprep.subr.bf16.mxu0 %v5792
    %6577 = vmatpush1.bf16.msra.mxu0 %v5791
    %6578 = vmatprep.subr.bf16.mxu0 %v5785
    %6579 = vmatpush1.bf16.msra.mxu0 %v5784
    %6580 = vmatprep.subr.bf16.mxu0 %v5778
    %6581 = vmatpush1.bf16.msra.mxu0 %v5777
    %6582 = vmatprep.subr.bf16.mxu0 %v5771
    %6583 = vmatpush1.bf16.msra.mxu0 %v5770
    %6584 = vmatprep.subr.bf16.mxu0 %v5764
    %6585 = vmatpush1.bf16.msra.mxu0 %v5763
    %6586 = vmatprep.subr.bf16.mxu0 %v5757
    %6587 = vmatpush1.bf16.msra.mxu0 %v5756
    %6588 = vmatprep.subr.bf16.mxu0 %v5750
    %6589 = vmatpush1.bf16.msra.mxu0 %v5749
    %6590 = vmatprep.subr.bf16.mxu0 %v5855
    %6591 = vmatpush2.bf16.msra.mxu0 %v5854
    %6592 = vmatprep.subr.bf16.mxu0 %v5848
    %6593 = vmatpush2.bf16.msra.mxu0 %v5847
    %6594 = vmatprep.subr.bf16.mxu0 %v5841
    %6595 = vmatpush2.bf16.msra.mxu0 %v5840
    %6596 = vmatprep.subr.bf16.mxu0 %v5834
    %6597 = vmatpush2.bf16.msra.mxu0 %v5833
    %6598 = vmatprep.subr.bf16.mxu0 %v5827
    %6599 = vmatpush2.bf16.msra.mxu0 %v5826
    %6600 = vmatprep.subr.bf16.mxu0 %v5820
    %6601 = vmatpush2.bf16.msra.mxu0 %v5819
    %6602 = vmatprep.subr.bf16.mxu0 %v5813
    %6603 = vmatpush2.bf16.msra.mxu0 %v5812
    %6604 = vmatprep.subr.bf16.mxu0 %v5806
    %6605 = vmatpush2.bf16.msra.mxu0 %v5805
    %6606 = vmatprep.mubr.bf16.mxu0 %v4188
    %6607 = vmatmul.mubr.bf16.gmra.mxu0 %v4187
    %v6608 = vpop.f32.mrf.mxu0
    %v6609 = vadd.f32 %v6568, %v6608
    %v6610 = vpop.f32.mrf.mxu0
    %v6611 = vadd.f32 %v6570, %v6610
    %v6612 = vpop.f32.mrf.mxu0
    %v6613 = vpop.f32.mrf.mxu0
    %6614 = vdwg.mxu0
    %6615 = vmatprep.subr.bf16.mxu0 %v5911
    %6616 = vmatpush1.bf16.msra.mxu0 %v5910
    %6617 = vmatprep.subr.bf16.mxu0 %v5904
    %6618 = vmatpush1.bf16.msra.mxu0 %v5903
    %6619 = vmatprep.subr.bf16.mxu0 %v5897
    %6620 = vmatpush1.bf16.msra.mxu0 %v5896
    %6621 = vmatprep.subr.bf16.mxu0 %v5890
    %6622 = vmatpush1.bf16.msra.mxu0 %v5889
    %6623 = vmatprep.subr.bf16.mxu0 %v5883
    %6624 = vmatpush1.bf16.msra.mxu0 %v5882
    %6625 = vmatprep.subr.bf16.mxu0 %v5876
    %6626 = vmatpush1.bf16.msra.mxu0 %v5875
    %6627 = vmatprep.subr.bf16.mxu0 %v5869
    %6628 = vmatpush1.bf16.msra.mxu0 %v5868
    %6629 = vmatprep.subr.bf16.mxu0 %v5862
    %6630 = vmatpush1.bf16.msra.mxu0 %v5861
    %6631 = vmatprep.subr.bf16.mxu0 %v5967
    %6632 = vmatpush2.bf16.msra.mxu0 %v5966
    %6633 = vmatprep.subr.bf16.mxu0 %v5960
    %6634 = vmatpush2.bf16.msra.mxu0 %v5959
    %6635 = vmatprep.subr.bf16.mxu0 %v5953
    %6636 = vmatpush2.bf16.msra.mxu0 %v5952
    %6637 = vmatprep.subr.bf16.mxu0 %v5946
    %6638 = vmatpush2.bf16.msra.mxu0 %v5945
    %6639 = vmatprep.subr.bf16.mxu0 %v5939
    %6640 = vmatpush2.bf16.msra.mxu0 %v5938
    %6641 = vmatprep.subr.bf16.mxu0 %v5932
    %6642 = vmatpush2.bf16.msra.mxu0 %v5931
    %6643 = vmatprep.subr.bf16.mxu0 %v5925
    %6644 = vmatpush2.bf16.msra.mxu0 %v5924
    %6645 = vmatprep.subr.bf16.mxu0 %v5918
    %6646 = vmatpush2.bf16.msra.mxu0 %v5917
    %6647 = vmatprep.mubr.bf16.mxu0 %v4190
    %6648 = vmatmul.mubr.bf16.gmra.mxu0 %v4189
    %v6649 = vpop.f32.mrf.mxu0
    %v6650 = vadd.f32 %v6609, %v6649
    %v6651 = vpop.f32.mrf.mxu0
    %v6652 = vadd.f32 %v6611, %v6651
    %v6653 = vpop.f32.mrf.mxu0
    %v6654 = vpop.f32.mrf.mxu0
    %6655 = vdwg.mxu0
    %6656 = vmatprep.subr.bf16.mxu0 %v6023
    %6657 = vmatpush1.bf16.msra.mxu0 %v6022
    %6658 = vmatprep.subr.bf16.mxu0 %v6016
    %6659 = vmatpush1.bf16.msra.mxu0 %v6015
    %6660 = vmatprep.subr.bf16.mxu0 %v6009
    %6661 = vmatpush1.bf16.msra.mxu0 %v6008
    %6662 = vmatprep.subr.bf16.mxu0 %v6002
    %6663 = vmatpush1.bf16.msra.mxu0 %v6001
    %6664 = vmatprep.subr.bf16.mxu0 %v5995
    %6665 = vmatpush1.bf16.msra.mxu0 %v5994
    %6666 = vmatprep.subr.bf16.mxu0 %v5988
    %6667 = vmatpush1.bf16.msra.mxu0 %v5987
    %6668 = vmatprep.subr.bf16.mxu0 %v5981
    %6669 = vmatpush1.bf16.msra.mxu0 %v5980
    %6670 = vmatprep.subr.bf16.mxu0 %v5974
    %6671 = vmatpush1.bf16.msra.mxu0 %v5973
    %6672 = vmatprep.subr.bf16.mxu0 %v6079
    %6673 = vmatpush2.bf16.msra.mxu0 %v6078
    %6674 = vmatprep.subr.bf16.mxu0 %v6072
    %6675 = vmatpush2.bf16.msra.mxu0 %v6071
    %6676 = vmatprep.subr.bf16.mxu0 %v6065
    %6677 = vmatpush2.bf16.msra.mxu0 %v6064
    %6678 = vmatprep.subr.bf16.mxu0 %v6058
    %6679 = vmatpush2.bf16.msra.mxu0 %v6057
    %6680 = vmatprep.subr.bf16.mxu0 %v6051
    %6681 = vmatpush2.bf16.msra.mxu0 %v6050
    %6682 = vmatprep.subr.bf16.mxu0 %v6044
    %6683 = vmatpush2.bf16.msra.mxu0 %v6043
    %6684 = vmatprep.subr.bf16.mxu0 %v6037
    %6685 = vmatpush2.bf16.msra.mxu0 %v6036
    %6686 = vmatprep.subr.bf16.mxu0 %v6030
    %6687 = vmatpush2.bf16.msra.mxu0 %v6029
    %6688 = vmatprep.mubr.bf16.mxu0 %v4192
    %6689 = vmatmul.mubr.bf16.gmra.mxu0 %v4191
    %v6690 = vpop.f32.mrf.mxu0
    %v6691 = vadd.f32 %v6650, %v6690
    %v6692 = vpop.f32.mrf.mxu0
    %v6693 = vadd.f32 %v6652, %v6692
    %v6694 = vpop.f32.mrf.mxu0
    %v6695 = vpop.f32.mrf.mxu0
    %6696 = vdwg.mxu0
    %6697 = vmatprep.subr.bf16.mxu0 %v5689
    %6698 = vmatpush1.bf16.msra.mxu0 %v5688
    %6699 = vmatprep.subr.bf16.mxu0 %v5682
    %6700 = vmatpush1.bf16.msra.mxu0 %v5681
    %6701 = vmatprep.subr.bf16.mxu0 %v5675
    %6702 = vmatpush1.bf16.msra.mxu0 %v5674
    %6703 = vmatprep.subr.bf16.mxu0 %v5668
    %6704 = vmatpush1.bf16.msra.mxu0 %v5667
    %6705 = vmatprep.subr.bf16.mxu0 %v5661
    %6706 = vmatpush1.bf16.msra.mxu0 %v5660
    %6707 = vmatprep.subr.bf16.mxu0 %v5654
    %6708 = vmatpush1.bf16.msra.mxu0 %v5653
    %6709 = vmatprep.subr.bf16.mxu0 %v5647
    %6710 = vmatpush1.bf16.msra.mxu0 %v5646
    %6711 = vmatprep.subr.bf16.mxu0 %v5640
    %6712 = vmatpush1.bf16.msra.mxu0 %v5639
    %6713 = vmatprep.subr.bf16.mxu0 %v5745
    %6714 = vmatpush2.bf16.msra.mxu0 %v5744
    %6715 = vmatprep.subr.bf16.mxu0 %v5738
    %6716 = vmatpush2.bf16.msra.mxu0 %v5737
    %6717 = vmatprep.subr.bf16.mxu0 %v5731
    %6718 = vmatpush2.bf16.msra.mxu0 %v5730
    %6719 = vmatprep.subr.bf16.mxu0 %v5724
    %6720 = vmatpush2.bf16.msra.mxu0 %v5723
    %6721 = vmatprep.subr.bf16.mxu0 %v5717
    %6722 = vmatpush2.bf16.msra.mxu0 %v5716
    %6723 = vmatprep.subr.bf16.mxu0 %v5710
    %6724 = vmatpush2.bf16.msra.mxu0 %v5709
    %6725 = vmatprep.subr.bf16.mxu0 %v5703
    %6726 = vmatpush2.bf16.msra.mxu0 %v5702
    %6727 = vmatprep.subr.bf16.mxu0 %v5696
    %6728 = vmatpush2.bf16.msra.mxu0 %v5695
    %6729 = vmatprep.mubr.bf16.mxu0 %v4186
    %6730 = vmatmul.mubr.bf16.gmra.mxu0 %v4185
    %v6731 = vpop.f32.mrf.mxu0
    %v6732 = vadd.f32 %v4205, %v6731
    %v6733 = vpop.f32.mrf.mxu0
    %v6734 = vadd.f32 %v4209, %v6733
    %v6735 = vpop.f32.mrf.mxu0
    %v6736 = vpop.f32.mrf.mxu0
    %6737 = vdwg.mxu0
    %6738 = vmatprep.subr.bf16.mxu0 %v5801
    %6739 = vmatpush1.bf16.msra.mxu0 %v5800
    %6740 = vmatprep.subr.bf16.mxu0 %v5794
    %6741 = vmatpush1.bf16.msra.mxu0 %v5793
    %6742 = vmatprep.subr.bf16.mxu0 %v5787
    %6743 = vmatpush1.bf16.msra.mxu0 %v5786
    %6744 = vmatprep.subr.bf16.mxu0 %v5780
    %6745 = vmatpush1.bf16.msra.mxu0 %v5779
    %6746 = vmatprep.subr.bf16.mxu0 %v5773
    %6747 = vmatpush1.bf16.msra.mxu0 %v5772
    %6748 = vmatprep.subr.bf16.mxu0 %v5766
    %6749 = vmatpush1.bf16.msra.mxu0 %v5765
    %6750 = vmatprep.subr.bf16.mxu0 %v5759
    %6751 = vmatpush1.bf16.msra.mxu0 %v5758
    %6752 = vmatprep.subr.bf16.mxu0 %v5752
    %6753 = vmatpush1.bf16.msra.mxu0 %v5751
    %6754 = vmatprep.subr.bf16.mxu0 %v5857
    %6755 = vmatpush2.bf16.msra.mxu0 %v5856
    %6756 = vmatprep.subr.bf16.mxu0 %v5850
    %6757 = vmatpush2.bf16.msra.mxu0 %v5849
    %6758 = vmatprep.subr.bf16.mxu0 %v5843
    %6759 = vmatpush2.bf16.msra.mxu0 %v5842
    %6760 = vmatprep.subr.bf16.mxu0 %v5836
    %6761 = vmatpush2.bf16.msra.mxu0 %v5835
    %6762 = vmatprep.subr.bf16.mxu0 %v5829
    %6763 = vmatpush2.bf16.msra.mxu0 %v5828
    %6764 = vmatprep.subr.bf16.mxu0 %v5822
    %6765 = vmatpush2.bf16.msra.mxu0 %v5821
    %6766 = vmatprep.subr.bf16.mxu0 %v5815
    %6767 = vmatpush2.bf16.msra.mxu0 %v5814
    %6768 = vmatprep.subr.bf16.mxu0 %v5808
    %6769 = vmatpush2.bf16.msra.mxu0 %v5807
    %6770 = vmatprep.mubr.bf16.mxu0 %v4188
    %6771 = vmatmul.mubr.bf16.gmra.mxu0 %v4187
    %v6772 = vpop.f32.mrf.mxu0
    %v6773 = vadd.f32 %v6732, %v6772
    %v6774 = vpop.f32.mrf.mxu0
    %v6775 = vadd.f32 %v6734, %v6774
    %v6776 = vpop.f32.mrf.mxu0
    %v6777 = vpop.f32.mrf.mxu0
    %6778 = vdwg.mxu0
    %6779 = vmatprep.subr.bf16.mxu0 %v5913
    %6780 = vmatpush1.bf16.msra.mxu0 %v5912
    %6781 = vmatprep.subr.bf16.mxu0 %v5906
    %6782 = vmatpush1.bf16.msra.mxu0 %v5905
    %6783 = vmatprep.subr.bf16.mxu0 %v5899
    %6784 = vmatpush1.bf16.msra.mxu0 %v5898
    %6785 = vmatprep.subr.bf16.mxu0 %v5892
    %6786 = vmatpush1.bf16.msra.mxu0 %v5891
    %6787 = vmatprep.subr.bf16.mxu0 %v5885
    %6788 = vmatpush1.bf16.msra.mxu0 %v5884
    %6789 = vmatprep.subr.bf16.mxu0 %v5878
    %6790 = vmatpush1.bf16.msra.mxu0 %v5877
    %6791 = vmatprep.subr.bf16.mxu0 %v5871
    %6792 = vmatpush1.bf16.msra.mxu0 %v5870
    %6793 = vmatprep.subr.bf16.mxu0 %v5864
    %6794 = vmatpush1.bf16.msra.mxu0 %v5863
    %6795 = vmatprep.subr.bf16.mxu0 %v5969
    %6796 = vmatpush2.bf16.msra.mxu0 %v5968
    %6797 = vmatprep.subr.bf16.mxu0 %v5962
    %6798 = vmatpush2.bf16.msra.mxu0 %v5961
    %6799 = vmatprep.subr.bf16.mxu0 %v5955
    %6800 = vmatpush2.bf16.msra.mxu0 %v5954
    %6801 = vmatprep.subr.bf16.mxu0 %v5948
    %6802 = vmatpush2.bf16.msra.mxu0 %v5947
    %6803 = vmatprep.subr.bf16.mxu0 %v5941
    %6804 = vmatpush2.bf16.msra.mxu0 %v5940
    %6805 = vmatprep.subr.bf16.mxu0 %v5934
    %6806 = vmatpush2.bf16.msra.mxu0 %v5933
    %6807 = vmatprep.subr.bf16.mxu0 %v5927
    %6808 = vmatpush2.bf16.msra.mxu0 %v5926
    %6809 = vmatprep.subr.bf16.mxu0 %v5920
    %6810 = vmatpush2.bf16.msra.mxu0 %v5919
    %6811 = vmatprep.mubr.bf16.mxu0 %v4190
    %6812 = vmatmul.mubr.bf16.gmra.mxu0 %v4189
    %v6813 = vpop.f32.mrf.mxu0
    %v6814 = vadd.f32 %v6773, %v6813
    %v6815 = vpop.f32.mrf.mxu0
    %v6816 = vadd.f32 %v6775, %v6815
    %v6817 = vpop.f32.mrf.mxu0
    %v6818 = vpop.f32.mrf.mxu0
    %6819 = vdwg.mxu0
    %6820 = vmatprep.subr.bf16.mxu0 %v6025
    %6821 = vmatpush1.bf16.msra.mxu0 %v6024
    %6822 = vmatprep.subr.bf16.mxu0 %v6018
    %6823 = vmatpush1.bf16.msra.mxu0 %v6017
    %6824 = vmatprep.subr.bf16.mxu0 %v6011
    %6825 = vmatpush1.bf16.msra.mxu0 %v6010
    %6826 = vmatprep.subr.bf16.mxu0 %v6004
    %6827 = vmatpush1.bf16.msra.mxu0 %v6003
    %6828 = vmatprep.subr.bf16.mxu0 %v5997
    %6829 = vmatpush1.bf16.msra.mxu0 %v5996
    %6830 = vmatprep.subr.bf16.mxu0 %v5990
    %6831 = vmatpush1.bf16.msra.mxu0 %v5989
    %6832 = vmatprep.subr.bf16.mxu0 %v5983
    %6833 = vmatpush1.bf16.msra.mxu0 %v5982
    %6834 = vmatprep.subr.bf16.mxu0 %v5976
    %6835 = vmatpush1.bf16.msra.mxu0 %v5975
    %6836 = vmatprep.subr.bf16.mxu0 %v6081
    %6837 = vmatpush2.bf16.msra.mxu0 %v6080
    %6838 = vmatprep.subr.bf16.mxu0 %v6074
    %6839 = vmatpush2.bf16.msra.mxu0 %v6073
    %6840 = vmatprep.subr.bf16.mxu0 %v6067
    %6841 = vmatpush2.bf16.msra.mxu0 %v6066
    %6842 = vmatprep.subr.bf16.mxu0 %v6060
    %6843 = vmatpush2.bf16.msra.mxu0 %v6059
    %6844 = vmatprep.subr.bf16.mxu0 %v6053
    %6845 = vmatpush2.bf16.msra.mxu0 %v6052
    %6846 = vmatprep.subr.bf16.mxu0 %v6046
    %6847 = vmatpush2.bf16.msra.mxu0 %v6045
    %6848 = vmatprep.subr.bf16.mxu0 %v6039
    %6849 = vmatpush2.bf16.msra.mxu0 %v6038
    %6850 = vmatprep.subr.bf16.mxu0 %v6032
    %6851 = vmatpush2.bf16.msra.mxu0 %v6031
    %6852 = vmatprep.mubr.bf16.mxu0 %v4192
    %6853 = vmatmul.mubr.bf16.gmra.mxu0 %v4191
    %v6854 = vpop.f32.mrf.mxu0
    %v6855 = vadd.f32 %v6814, %v6854
    %v6856 = vpop.f32.mrf.mxu0
    %v6857 = vadd.f32 %v6816, %v6856
    %v6858 = vpop.f32.mrf.mxu0
    %v6859 = vpop.f32.mrf.mxu0
    %6860 = vdwg.mxu0
    %6861 = vmatprep.subr.bf16.mxu0 %v5691
    %6862 = vmatpush1.bf16.msra.mxu0 %v5690
    %6863 = vmatprep.subr.bf16.mxu0 %v5684
    %6864 = vmatpush1.bf16.msra.mxu0 %v5683
    %6865 = vmatprep.subr.bf16.mxu0 %v5677
    %6866 = vmatpush1.bf16.msra.mxu0 %v5676
    %6867 = vmatprep.subr.bf16.mxu0 %v5670
    %6868 = vmatpush1.bf16.msra.mxu0 %v5669
    %6869 = vmatprep.subr.bf16.mxu0 %v5663
    %6870 = vmatpush1.bf16.msra.mxu0 %v5662
    %6871 = vmatprep.subr.bf16.mxu0 %v5656
    %6872 = vmatpush1.bf16.msra.mxu0 %v5655
    %6873 = vmatprep.subr.bf16.mxu0 %v5649
    %6874 = vmatpush1.bf16.msra.mxu0 %v5648
    %6875 = vmatprep.subr.bf16.mxu0 %v5642
    %6876 = vmatpush1.bf16.msra.mxu0 %v5641
    %6877 = vmatprep.subr.bf16.mxu0 %v5747
    %6878 = vmatpush2.bf16.msra.mxu0 %v5746
    %6879 = vmatprep.subr.bf16.mxu0 %v5740
    %6880 = vmatpush2.bf16.msra.mxu0 %v5739
    %6881 = vmatprep.subr.bf16.mxu0 %v5733
    %6882 = vmatpush2.bf16.msra.mxu0 %v5732
    %6883 = vmatprep.subr.bf16.mxu0 %v5726
    %6884 = vmatpush2.bf16.msra.mxu0 %v5725
    %6885 = vmatprep.subr.bf16.mxu0 %v5719
    %6886 = vmatpush2.bf16.msra.mxu0 %v5718
    %6887 = vmatprep.subr.bf16.mxu0 %v5712
    %6888 = vmatpush2.bf16.msra.mxu0 %v5711
    %6889 = vmatprep.subr.bf16.mxu0 %v5705
    %6890 = vmatpush2.bf16.msra.mxu0 %v5704
    %6891 = vmatprep.subr.bf16.mxu0 %v5698
    %6892 = vmatpush2.bf16.msra.mxu0 %v5697
    %6893 = vmatprep.mubr.bf16.mxu0 %v4186
    %6894 = vmatmul.mubr.bf16.gmra.mxu0 %v4185
    %v6895 = vpop.f32.mrf.mxu0
    %v6896 = vadd.f32 %v4213, %v6895
    %v6897 = vpop.f32.mrf.mxu0
    %v6898 = vadd.f32 %v4217, %v6897
    %v6899 = vpop.f32.mrf.mxu0
    %v6900 = vpop.f32.mrf.mxu0
    %6901 = vdwg.mxu0
    %6902 = vmatprep.subr.bf16.mxu0 %v5803
    %6903 = vmatpush1.bf16.msra.mxu0 %v5802
    %6904 = vmatprep.subr.bf16.mxu0 %v5796
    %6905 = vmatpush1.bf16.msra.mxu0 %v5795
    %6906 = vmatprep.subr.bf16.mxu0 %v5789
    %6907 = vmatpush1.bf16.msra.mxu0 %v5788
    %6908 = vmatprep.subr.bf16.mxu0 %v5782
    %6909 = vmatpush1.bf16.msra.mxu0 %v5781
    %6910 = vmatprep.subr.bf16.mxu0 %v5775
    %6911 = vmatpush1.bf16.msra.mxu0 %v5774
    %6912 = vmatprep.subr.bf16.mxu0 %v5768
    %6913 = vmatpush1.bf16.msra.mxu0 %v5767
    %6914 = vmatprep.subr.bf16.mxu0 %v5761
    %6915 = vmatpush1.bf16.msra.mxu0 %v5760
    %6916 = vmatprep.subr.bf16.mxu0 %v5754
    %6917 = vmatpush1.bf16.msra.mxu0 %v5753
    %6918 = vmatprep.subr.bf16.mxu0 %v5859
    %6919 = vmatpush2.bf16.msra.mxu0 %v5858
    %6920 = vmatprep.subr.bf16.mxu0 %v5852
    %6921 = vmatpush2.bf16.msra.mxu0 %v5851
    %6922 = vmatprep.subr.bf16.mxu0 %v5845
    %6923 = vmatpush2.bf16.msra.mxu0 %v5844
    %6924 = vmatprep.subr.bf16.mxu0 %v5838
    %6925 = vmatpush2.bf16.msra.mxu0 %v5837
    %6926 = vmatprep.subr.bf16.mxu0 %v5831
    %6927 = vmatpush2.bf16.msra.mxu0 %v5830
    %6928 = vmatprep.subr.bf16.mxu0 %v5824
    %6929 = vmatpush2.bf16.msra.mxu0 %v5823
    %6930 = vmatprep.subr.bf16.mxu0 %v5817
    %6931 = vmatpush2.bf16.msra.mxu0 %v5816
    %6932 = vmatprep.subr.bf16.mxu0 %v5810
    %6933 = vmatpush2.bf16.msra.mxu0 %v5809
    %6934 = vmatprep.mubr.bf16.mxu0 %v4188
    %6935 = vmatmul.mubr.bf16.gmra.mxu0 %v4187
    %v6936 = vpop.f32.mrf.mxu0
    %v6937 = vadd.f32 %v6896, %v6936
    %v6938 = vpop.f32.mrf.mxu0
    %v6939 = vadd.f32 %v6898, %v6938
    %v6940 = vpop.f32.mrf.mxu0
    %v6941 = vpop.f32.mrf.mxu0
    %6942 = vdwg.mxu0
    %6943 = vmatprep.subr.bf16.mxu0 %v5915
    %6944 = vmatpush1.bf16.msra.mxu0 %v5914
    %6945 = vmatprep.subr.bf16.mxu0 %v5908
    %6946 = vmatpush1.bf16.msra.mxu0 %v5907
    %6947 = vmatprep.subr.bf16.mxu0 %v5901
    %6948 = vmatpush1.bf16.msra.mxu0 %v5900
    %6949 = vmatprep.subr.bf16.mxu0 %v5894
    %6950 = vmatpush1.bf16.msra.mxu0 %v5893
    %6951 = vmatprep.subr.bf16.mxu0 %v5887
    %6952 = vmatpush1.bf16.msra.mxu0 %v5886
    %6953 = vmatprep.subr.bf16.mxu0 %v5880
    %6954 = vmatpush1.bf16.msra.mxu0 %v5879
    %6955 = vmatprep.subr.bf16.mxu0 %v5873
    %6956 = vmatpush1.bf16.msra.mxu0 %v5872
    %6957 = vmatprep.subr.bf16.mxu0 %v5866
    %6958 = vmatpush1.bf16.msra.mxu0 %v5865
    %6959 = vmatprep.subr.bf16.mxu0 %v5971
    %6960 = vmatpush2.bf16.msra.mxu0 %v5970
    %6961 = vmatprep.subr.bf16.mxu0 %v5964
    %6962 = vmatpush2.bf16.msra.mxu0 %v5963
    %6963 = vmatprep.subr.bf16.mxu0 %v5957
    %6964 = vmatpush2.bf16.msra.mxu0 %v5956
    %6965 = vmatprep.subr.bf16.mxu0 %v5950
    %6966 = vmatpush2.bf16.msra.mxu0 %v5949
    %6967 = vmatprep.subr.bf16.mxu0 %v5943
    %6968 = vmatpush2.bf16.msra.mxu0 %v5942
    %6969 = vmatprep.subr.bf16.mxu0 %v5936
    %6970 = vmatpush2.bf16.msra.mxu0 %v5935
    %6971 = vmatprep.subr.bf16.mxu0 %v5929
    %6972 = vmatpush2.bf16.msra.mxu0 %v5928
    %6973 = vmatprep.subr.bf16.mxu0 %v5922
    %6974 = vmatpush2.bf16.msra.mxu0 %v5921
    %6975 = vmatprep.mubr.bf16.mxu0 %v4190
    %6976 = vmatmul.mubr.bf16.gmra.mxu0 %v4189
    %v6977 = vpop.f32.mrf.mxu0
    %v6978 = vadd.f32 %v6937, %v6977
    %v6979 = vpop.f32.mrf.mxu0
    %v6980 = vadd.f32 %v6939, %v6979
    %v6981 = vpop.f32.mrf.mxu0
    %v6982 = vpop.f32.mrf.mxu0
    %6983 = vdwg.mxu0
    %6984 = vmatprep.subr.bf16.mxu0 %v6027
    %6985 = vmatpush1.bf16.msra.mxu0 %v6026
    %6986 = vmatprep.subr.bf16.mxu0 %v6020
    %6987 = vmatpush1.bf16.msra.mxu0 %v6019
    %6988 = vmatprep.subr.bf16.mxu0 %v6013
    %6989 = vmatpush1.bf16.msra.mxu0 %v6012
    %6990 = vmatprep.subr.bf16.mxu0 %v6006
    %6991 = vmatpush1.bf16.msra.mxu0 %v6005
    %6992 = vmatprep.subr.bf16.mxu0 %v5999
    %6993 = vmatpush1.bf16.msra.mxu0 %v5998
    %6994 = vmatprep.subr.bf16.mxu0 %v5992
    %6995 = vmatpush1.bf16.msra.mxu0 %v5991
    %6996 = vmatprep.subr.bf16.mxu0 %v5985
    %6997 = vmatpush1.bf16.msra.mxu0 %v5984
    %6998 = vmatprep.subr.bf16.mxu0 %v5978
    %6999 = vmatpush1.bf16.msra.mxu0 %v5977
    %7000 = vmatprep.subr.bf16.mxu0 %v6083
    %7001 = vmatpush2.bf16.msra.mxu0 %v6082
    %7002 = vmatprep.subr.bf16.mxu0 %v6076
    %7003 = vmatpush2.bf16.msra.mxu0 %v6075
    %7004 = vmatprep.subr.bf16.mxu0 %v6069
    %7005 = vmatpush2.bf16.msra.mxu0 %v6068
    %7006 = vmatprep.subr.bf16.mxu0 %v6062
    %7007 = vmatpush2.bf16.msra.mxu0 %v6061
    %7008 = vmatprep.subr.bf16.mxu0 %v6055
    %7009 = vmatpush2.bf16.msra.mxu0 %v6054
    %7010 = vmatprep.subr.bf16.mxu0 %v6048
    %7011 = vmatpush2.bf16.msra.mxu0 %v6047
    %7012 = vmatprep.subr.bf16.mxu0 %v6041
    %7013 = vmatpush2.bf16.msra.mxu0 %v6040
    %7014 = vmatprep.subr.bf16.mxu0 %v6034
    %7015 = vmatpush2.bf16.msra.mxu0 %v6033
    %7016 = vmatprep.mubr.bf16.mxu0 %v4192
    %7017 = vmatmul.mubr.bf16.gmra.mxu0 %v4191
    %v7018 = vpop.f32.mrf.mxu0
    %v7019 = vadd.f32 %v6978, %v7018
    %v7020 = vpop.f32.mrf.mxu0
    %v7021 = vadd.f32 %v6980, %v7020
    %v7022 = vpop.f32.mrf.mxu0
    %v7023 = vpop.f32.mrf.mxu0
    %7024 = vdwg.mxu0
    %7025 = vmatprep.subr.bf16.mxu0 0
    %7026 = vmatpush1.bf16.msra.mxu0 %v5692
    %7027 = vmatprep.subr.bf16.mxu0 0
    %7028 = vmatpush1.bf16.msra.mxu0 %v5685
    %7029 = vmatprep.subr.bf16.mxu0 0
    %7030 = vmatpush1.bf16.msra.mxu0 %v5678
    %7031 = vmatprep.subr.bf16.mxu0 0
    %7032 = vmatpush1.bf16.msra.mxu0 %v5671
    %7033 = vmatprep.subr.bf16.mxu0 0
    %7034 = vmatpush1.bf16.msra.mxu0 %v5664
    %7035 = vmatprep.subr.bf16.mxu0 0
    %7036 = vmatpush1.bf16.msra.mxu0 %v5657
    %7037 = vmatprep.subr.bf16.mxu0 0
    %7038 = vmatpush1.bf16.msra.mxu0 %v5650
    %7039 = vmatprep.subr.bf16.mxu0 0
    %7040 = vmatpush1.bf16.msra.mxu0 %v5643
    %7041 = vmatprep.subr.bf16.mxu0 0
    %7042 = vmatpush2.bf16.msra.mxu0 %v5748
    %7043 = vmatprep.subr.bf16.mxu0 0
    %7044 = vmatpush2.bf16.msra.mxu0 %v5741
    %7045 = vmatprep.subr.bf16.mxu0 0
    %7046 = vmatpush2.bf16.msra.mxu0 %v5734
    %7047 = vmatprep.subr.bf16.mxu0 0
    %7048 = vmatpush2.bf16.msra.mxu0 %v5727
    %7049 = vmatprep.subr.bf16.mxu0 0
    %7050 = vmatpush2.bf16.msra.mxu0 %v5720
    %7051 = vmatprep.subr.bf16.mxu0 0
    %7052 = vmatpush2.bf16.msra.mxu0 %v5713
    %7053 = vmatprep.subr.bf16.mxu0 0
    %7054 = vmatpush2.bf16.msra.mxu0 %v5706
    %7055 = vmatprep.subr.bf16.mxu0 0
    %7056 = vmatpush2.bf16.msra.mxu0 %v5699
    %7057 = vmatprep.mubr.bf16.mxu0 %v4186
    %7058 = vmatmul.mubr.bf16.gmra.mxu0 %v4185
    %v7059 = vpop.f32.mrf.mxu0
    %v7060 = vadd.f32 %v4221, %v7059
    %v7061 = vpop.f32.mrf.mxu0
    %v7062 = vpop.f32.mrf.mxu0
    %v7063 = vpop.f32.mrf.mxu0
    %7064 = vdwg.mxu0
    %7065 = vmatprep.subr.bf16.mxu0 0
    %7066 = vmatpush1.bf16.msra.mxu0 %v5804
    %7067 = vmatprep.subr.bf16.mxu0 0
    %7068 = vmatpush1.bf16.msra.mxu0 %v5797
    %7069 = vmatprep.subr.bf16.mxu0 0
    %7070 = vmatpush1.bf16.msra.mxu0 %v5790
    %7071 = vmatprep.subr.bf16.mxu0 0
    %7072 = vmatpush1.bf16.msra.mxu0 %v5783
    %7073 = vmatprep.subr.bf16.mxu0 0
    %7074 = vmatpush1.bf16.msra.mxu0 %v5776
    %7075 = vmatprep.subr.bf16.mxu0 0
    %7076 = vmatpush1.bf16.msra.mxu0 %v5769
    %7077 = vmatprep.subr.bf16.mxu0 0
    %7078 = vmatpush1.bf16.msra.mxu0 %v5762
    %7079 = vmatprep.subr.bf16.mxu0 0
    %7080 = vmatpush1.bf16.msra.mxu0 %v5755
    %7081 = vmatprep.subr.bf16.mxu0 0
    %7082 = vmatpush2.bf16.msra.mxu0 %v5860
    %7083 = vmatprep.subr.bf16.mxu0 0
    %7084 = vmatpush2.bf16.msra.mxu0 %v5853
    %7085 = vmatprep.subr.bf16.mxu0 0
    %7086 = vmatpush2.bf16.msra.mxu0 %v5846
    %7087 = vmatprep.subr.bf16.mxu0 0
    %7088 = vmatpush2.bf16.msra.mxu0 %v5839
    %7089 = vmatprep.subr.bf16.mxu0 0
    %7090 = vmatpush2.bf16.msra.mxu0 %v5832
    %7091 = vmatprep.subr.bf16.mxu0 0
    %7092 = vmatpush2.bf16.msra.mxu0 %v5825
    %7093 = vmatprep.subr.bf16.mxu0 0
    %7094 = vmatpush2.bf16.msra.mxu0 %v5818
    %7095 = vmatprep.subr.bf16.mxu0 0
    %7096 = vmatpush2.bf16.msra.mxu0 %v5811
    %7097 = vmatprep.mubr.bf16.mxu0 %v4188
    %7098 = vmatmul.mubr.bf16.gmra.mxu0 %v4187
    %v7099 = vpop.f32.mrf.mxu0
    %v7100 = vadd.f32 %v7060, %v7099
    %v7101 = vpop.f32.mrf.mxu0
    %v7102 = vpop.f32.mrf.mxu0
    %v7103 = vpop.f32.mrf.mxu0
    %7104 = vdwg.mxu0
    %7105 = vmatprep.subr.bf16.mxu0 0
    %7106 = vmatpush1.bf16.msra.mxu0 %v5916
    %7107 = vmatprep.subr.bf16.mxu0 0
    %7108 = vmatpush1.bf16.msra.mxu0 %v5909
    %7109 = vmatprep.subr.bf16.mxu0 0
    %7110 = vmatpush1.bf16.msra.mxu0 %v5902
    %7111 = vmatprep.subr.bf16.mxu0 0
    %7112 = vmatpush1.bf16.msra.mxu0 %v5895
    %7113 = vmatprep.subr.bf16.mxu0 0
    %7114 = vmatpush1.bf16.msra.mxu0 %v5888
    %7115 = vmatprep.subr.bf16.mxu0 0
    %7116 = vmatpush1.bf16.msra.mxu0 %v5881
    %7117 = vmatprep.subr.bf16.mxu0 0
    %7118 = vmatpush1.bf16.msra.mxu0 %v5874
    %7119 = vmatprep.subr.bf16.mxu0 0
    %7120 = vmatpush1.bf16.msra.mxu0 %v5867
    %7121 = vmatprep.subr.bf16.mxu0 0
    %7122 = vmatpush2.bf16.msra.mxu0 %v5972
    %7123 = vmatprep.subr.bf16.mxu0 0
    %7124 = vmatpush2.bf16.msra.mxu0 %v5965
    %7125 = vmatprep.subr.bf16.mxu0 0
    %7126 = vmatpush2.bf16.msra.mxu0 %v5958
    %7127 = vmatprep.subr.bf16.mxu0 0
    %7128 = vmatpush2.bf16.msra.mxu0 %v5951
    %7129 = vmatprep.subr.bf16.mxu0 0
    %7130 = vmatpush2.bf16.msra.mxu0 %v5944
    %7131 = vmatprep.subr.bf16.mxu0 0
    %7132 = vmatpush2.bf16.msra.mxu0 %v5937
    %7133 = vmatprep.subr.bf16.mxu0 0
    %7134 = vmatpush2.bf16.msra.mxu0 %v5930
    %7135 = vmatprep.subr.bf16.mxu0 0
    %7136 = vmatpush2.bf16.msra.mxu0 %v5923
    %7137 = vmatprep.mubr.bf16.mxu0 %v4190
    %7138 = vmatmul.mubr.bf16.gmra.mxu0 %v4189
    %v7139 = vpop.f32.mrf.mxu0
    %v7140 = vadd.f32 %v7100, %v7139
    %v7141 = vpop.f32.mrf.mxu0
    %v7142 = vpop.f32.mrf.mxu0
    %v7143 = vpop.f32.mrf.mxu0
    %7144 = vdwg.mxu0
    %7145 = vmatprep.subr.bf16.mxu0 0
    %7146 = vmatpush1.bf16.msra.mxu0 %v6028
    %7147 = vmatprep.subr.bf16.mxu0 0
    %7148 = vmatpush1.bf16.msra.mxu0 %v6021
    %7149 = vmatprep.subr.bf16.mxu0 0
    %7150 = vmatpush1.bf16.msra.mxu0 %v6014
    %7151 = vmatprep.subr.bf16.mxu0 0
    %7152 = vmatpush1.bf16.msra.mxu0 %v6007
    %7153 = vmatprep.subr.bf16.mxu0 0
    %7154 = vmatpush1.bf16.msra.mxu0 %v6000
    %7155 = vmatprep.subr.bf16.mxu0 0
    %7156 = vmatpush1.bf16.msra.mxu0 %v5993
    %7157 = vmatprep.subr.bf16.mxu0 0
    %7158 = vmatpush1.bf16.msra.mxu0 %v5986
    %7159 = vmatprep.subr.bf16.mxu0 0
    %7160 = vmatpush1.bf16.msra.mxu0 %v5979
    %7161 = vmatprep.subr.bf16.mxu0 0
    %7162 = vmatpush2.bf16.msra.mxu0 %v6084
    %7163 = vmatprep.subr.bf16.mxu0 0
    %7164 = vmatpush2.bf16.msra.mxu0 %v6077
    %7165 = vmatprep.subr.bf16.mxu0 0
    %7166 = vmatpush2.bf16.msra.mxu0 %v6070
    %7167 = vmatprep.subr.bf16.mxu0 0
    %7168 = vmatpush2.bf16.msra.mxu0 %v6063
    %7169 = vmatprep.subr.bf16.mxu0 0
    %7170 = vmatpush2.bf16.msra.mxu0 %v6056
    %7171 = vmatprep.subr.bf16.mxu0 0
    %7172 = vmatpush2.bf16.msra.mxu0 %v6049
    %7173 = vmatprep.subr.bf16.mxu0 0
    %7174 = vmatpush2.bf16.msra.mxu0 %v6042
    %7175 = vmatprep.subr.bf16.mxu0 0
    %7176 = vmatpush2.bf16.msra.mxu0 %v6035
    %7177 = vmatprep.mubr.bf16.mxu0 %v4192
    %7178 = vmatmul.mubr.bf16.gmra.mxu0 %v4191
    %v7179 = vpop.f32.mrf.mxu0
    %v7180 = vadd.f32 %v7140, %v7179
    %v7181 = vpop.f32.mrf.mxu0
    %v7182 = vpop.f32.mrf.mxu0
    %v7183 = vpop.f32.mrf.mxu0
    %7184 = vdwg.mxu0
    %v7185 = vtanh.pop %v6691
    %v7186 = vtanh.pop %v6693
    %v7187 = vtanh.pop %v6855
    %v7188 = vtanh.pop %v6857
    %v7189 = vtanh.pop %v7019
    %v7190 = vtanh.pop %v7021
    %v7191 = vtanh.pop %v7180
    %7192 = vst [vmem:[#allocation16] sm:$0xff] %v7185
    %7193 = vst [vmem:[#allocation16 + $0x8] sm:$0xff] %v7186
    %7194 = vst [vmem:[#allocation16 + $0x10] sm:$0xff] %v7187
    %7195 = vst [vmem:[#allocation16 + $0x18] sm:$0xff] %v7188
    %7196 = vst [vmem:[#allocation16 + $0x20] sm:$0xff] %v7189
    %7197 = vst [vmem:[#allocation16 + $0x28] sm:$0xff] %v7190
    %7198 = vst [vmem:[#allocation16 + $0x30] sm:$0xff] %v7191
    // Predicated region
    $region66: #{tpu_custom_call.1} parent=1 // pred_check
      _
    $region67: #{tpu_custom_call.1} parent=1 // pred_check_branch
      %7200 = sbr.rel (0) target = $region69
    $region68: #{tpu_custom_call.1} parent=1 // pred_region
      %s7202 = ssub.s32 896, 896
      %7203 = vsyncadd [#allocation6], %s7202
      %s7205 = sshll.u32 [#allocation16], 4
      %s7206 = int_to_ptr.vmem [resolvable:$true] %s7205
      %7208 = dma.vmem_to_hbm [thread:$0]  %s7206, 896, %s9, [#allocation6]
    $region69: #{tpu_custom_call.1} parent=1 // pred_fallthru
      _
    // Predicated region
    $region70: #{tpu_custom_call.1} parent=1 // pred_check
      _
    $region71: #{tpu_custom_call.1} parent=1 // pred_check_branch
      %7210 = sbr.rel (0) target = $region73
    $region72: #{tpu_custom_call.1} parent=1 // pred_region
      %7211 = dma.done [#allocation6], 896
    $region73: #{tpu_custom_call.1} parent=1 // pred_fallthru
      _
    %7212 = vsyncpa [#allocation5], 1
    %7213 = vsyncpa [#allocation8], 1
    %7214 = vsyncpa [#allocation11], 1
    %7215 = vsyncpa [#allocation14], 1
    %7216 = vsyncpa [#allocation6], 1
  %7217 = vsyncmov [#allocation3]
  %s7218 = vpop.sfrf %7217
  %p7219 = scmp.eq.s32.totalorder %s7218, 0
  %p7220 = pneg %p7219
  %7222 = shalt.err (%p7220)

</llo_original>
